<compile_context>
chip_gen: v7x
topology: tpu7x:2x2x1
jax: 0.10.0
libtpu: 0.0.40
codegen_flags: <defaults>
</compile_context>

<pallas_src>
import functools

import jax
import jax.numpy as jnp
from jax import lax
from jax.experimental import pallas as pl
from jax.experimental.pallas import tpu as pltpu


# ----------------------------------------------------------------------------
# Fused kernel
# ----------------------------------------------------------------------------
def _im2col3x3(x, out_h, out_w):
    """x: (out_h+2, out_w+2, C) -> (out_h, out_w, 9*C), taps in (dy, dx) order."""
    taps = [x[dy:dy + out_h, dx:dx + out_w, :]
            for dy in range(3) for dx in range(3)]
    return jnp.concatenate(taps, axis=-1)


def _decoder_kernel(x_ref, w1_ref, b1_ref, w2_ref, b2_ref, w3_ref, b3_ref,
                    o_ref, *, tile_h, out_w):
    th, w = tile_h, out_w
    c_in = x_ref.shape[-1]       # 3
    c1n = w1_ref.shape[-1]       # 64
    # x_ref: (1, th+4, w+4, c_in) input row-tile with a 2-pixel halo.
    x = x_ref[0]

    # ---- layer 1: 3x3 conv as ONE im2col matmul (K=9*c_in) + bias + ReLU ----
    # Computed with a 1-pixel halo so layer 2 needs no HBM round-trip.
    p1 = _im2col3x3(x, th + 2, w + 2)                    # (th+2, w+2, 27)
    h1 = jnp.dot(p1.reshape((th + 2) * (w + 2), 9 * c_in), w1_ref[...],
                 preferred_element_type=jnp.float32)
    h1 = jnp.maximum(h1 + b1_ref[0], 0.0)
    h1 = h1.reshape(th + 2, w + 2, c1n)

    # Zero the halo positions that lie OUTSIDE the image so they match the
    # zero padding PyTorch applies to the activation before conv2.  Interior
    # halo rows (neighbouring row-tiles) are kept: they were computed from the
    # real input halo and are exactly what conv2 needs.
    rows = lax.broadcasted_iota(jnp.int32, (th + 2, w + 2, 1), 0)
    cols = lax.broadcasted_iota(jnp.int32, (th + 2, w + 2, 1), 1)
    t = pl.program_id(1)
    keep = jnp.logical_and(cols >= 1, cols <= w)
    keep = jnp.logical_and(keep, jnp.logical_or(rows >= 1, t > 0))
    keep = jnp.logical_and(
        keep, jnp.logical_or(rows <= th, t < pl.num_programs(1) - 1))
    h1 = jnp.where(keep, h1, 0.0)

    # ---- layer 2: 3x3 conv as ONE im2col matmul (K=9*64=576) + bias + ReLU --
    p2 = _im2col3x3(h1, th, w)                           # (th, w, 576)
    h2 = jnp.dot(p2.reshape(th * w, 9 * c1n), w2_ref[...],
                 preferred_element_type=jnp.float32)
    h2 = jnp.maximum(h2 + b2_ref[0], 0.0)                # (th*w, 32)

    # ---- layer 3: 1x1 conv + sigmoid -----------------------------------------
    logit = jnp.dot(h2, w3_ref[...],
                    preferred_element_type=jnp.float32) + b3_ref[0]
    o_ref[0] = jax.nn.sigmoid(logit).reshape(th, w, 1).astype(o_ref.dtype)


# ----------------------------------------------------------------------------
# Wrapper
# ----------------------------------------------------------------------------
def _pick_tile_rows(h, w):
    """Largest row tile (multiple of 8 dividing H) whose fused working set
    stays under ~12 MiB of VMEM; prefer >=2 tiles for pipelining / megacore."""
    budget = 12 * 1024 * 1024
    per_row = 4 * w * 1400          # rough f32 working set per output row
    max_rows = max(8, budget // max(per_row, 1))
    cands = [t for t in range(8, h + 1, 8) if h % t == 0]
    if not cands:
        return h                    # H not a multiple of 8: single row tile
    fitting = [t for t in cands if t <= max_rows]
    if not fitting:
        return cands[0]             # smallest legal tile (8 rows)
    multi = [t for t in fitting if h // t >= 2]
    return max(multi) if multi else max(fitting)


@jax.jit
def decoder_forward(x_nchw, params):
    """x_nchw: (N, 3, H, W) float32 -> (N, 1, H, W) float32 (sigmoid output)."""
    n, c_in, h, w = x_nchw.shape
    x = jnp.transpose(x_nchw, (0, 2, 3, 1))              # NCHW -> NHWC

    th = _pick_tile_rows(h, w)
    nt = h // th

    # Pad the (3-channel, cheap) input once and build overlapping row tiles
    # with a 2-row/2-col halo.  The 64/32-channel intermediates never leave
    # the kernel.
    xp = jnp.pad(x, ((0, 0), (2, 2), (2, 2), (0, 0)))
    tiles = jnp.stack([xp[:, t * th:t * th + th + 4] for t in range(nt)], axis=1)
    tiles = tiles.reshape(n * nt, th + 4, w + 4, c_in)

    c1n = params["w1"].shape[-1]                         # 64
    c2n = params["w2"].shape[-1]                         # 32
    c3n = params["w3"].shape[-1]                         # 1
    w1m = params["w1"].reshape(9 * c_in, c1n)            # (27, 64)
    w2m = params["w2"].reshape(9 * c1n, c2n)             # (576, 32)
    w3m = params["w3"].reshape(c2n, c3n)                 # (32, 1)
    b1 = params["b1"].reshape(1, c1n)
    b2 = params["b2"].reshape(1, c2n)
    b3 = params["b3"].reshape(1, c3n)

    kernel = functools.partial(_decoder_kernel, tile_h=th, out_w=w)
    out = pl.pallas_call(
        kernel,
        out_shape=jax.ShapeDtypeStruct((n, h, w, 1), x.dtype),
        grid=(n, nt),
        in_specs=[
            pl.BlockSpec((1, th + 4, w + 4, c_in),
                         lambda i, t: (i * nt + t, 0, 0, 0)),
            pl.BlockSpec((9 * c_in, c1n), lambda i, t: (0, 0)),
            pl.BlockSpec((1, c1n), lambda i, t: (0, 0)),
            pl.BlockSpec((9 * c1n, c2n), lambda i, t: (0, 0)),
            pl.BlockSpec((1, c2n), lambda i, t: (0, 0)),
            pl.BlockSpec((c2n, c3n), lambda i, t: (0, 0)),
            pl.BlockSpec((1, c3n), lambda i, t: (0, 0)),
        ],
        out_specs=pl.BlockSpec((1, th, w, 1), lambda i, t: (i, t, 0, 0)),
        compiler_params=pltpu.CompilerParams(
            dimension_semantics=("parallel", "parallel"),
            vmem_limit_bytes=32 * 1024 * 1024,
        ),
    )(tiles, w1m, b1, w2m, b2, w3m, b3)

    return jnp.transpose(out, (0, 3, 1, 2))              # (N, 1, H, W)


# ----------------------------------------------------------------------------
# Parameters + pure-JAX reference
# ----------------------------------------------------------------------------
def init_decoder_params(key):
    """Deterministic synthetic parameters matching the nn.Module shapes (HWIO)."""
    k = jax.random.split(key, 6)
    return {
        "w1": jax.random.normal(k[0], (3, 3, 3, 64), jnp.float32) * 0.1,
        "b1": jax.random.normal(k[1], (64,), jnp.float32) * 0.05,
        "w2": jax.random.normal(k[2], (3, 3, 64, 32), jnp.float32) * 0.05,
        "b2": jax.random.normal(k[3], (32,), jnp.float32) * 0.05,
        "w3": jax.random.normal(k[4], (1, 1, 32, 1), jnp.float32) * 0.1,
        "b3": jax.random.normal(k[5], (1,), jnp.float32) * 0.05,
    }


def decoder_forward_ref(x_nchw, params):
    x = jnp.transpose(x_nchw, (0, 2, 3, 1))
    dn = ("NHWC", "HWIO", "NHWC")

    def conv(x, w, b, pad):
        y = lax.conv_general_dilated(
            x, w, window_strides=(1, 1), padding=pad, dimension_numbers=dn)
        return y + b

    h1 = jnp.maximum(conv(x, params["w1"], params["b1"], "SAME"), 0.0)
    h2 = jnp.maximum(conv(h1, params["w2"], params["b2"], "SAME"), 0.0)
    out = jax.nn.sigmoid(conv(h2, params["w3"], params["b3"], "VALID"))
    return jnp.transpose(out, (0, 3, 1, 2))


if __name__ == "__main__":
    key = jax.random.PRNGKey(0)
    k_x, k_p = jax.random.split(key)

    # Small deterministic input consistent with the module: NCHW, 3 channels.
    x = jax.random.normal(k_x, (2, 3, 16, 16), jnp.float32)
    params = init_decoder_params(k_p)

    out = jax.block_until_ready(decoder_forward(x, params))
    assert out.shape == (2, 1, 16, 16), out.shape
    assert out.dtype == jnp.float32

    ref = jax.block_until_ready(decoder_forward_ref(x, params))
    err = float(jnp.max(jnp.abs(out - ref)))
    assert err < 1e-4, f"mismatch vs reference: max abs err = {err}"

    print("KERNEL_OK")
</pallas_src>

<mosaic_0001>
module attributes {stable_mosaic.version = 11 : i64} {
  func.func @_decoder_kernel(%arg0: i32, %arg1: i32, %arg2: memref<1x12x20x3xf32, #tpu.memory_space<vmem>>, %arg3: memref<27x64xf32, #tpu.memory_space<vmem>>, %arg4: memref<1x64xf32, #tpu.memory_space<vmem>>, %arg5: memref<576x32xf32, #tpu.memory_space<vmem>>, %arg6: memref<1x32xf32, #tpu.memory_space<vmem>>, %arg7: memref<32x1xf32, #tpu.memory_space<vmem>>, %arg8: memref<1x1xf32, #tpu.memory_space<vmem>>, %arg9: memref<1x8x16x1xf32, #tpu.memory_space<vmem>>) attributes {dimension_semantics = [#tpu.dimension_semantics<parallel>, #tpu.dimension_semantics<parallel>], iteration_bounds = array<i64: 2, 2>, scalar_prefetch = 0 : i64, scratch_operands = 0 : i64, tpu.core_type = #tpu.core_type<tc>, window_params = [{transform_indices = @transform_0, window_bounds = array<i64: 1, 12, 20, 3>}, {pipeline_mode = #tpu.pipeline_mode<synchronous>, transform_indices = @transform_1, window_bounds = array<i64: 27, 64>}, {pipeline_mode = #tpu.pipeline_mode<synchronous>, transform_indices = @transform_2, window_bounds = array<i64: 1, 64>}, {pipeline_mode = #tpu.pipeline_mode<synchronous>, transform_indices = @transform_3, window_bounds = array<i64: 576, 32>}, {pipeline_mode = #tpu.pipeline_mode<synchronous>, transform_indices = @transform_4, window_bounds = array<i64: 1, 32>}, {pipeline_mode = #tpu.pipeline_mode<synchronous>, transform_indices = @transform_5, window_bounds = array<i64: 32, 1>}, {pipeline_mode = #tpu.pipeline_mode<synchronous>, transform_indices = @transform_6, window_bounds = array<i64: 1, 1>}, {transform_indices = @transform_7, window_bounds = array<i64: 1, 8, 16, 1>}]} {
    %c0 = arith.constant 0 : index
    %c0_0 = arith.constant 0 : index
    %c0_1 = arith.constant 0 : index
    %c0_2 = arith.constant 0 : index
    %0 = vector.load %arg2[%c0, %c0_0, %c0_1, %c0_2] : memref<1x12x20x3xf32, #tpu.memory_space<vmem>>, vector<1x12x20x3xf32>
    %1 = vector.shape_cast %0 : vector<1x12x20x3xf32> to vector<12x20x3xf32>
    %2 = vector.extract_strided_slice %1 {offsets = [0, 0, 0], sizes = [10, 18, 3], strides = [1, 1, 1]} : vector<12x20x3xf32> to vector<10x18x3xf32>
    %3 = vector.extract_strided_slice %1 {offsets = [0, 1, 0], sizes = [10, 18, 3], strides = [1, 1, 1]} : vector<12x20x3xf32> to vector<10x18x3xf32>
    %4 = vector.extract_strided_slice %1 {offsets = [0, 2, 0], sizes = [10, 18, 3], strides = [1, 1, 1]} : vector<12x20x3xf32> to vector<10x18x3xf32>
    %5 = vector.extract_strided_slice %1 {offsets = [1, 0, 0], sizes = [10, 18, 3], strides = [1, 1, 1]} : vector<12x20x3xf32> to vector<10x18x3xf32>
    %6 = vector.extract_strided_slice %1 {offsets = [1, 1, 0], sizes = [10, 18, 3], strides = [1, 1, 1]} : vector<12x20x3xf32> to vector<10x18x3xf32>
    %7 = vector.extract_strided_slice %1 {offsets = [1, 2, 0], sizes = [10, 18, 3], strides = [1, 1, 1]} : vector<12x20x3xf32> to vector<10x18x3xf32>
    %8 = vector.extract_strided_slice %1 {offsets = [2, 0, 0], sizes = [10, 18, 3], strides = [1, 1, 1]} : vector<12x20x3xf32> to vector<10x18x3xf32>
    %9 = vector.extract_strided_slice %1 {offsets = [2, 1, 0], sizes = [10, 18, 3], strides = [1, 1, 1]} : vector<12x20x3xf32> to vector<10x18x3xf32>
    %10 = vector.extract_strided_slice %1 {offsets = [2, 2, 0], sizes = [10, 18, 3], strides = [1, 1, 1]} : vector<12x20x3xf32> to vector<10x18x3xf32>
    %11 = tpu.concatenate %2, %3, %4, %5, %6, %7, %8, %9, %10 in 2 : vector<10x18x3xf32>, vector<10x18x3xf32>, vector<10x18x3xf32>, vector<10x18x3xf32>, vector<10x18x3xf32>, vector<10x18x3xf32>, vector<10x18x3xf32>, vector<10x18x3xf32>, vector<10x18x3xf32> -> vector<10x18x27xf32>
    %12 = vector.shape_cast %11 : vector<10x18x27xf32> to vector<180x27xf32>
    %c0_3 = arith.constant 0 : index
    %c0_4 = arith.constant 0 : index
    %13 = vector.load %arg3[%c0_3, %c0_4] : memref<27x64xf32, #tpu.memory_space<vmem>>, vector<27x64xf32>
    %cst = arith.constant dense<0.000000e+00> : vector<180x64xf32>
    %14 = tpu.matmul %12, %13, %cst {dimension_numbers = #tpu.dot_dimension_numbers<[1], [0], [0], [1], [0, 0, 1, 1], [], []>} : vector<180x27xf32>, vector<27x64xf32>, vector<180x64xf32> -> vector<180x64xf32>
    %c0_5 = arith.constant 0 : index
    %c0_6 = arith.constant 0 : index
    %15 = vector.load %arg4[%c0_5, %c0_6] : memref<1x64xf32, #tpu.memory_space<vmem>>, vector<1x64xf32>
    %16 = vector.shape_cast %15 : vector<1x64xf32> to vector<64xf32>
    %17 = vector.shape_cast %16 : vector<64xf32> to vector<1x64xf32>
    %18 = vector.broadcast %17 : vector<1x64xf32> to vector<180x64xf32>
    %19 = arith.addf %14, %18 : vector<180x64xf32>
    %cst_7 = arith.constant 0.000000e+00 : f32
    %20 = vector.broadcast %cst_7 : f32 to vector<180x64xf32>
    %21 = arith.maximumf %19, %20 : vector<180x64xf32>
    %22 = vector.shape_cast %21 : vector<180x64xf32> to vector<10x18x64xf32>
    %23 = tpu.iota {dimensions = array<i32: 0>} : vector<10x18x1xi32>
    %24 = tpu.iota {dimensions = array<i32: 1>} : vector<10x18x1xi32>
    %c1_i32 = arith.constant 1 : i32
    %25 = vector.broadcast %c1_i32 : i32 to vector<10x18x1xi32>
    %26 = arith.cmpi sge, %24, %25 : vector<10x18x1xi32>
    %c16_i32 = arith.constant 16 : i32
    %27 = vector.broadcast %c16_i32 : i32 to vector<10x18x1xi32>
    %28 = arith.cmpi sle, %24, %27 : vector<10x18x1xi32>
    %29 = arith.andi %26, %28 : vector<10x18x1xi1>
    %c1_i32_8 = arith.constant 1 : i32
    %30 = vector.broadcast %c1_i32_8 : i32 to vector<10x18x1xi32>
    %31 = arith.cmpi sge, %23, %30 : vector<10x18x1xi32>
    %c0_i32 = arith.constant 0 : i32
    %32 = arith.cmpi sgt, %arg1, %c0_i32 : i32
    %33 = vector.broadcast %32 : i1 to vector<10x18x1xi1>
    %34 = arith.ori %31, %33 : vector<10x18x1xi1>
    %35 = arith.andi %29, %34 : vector<10x18x1xi1>
    %c8_i32 = arith.constant 8 : i32
    %36 = vector.broadcast %c8_i32 : i32 to vector<10x18x1xi32>
    %37 = arith.cmpi sle, %23, %36 : vector<10x18x1xi32>
    %c1_i32_9 = arith.constant 1 : i32
    %38 = arith.cmpi slt, %arg1, %c1_i32_9 : i32
    %39 = vector.broadcast %38 : i1 to vector<10x18x1xi1>
    %40 = arith.ori %37, %39 : vector<10x18x1xi1>
    %41 = arith.andi %35, %40 : vector<10x18x1xi1>
    %cst_10 = arith.constant 0.000000e+00 : f32
    %42 = vector.shape_cast %41 : vector<10x18x1xi1> to vector<10x18x1xi1>
    %43 = vector.broadcast %42 : vector<10x18x1xi1> to vector<10x18x64xi1>
    %44 = vector.broadcast %cst_10 : f32 to vector<10x18x64xf32>
    %45 = arith.select %43, %22, %44 : vector<10x18x64xi1>, vector<10x18x64xf32>
    %46 = vector.extract_strided_slice %45 {offsets = [0, 0, 0], sizes = [8, 16, 64], strides = [1, 1, 1]} : vector<10x18x64xf32> to vector<8x16x64xf32>
    %47 = vector.extract_strided_slice %45 {offsets = [0, 1, 0], sizes = [8, 16, 64], strides = [1, 1, 1]} : vector<10x18x64xf32> to vector<8x16x64xf32>
    %48 = vector.extract_strided_slice %45 {offsets = [0, 2, 0], sizes = [8, 16, 64], strides = [1, 1, 1]} : vector<10x18x64xf32> to vector<8x16x64xf32>
    %49 = vector.extract_strided_slice %45 {offsets = [1, 0, 0], sizes = [8, 16, 64], strides = [1, 1, 1]} : vector<10x18x64xf32> to vector<8x16x64xf32>
    %50 = vector.extract_strided_slice %45 {offsets = [1, 1, 0], sizes = [8, 16, 64], strides = [1, 1, 1]} : vector<10x18x64xf32> to vector<8x16x64xf32>
    %51 = vector.extract_strided_slice %45 {offsets = [1, 2, 0], sizes = [8, 16, 64], strides = [1, 1, 1]} : vector<10x18x64xf32> to vector<8x16x64xf32>
    %52 = vector.extract_strided_slice %45 {offsets = [2, 0, 0], sizes = [8, 16, 64], strides = [1, 1, 1]} : vector<10x18x64xf32> to vector<8x16x64xf32>
    %53 = vector.extract_strided_slice %45 {offsets = [2, 1, 0], sizes = [8, 16, 64], strides = [1, 1, 1]} : vector<10x18x64xf32> to vector<8x16x64xf32>
    %54 = vector.extract_strided_slice %45 {offsets = [2, 2, 0], sizes = [8, 16, 64], strides = [1, 1, 1]} : vector<10x18x64xf32> to vector<8x16x64xf32>
    %55 = tpu.concatenate %46, %47, %48, %49, %50, %51, %52, %53, %54 in 2 : vector<8x16x64xf32>, vector<8x16x64xf32>, vector<8x16x64xf32>, vector<8x16x64xf32>, vector<8x16x64xf32>, vector<8x16x64xf32>, vector<8x16x64xf32>, vector<8x16x64xf32>, vector<8x16x64xf32> -> vector<8x16x576xf32>
    %56 = vector.shape_cast %55 : vector<8x16x576xf32> to vector<128x576xf32>
    %c0_11 = arith.constant 0 : index
    %c0_12 = arith.constant 0 : index
    %57 = vector.load %arg5[%c0_11, %c0_12] : memref<576x32xf32, #tpu.memory_space<vmem>>, vector<576x32xf32>
    %cst_13 = arith.constant dense<0.000000e+00> : vector<128x32xf32>
    %58 = tpu.matmul %56, %57, %cst_13 {dimension_numbers = #tpu.dot_dimension_numbers<[1], [0], [0], [1], [0, 0, 1, 1], [], []>} : vector<128x576xf32>, vector<576x32xf32>, vector<128x32xf32> -> vector<128x32xf32>
    %c0_14 = arith.constant 0 : index
    %c0_15 = arith.constant 0 : index
    %59 = vector.load %arg6[%c0_14, %c0_15] : memref<1x32xf32, #tpu.memory_space<vmem>>, vector<1x32xf32>
    %60 = vector.shape_cast %59 : vector<1x32xf32> to vector<32xf32>
    %61 = vector.shape_cast %60 : vector<32xf32> to vector<1x32xf32>
    %62 = vector.broadcast %61 : vector<1x32xf32> to vector<128x32xf32>
    %63 = arith.addf %58, %62 : vector<128x32xf32>
    %cst_16 = arith.constant 0.000000e+00 : f32
    %64 = vector.broadcast %cst_16 : f32 to vector<128x32xf32>
    %65 = arith.maximumf %63, %64 : vector<128x32xf32>
    %c0_17 = arith.constant 0 : index
    %c0_18 = arith.constant 0 : index
    %66 = vector.load %arg7[%c0_17, %c0_18] : memref<32x1xf32, #tpu.memory_space<vmem>>, vector<32x1xf32>
    %cst_19 = arith.constant dense<0.000000e+00> : vector<128x1xf32>
    %67 = tpu.matmul %65, %66, %cst_19 {dimension_numbers = #tpu.dot_dimension_numbers<[1], [0], [0], [1], [0, 0, 1, 1], [], []>} : vector<128x32xf32>, vector<32x1xf32>, vector<128x1xf32> -> vector<128x1xf32>
    %c0_20 = arith.constant 0 : index
    %c0_21 = arith.constant 0 : index
    %68 = vector.load %arg8[%c0_20, %c0_21] : memref<1x1xf32, #tpu.memory_space<vmem>>, vector<1x1xf32>
    %69 = vector.shape_cast %68 : vector<1x1xf32> to vector<1xf32>
    %70 = vector.shape_cast %69 : vector<1xf32> to vector<1x1xf32>
    %71 = vector.broadcast %70 : vector<1x1xf32> to vector<128x1xf32>
    %72 = arith.addf %67, %71 : vector<128x1xf32>
    %73 = arith.negf %72 : vector<128x1xf32>
    %74 = math.exp %73 : vector<128x1xf32>
    %cst_22 = arith.constant 1.000000e+00 : f32
    %75 = vector.broadcast %cst_22 : f32 to vector<128x1xf32>
    %76 = arith.addf %75, %74 : vector<128x1xf32>
    %77 = arith.divf %75, %76 : vector<128x1xf32>
    %78 = vector.shape_cast %77 : vector<128x1xf32> to vector<8x16x1xf32>
    %c0_23 = arith.constant 0 : index
    %c0_24 = arith.constant 0 : index
    %c0_25 = arith.constant 0 : index
    %c0_26 = arith.constant 0 : index
    %79 = vector.load %arg9[%c0_23, %c0_24, %c0_25, %c0_26] : memref<1x8x16x1xf32, #tpu.memory_space<vmem>>, vector<1x8x16x1xf32>
    %80 = vector.shape_cast %79 : vector<1x8x16x1xf32> to vector<8x16x1xf32>
    %81 = vector.shape_cast %78 : vector<8x16x1xf32> to vector<1x8x16x1xf32>
    tpu.vector_store %arg9[%c0_23, %c0_24, %c0_25, %c0_26], %81 {strides = array<i32>} : memref<1x8x16x1xf32, #tpu.memory_space<vmem>>, vector<1x8x16x1xf32>,
    return
  }
  func.func @transform_0(%arg0: i32, %arg1: i32) -> (i32, i32, i32, i32) {
    %c2_i32 = arith.constant 2 : i32
    %0 = arith.muli %arg0, %c2_i32 : i32
    %1 = arith.addi %0, %arg1 : i32
    %c0_i32 = arith.constant 0 : i32
    %c0_i32_0 = arith.constant 0 : i32
    %c0_i32_1 = arith.constant 0 : i32
    %c0_i32_2 = arith.constant 0 : i32
    return %1, %c0_i32, %c0_i32_0, %c0_i32_1 : i32, i32, i32, i32
  }
  func.func @transform_1(%arg0: i32, %arg1: i32) -> (i32, i32) {
    %c0_i32 = arith.constant 0 : i32
    %c0_i32_0 = arith.constant 0 : i32
    %c0_i32_1 = arith.constant 0 : i32
    return %c0_i32, %c0_i32_0 : i32, i32
  }
  func.func @transform_2(%arg0: i32, %arg1: i32) -> (i32, i32) {
    %c0_i32 = arith.constant 0 : i32
    %c0_i32_0 = arith.constant 0 : i32
    %c0_i32_1 = arith.constant 0 : i32
    return %c0_i32, %c0_i32_0 : i32, i32
  }
  func.func @transform_3(%arg0: i32, %arg1: i32) -> (i32, i32) {
    %c0_i32 = arith.constant 0 : i32
    %c0_i32_0 = arith.constant 0 : i32
    %c0_i32_1 = arith.constant 0 : i32
    return %c0_i32, %c0_i32_0 : i32, i32
  }
  func.func @transform_4(%arg0: i32, %arg1: i32) -> (i32, i32) {
    %c0_i32 = arith.constant 0 : i32
    %c0_i32_0 = arith.constant 0 : i32
    %c0_i32_1 = arith.constant 0 : i32
    return %c0_i32, %c0_i32_0 : i32, i32
  }
  func.func @transform_5(%arg0: i32, %arg1: i32) -> (i32, i32) {
    %c0_i32 = arith.constant 0 : i32
    %c0_i32_0 = arith.constant 0 : i32
    %c0_i32_1 = arith.constant 0 : i32
    return %c0_i32, %c0_i32_0 : i32, i32
  }
  func.func @transform_6(%arg0: i32, %arg1: i32) -> (i32, i32) {
    %c0_i32 = arith.constant 0 : i32
    %c0_i32_0 = arith.constant 0 : i32
    %c0_i32_1 = arith.constant 0 : i32
    return %c0_i32, %c0_i32_0 : i32, i32
  }
  func.func @transform_7(%arg0: i32, %arg1: i32) -> (i32, i32, i32, i32) {
    %c0_i32 = arith.constant 0 : i32
    %c0_i32_0 = arith.constant 0 : i32
    %c0_i32_1 = arith.constant 0 : i32
    return %arg0, %arg1, %c0_i32, %c0_i32_0 : i32, i32, i32, i32
  }
}

</mosaic_0001>

<llo_original>
// kernel: decoder_forward.1
$region0: #{decoder_forward.1}
  #allocation0 [shape = 'u32[]', space=smem, size = 0x4, offset = 0x4, fixed_abs, tag = 'smem constant byte address 0x4 - core index']
  #allocation1 [shape = 'u32[144,128]{1,0:T(1,128)}', space=vmem, size = 0x12000, scoped, tag = 'internal scratch']
  #allocation2 [shape = 'f32[1,1]{1,0:T(1,128)S(1)}', space=vmem, size = 0x200, scoped, tag = 'scoped memory for decoder_forward.1']
  %s0 = inlined_call_operand.vmem [shape: f32[4,12,20,3], index: 0, kind: input, shape index: {}]
  %s1 = inlined_call_operand.vmem [shape: f32[27,64], index: 1, kind: input, shape index: {}]
  %s2 = inlined_call_operand.vmem [shape: f32[1,64], index: 2, kind: input, shape index: {}]
  %s3 = inlined_call_operand.vmem [shape: f32[576,32], index: 3, kind: input, shape index: {}]
  %s4 = inlined_call_operand.vmem [shape: f32[1,32], index: 4, kind: input, shape index: {}]
  %s5 = inlined_call_operand.vmem [shape: f32[32,1], index: 5, kind: input, shape index: {}]
  %s6 = inlined_call_operand.<no memory space> [shape: f32[1,1], index: 6, kind: input, shape index: {}]
  %s7 = inlined_call_operand.vmem [shape: f32[2,16,16,1], index: 7, kind: output, shape index: {}]
  %s8 = sld [smem:[#allocation0]]
  $region61: #{decoder_forward.1} parent=0
    _
  %s10 = ssub.s32 1, %s8
  %s11 = scalar_select 0, %s10, %s8
  %v12 = vstv %s6
  %13 = vst [vmem:[#allocation2] sm:$0x1] %v12
  loop: start=0, step=1, limit=6
  $region2: #{decoder_forward.1} parent=0 // loop_pre_header
    _
  $region3: #{decoder_forward.1} parent=0 // loop_header
    %s15 = sphi 0, %s19
    %p16 = scmp.ge.s32.totalorder %s15, 6
    %s22 = sphi 0, %s34
    %s23 = sphi 0, %s30
    %s24 = sphi 0, %s22
    %s25 = sphi 0, %s23
    %s26 = sphi 0, %s24
    %s27 = sphi 0, %s25
    %s41 = sphi 0, %s43
    %s44 = sphi 0, %s41
    %s45 = sphi 0, %s44
    %s61 = sphi 0, %s45
    %s65 = sphi 0, %s65
    %s67 = sphi 0, %s65
    %s68 = sphi 0, %s67
    %s82 = sphi 0, %s68
    %s86 = sphi 0, %s86
    %s88 = sphi 0, %s86
    %s89 = sphi 0, %s88
    %s103 = sphi 0, %s89
    %s107 = sphi 0, %s107
    %s109 = sphi 0, %s107
    %s110 = sphi 0, %s109
    %s124 = sphi 0, %s110
    %s128 = sphi 0, %s128
    %s130 = sphi 0, %s128
    %s131 = sphi 0, %s130
    %s145 = sphi 0, %s131
    %s149 = sphi 0, %s149
    %s151 = sphi 0, %s149
    %s152 = sphi 0, %s151
    %s166 = sphi 0, %s152
    %s170 = sphi 0, %s170
    %s172 = sphi 0, %s170
    %s173 = sphi 0, %s172
    %s187 = sphi 0, %s173
    %s195 = sphi 0, %s197
    %s198 = sphi 0, %s195
    %s199 = sphi 0, %s198
    %s215 = sphi 0, %s199
  $region4: #{decoder_forward.1} parent=0 // loop_header_branch
    %18 = sbr.rel (%p16) target = $region8
  $region5: #{decoder_forward.1} parent=0 // loop_body
    %s20 = ssub.s32 %s15, 1
    %s21 = ssub.s32 %s15, 2
    %s28 = sadd.s32 1, %s23
    %p29 = scmp.ge.s32.totalorder %s28, 2
    %s30 = scalar_select %p29, 0, %s28
    %s31 = sadd.s32 1, %s22
    %s32 = scalar_select %p29, %s31, %s22
    %p33 = scmp.ge.s32.totalorder %s32, 2
    %s34 = scalar_select %p33, 0, %s32
    %s35 = smul.u32 %s22, 2
    %s36 = sadd.s32 %s35, %s23
    %s37 = smul.u32 %s34, 2
    %s38 = sadd.s32 %s37, %s30
    %s39 = ssub.s32 %s36, %s38
    %p40 = scmp.eq.s32.totalorder %s39, 0
    %s42 = sadd.s32 %s41, 1
    %s43 = scalar_select %p40, %s41, %s42
    %p46 = pneg %p40
    %p47 = scmp.eq.s32.totalorder %s15, 3
    %p48 = por %p46, %p47
    %p49 = scmp.ne.s32.totalorder %s41, %s44
    %p50 = scmp.eq.s32.totalorder %s15, 0
    %p51 = por %p49, %p50
    %p52 = scmp.ne.s32.totalorder %s41, %s44
    %p53 = scmp.eq.s32.totalorder %s20, 3
    %p54 = por %p52, %p53
    %p55 = scmp.ne.s32.totalorder %s44, %s45
    %p56 = scmp.eq.s32.totalorder %s20, 0
    %p57 = por %p55, %p56
    %p58 = scmp.ne.s32.totalorder %s44, %s45
    %p59 = scmp.eq.s32.totalorder %s21, 3
    %p60 = por %p58, %p59
    %p62 = scmp.ne.s32.totalorder %s45, %s61
    %p63 = scmp.eq.s32.totalorder %s21, 0
    %p64 = por %p62, %p63
    %s66 = sadd.s32 %s65, 1
    %p69 = scmp.eq.s32.totalorder %s15, 3
    %p70 = scmp.ne.s32.totalorder %s65, %s67
    %p71 = scmp.eq.s32.totalorder %s15, 0
    %p72 = por %p70, %p71
    %p73 = scmp.ne.s32.totalorder %s65, %s67
    %p74 = scmp.eq.s32.totalorder %s20, 3
    %p75 = por %p73, %p74
    %p76 = scmp.ne.s32.totalorder %s67, %s68
    %p77 = scmp.eq.s32.totalorder %s20, 0
    %p78 = por %p76, %p77
    %p79 = scmp.ne.s32.totalorder %s67, %s68
    %p80 = scmp.eq.s32.totalorder %s21, 3
    %p81 = por %p79, %p80
    %p83 = scmp.ne.s32.totalorder %s68, %s82
    %p84 = scmp.eq.s32.totalorder %s21, 0
    %p85 = por %p83, %p84
    %s87 = sadd.s32 %s86, 1
    %p90 = scmp.eq.s32.totalorder %s15, 3
    %p91 = scmp.ne.s32.totalorder %s86, %s88
    %p92 = scmp.eq.s32.totalorder %s15, 0
    %p93 = por %p91, %p92
    %p94 = scmp.ne.s32.totalorder %s86, %s88
    %p95 = scmp.eq.s32.totalorder %s20, 3
    %p96 = por %p94, %p95
    %p97 = scmp.ne.s32.totalorder %s88, %s89
    %p98 = scmp.eq.s32.totalorder %s20, 0
    %p99 = por %p97, %p98
    %p100 = scmp.ne.s32.totalorder %s88, %s89
    %p101 = scmp.eq.s32.totalorder %s21, 3
    %p102 = por %p100, %p101
    %p104 = scmp.ne.s32.totalorder %s89, %s103
    %p105 = scmp.eq.s32.totalorder %s21, 0
    %p106 = por %p104, %p105
    %s108 = sadd.s32 %s107, 1
    %p111 = scmp.eq.s32.totalorder %s15, 3
    %p112 = scmp.ne.s32.totalorder %s107, %s109
    %p113 = scmp.eq.s32.totalorder %s15, 0
    %p114 = por %p112, %p113
    %p115 = scmp.ne.s32.totalorder %s107, %s109
    %p116 = scmp.eq.s32.totalorder %s20, 3
    %p117 = por %p115, %p116
    %p118 = scmp.ne.s32.totalorder %s109, %s110
    %p119 = scmp.eq.s32.totalorder %s20, 0
    %p120 = por %p118, %p119
    %p121 = scmp.ne.s32.totalorder %s109, %s110
    %p122 = scmp.eq.s32.totalorder %s21, 3
    %p123 = por %p121, %p122
    %p125 = scmp.ne.s32.totalorder %s110, %s124
    %p126 = scmp.eq.s32.totalorder %s21, 0
    %p127 = por %p125, %p126
    %s129 = sadd.s32 %s128, 1
    %p132 = scmp.eq.s32.totalorder %s15, 3
    %p133 = scmp.ne.s32.totalorder %s128, %s130
    %p134 = scmp.eq.s32.totalorder %s15, 0
    %p135 = por %p133, %p134
    %p136 = scmp.ne.s32.totalorder %s128, %s130
    %p137 = scmp.eq.s32.totalorder %s20, 3
    %p138 = por %p136, %p137
    %p139 = scmp.ne.s32.totalorder %s130, %s131
    %p140 = scmp.eq.s32.totalorder %s20, 0
    %p141 = por %p139, %p140
    %p142 = scmp.ne.s32.totalorder %s130, %s131
    %p143 = scmp.eq.s32.totalorder %s21, 3
    %p144 = por %p142, %p143
    %p146 = scmp.ne.s32.totalorder %s131, %s145
    %p147 = scmp.eq.s32.totalorder %s21, 0
    %p148 = por %p146, %p147
    %s150 = sadd.s32 %s149, 1
    %p153 = scmp.eq.s32.totalorder %s15, 3
    %p154 = scmp.ne.s32.totalorder %s149, %s151
    %p155 = scmp.eq.s32.totalorder %s15, 0
    %p156 = por %p154, %p155
    %p157 = scmp.ne.s32.totalorder %s149, %s151
    %p158 = scmp.eq.s32.totalorder %s20, 3
    %p159 = por %p157, %p158
    %p160 = scmp.ne.s32.totalorder %s151, %s152
    %p161 = scmp.eq.s32.totalorder %s20, 0
    %p162 = por %p160, %p161
    %p163 = scmp.ne.s32.totalorder %s151, %s152
    %p164 = scmp.eq.s32.totalorder %s21, 3
    %p165 = por %p163, %p164
    %p167 = scmp.ne.s32.totalorder %s152, %s166
    %p168 = scmp.eq.s32.totalorder %s21, 0
    %p169 = por %p167, %p168
    %s171 = sadd.s32 %s170, 1
    %p174 = scmp.eq.s32.totalorder %s15, 3
    %p175 = scmp.ne.s32.totalorder %s170, %s172
    %p176 = scmp.eq.s32.totalorder %s15, 0
    %p177 = por %p175, %p176
    %p178 = scmp.ne.s32.totalorder %s170, %s172
    %p179 = scmp.eq.s32.totalorder %s20, 3
    %p180 = por %p178, %p179
    %p181 = scmp.ne.s32.totalorder %s172, %s173
    %p182 = scmp.eq.s32.totalorder %s20, 0
    %p183 = por %p181, %p182
    %p184 = scmp.ne.s32.totalorder %s172, %s173
    %p185 = scmp.eq.s32.totalorder %s21, 3
    %p186 = por %p184, %p185
    %p188 = scmp.ne.s32.totalorder %s173, %s187
    %p189 = scmp.eq.s32.totalorder %s21, 0
    %p190 = por %p188, %p189
    %s191 = ssub.s32 %s22, %s34
    %s192 = ssub.s32 %s23, %s30
    %s193 = sor.u32 %s191, %s192
    %p194 = scmp.eq.s32.totalorder %s193, 0
    %s196 = sadd.s32 %s195, 1
    %s197 = scalar_select %p194, %s195, %s196
    %p200 = pneg %p194
    %p201 = scmp.eq.s32.totalorder %s15, 3
    %p202 = por %p200, %p201
    %p203 = scmp.ne.s32.totalorder %s195, %s198
    %p204 = scmp.eq.s32.totalorder %s15, 0
    %p205 = por %p203, %p204
    %p206 = scmp.ne.s32.totalorder %s195, %s198
    %p207 = scmp.eq.s32.totalorder %s20, 3
    %p208 = por %p206, %p207
    %p209 = scmp.ne.s32.totalorder %s198, %s199
    %p210 = scmp.eq.s32.totalorder %s20, 0
    %p211 = por %p209, %p210
    %p212 = scmp.ne.s32.totalorder %s198, %s199
    %p213 = scmp.eq.s32.totalorder %s21, 3
    %p214 = por %p212, %p213
    %p216 = scmp.ne.s32.totalorder %s199, %s215
    %p217 = scmp.eq.s32.totalorder %s21, 0
    %p218 = por %p216, %p217
    %p219 = scmp.le.s32.totalorder 1, %s15
    %p220 = scmp.lt.s32.totalorder %s15, 5
    %p221 = pnand %p219, %p220
    %p222 = pneg %p221
    // Predicated region
    $region9: #{decoder_forward.1} parent=5 // pred_check
      _
    $region10: #{decoder_forward.1} parent=5 // pred_check_branch
      %224 = sbr.rel (%p221) target = $region12
    $region11: #{decoder_forward.1} parent=5 // pred_region
      %s225 = ssub.s32 %s15, 1
      // Predicated region
      $region13: #{decoder_forward.1} parent=11 // pred_check
        %p226 = pneg %p78
      $region14: #{decoder_forward.1} parent=11 // pred_check_branch
        %228 = sbr.rel (%p226) target = $region16
      $region15: #{decoder_forward.1} parent=11 // pred_region
        _
      $region16: #{decoder_forward.1} parent=11 // pred_fallthru
        _
      // Predicated region
      $region17: #{decoder_forward.1} parent=11 // pred_check
        %p229 = pneg %p99
      $region18: #{decoder_forward.1} parent=11 // pred_check_branch
        %231 = sbr.rel (%p229) target = $region20
      $region19: #{decoder_forward.1} parent=11 // pred_region
        _
      $region20: #{decoder_forward.1} parent=11 // pred_fallthru
        _
      // Predicated region
      $region21: #{decoder_forward.1} parent=11 // pred_check
        %p232 = pneg %p120
      $region22: #{decoder_forward.1} parent=11 // pred_check_branch
        %234 = sbr.rel (%p232) target = $region24
      $region23: #{decoder_forward.1} parent=11 // pred_region
        _
      $region24: #{decoder_forward.1} parent=11 // pred_fallthru
        _
      // Predicated region
      $region25: #{decoder_forward.1} parent=11 // pred_check
        %p235 = pneg %p141
      $region26: #{decoder_forward.1} parent=11 // pred_check_branch
        %237 = sbr.rel (%p235) target = $region28
      $region27: #{decoder_forward.1} parent=11 // pred_region
        _
      $region28: #{decoder_forward.1} parent=11 // pred_fallthru
        _
      // Predicated region
      $region29: #{decoder_forward.1} parent=11 // pred_check
        %p238 = pneg %p162
      $region30: #{decoder_forward.1} parent=11 // pred_check_branch
        %240 = sbr.rel (%p238) target = $region32
      $region31: #{decoder_forward.1} parent=11 // pred_region
        _
      $region32: #{decoder_forward.1} parent=11 // pred_fallthru
        _
      // Predicated region
      $region33: #{decoder_forward.1} parent=11 // pred_check
        %p241 = pneg %p183
      $region34: #{decoder_forward.1} parent=11 // pred_check_branch
        %243 = sbr.rel (%p241) target = $region36
      $region35: #{decoder_forward.1} parent=11 // pred_region
        _
      $region36: #{decoder_forward.1} parent=11 // pred_fallthru
        _
    $region12: #{decoder_forward.1} parent=5 // pred_fallthru
      _
    %p244 = scmp.lt.s32.totalorder %s15, 4
    // Predicated region
    $region37: #{decoder_forward.1} parent=5 // pred_check
      %p245 = pneg %p244
    $region38: #{decoder_forward.1} parent=5 // pred_check_branch
      %247 = sbr.rel (%p245) target = $region40
    $region39: #{decoder_forward.1} parent=5 // pred_region
      // Predicated region
      $region41: #{decoder_forward.1} parent=39 // pred_check
        %p248 = pneg %p51
      $region42: #{decoder_forward.1} parent=39 // pred_check_branch
        %250 = sbr.rel (%p248) target = $region44
      $region43: #{decoder_forward.1} parent=39 // pred_region
        %s251 = smul.u32 %s22, 2
        %s252 = sadd.s32 %s251, %s23
        %p253 = scmp.lt.s32.totalorder %s252, 3
        %s254 = scalar_select %p253, %s252, 3
        %s255 = smul.addr %s254, 36
        %s256 = smul.addr %s255, 8
        %s257 = scalar_lea.vmem %s0, %s256
        %s258 = smul.u32 %s22, 2
        %s259 = sadd.s32 %s258, %s23
      $region44: #{decoder_forward.1} parent=39 // pred_fallthru
        _
    $region40: #{decoder_forward.1} parent=5 // pred_fallthru
      _
    %p260 = scmp.le.s32.totalorder 1, %s15
    %p261 = scmp.lt.s32.totalorder %s15, 5
    %p262 = pnand %p260, %p261
    %p263 = pneg %p262
    // Predicated region
    $region45: #{decoder_forward.1} parent=5 // pred_check
      _
    $region46: #{decoder_forward.1} parent=5 // pred_check_branch
      %265 = sbr.rel (%p262) target = $region48
    $region47: #{decoder_forward.1} parent=5 // pred_region
      %s266 = ssub.s32 %s15, 1
      %s267 = smul.u32 %s24, 2
      %s268 = sadd.s32 %s267, %s25
      %p269 = scmp.lt.s32.totalorder %s268, 3
      %s270 = scalar_select %p269, %s268, 3
      %s271 = smul.addr %s270, 36
      %s272 = smul.addr %s271, 8
      %s273 = scalar_lea.vmem %s0, %s272
      %p274 = pneg %p57
      %p275 = pneg %p54
      %p276 = pneg %p78
      %p277 = pneg %p75
      %p278 = pneg %p99
      %p279 = pneg %p96
      %p280 = pneg %p120
      %p281 = pneg %p117
      %p282 = pneg %p141
      %p283 = pneg %p138
      %p284 = pneg %p162
      %p285 = pneg %p159
      %p286 = pneg %p183
      %p287 = pneg %p180
      %p288 = pneg %p211
      %p289 = pneg %p208
      %s290 = smul.u32 8, %s25
      %p291 = scmp.lt.s32.totalorder %s24, 1
      %s292 = scalar_select %p291, %s24, 1
      %p293 = scmp.lt.s32.totalorder %s290, 15
      %s294 = scalar_select %p293, %s290, 15
      %s295 = smul.addr %s294, 2
      %s296 = smul.addr %s292, 32
      %s297 = sadd.s32 %s295, %s296
      %s298 = smul.addr %s297, 8
      %s299 = scalar_lea.vmem %s7, %s298
      %s300 = smul.u32 %s24, 2
      %s301 = sadd.s32 %s300, %s25
      %p302 = scmp.lt.s32.totalorder %s301, 3
      %s303 = scalar_select %p302, %s301, 3
      %s304 = smul.addr %s303, 36
      %s305 = smul.addr %s304, 8
      %s306 = scalar_lea.vmem %s0, %s305
      %s307 = smul.u32 %s24, 2
      %s308 = sadd.s32 %s307, %s25
      %s309 = smul.u32 8, %s25
      %p310 = scmp.lt.s32.totalorder %s24, 1
      %s311 = scalar_select %p310, %s24, 1
      %p312 = scmp.lt.s32.totalorder %s309, 15
      %s313 = scalar_select %p312, %s309, 15
      %s314 = smul.addr %s313, 2
      %s315 = smul.addr %s311, 32
      %s316 = sadd.s32 %s314, %s315
      %s317 = smul.addr %s316, 8
      %s318 = scalar_lea.vmem %s7, %s317
      %s319 = smul.u32 8, %s25
      %v320 = vld [vmem:[%s306] sm:$0xff]
      %v321 = vld [vmem:[%s306 + $0x8] sm:$0xff]
      %v322 = vld [vmem:[%s306 + $0x10] sm:$0xf]
      %v323 = vld [vmem:[%s306 + $0x18] sm:$0xff]
      %v324 = vld [vmem:[%s306 + $0x20] sm:$0xff]
      %v325 = vld [vmem:[%s306 + $0x28] sm:$0xf]
      %v326 = vld [vmem:[%s306 + $0x30] sm:$0xff]
      %v327 = vld [vmem:[%s306 + $0x38] sm:$0xff]
      %v328 = vld [vmem:[%s306 + $0x40] sm:$0xf]
      %v329 = vld [vmem:[%s306 + $0x48] sm:$0xff]
      %v330 = vld [vmem:[%s306 + $0x50] sm:$0xff]
      %v331 = vld [vmem:[%s306 + $0x58] sm:$0xf]
      %v332 = vld [vmem:[%s306 + $0x60] sm:$0xff]
      %v333 = vld [vmem:[%s306 + $0x68] sm:$0xff]
      %v334 = vld [vmem:[%s306 + $0x70] sm:$0xf]
      %v335 = vld [vmem:[%s306 + $0x78] sm:$0xff]
      %v336 = vld [vmem:[%s306 + $0x80] sm:$0xff]
      %v337 = vld [vmem:[%s306 + $0x88] sm:$0xf]
      %v338 = vld [vmem:[%s306 + $0x90] sm:$0xff]
      %v339 = vld [vmem:[%s306 + $0x98] sm:$0xff]
      %v340 = vld [vmem:[%s306 + $0xa0] sm:$0xf]
      %v341 = vld [vmem:[%s306 + $0xa8] sm:$0xff]
      %v342 = vld [vmem:[%s306 + $0xb0] sm:$0xff]
      %v343 = vld [vmem:[%s306 + $0xb8] sm:$0xf]
      %v344 = vld [vmem:[%s306 + $0xc0] sm:$0xff]
      %v345 = vld [vmem:[%s306 + $0xc8] sm:$0xff]
      %v346 = vld [vmem:[%s306 + $0xd0] sm:$0xf]
      %v347 = vld [vmem:[%s306 + $0xd8] sm:$0xff]
      %v348 = vld [vmem:[%s306 + $0xe0] sm:$0xff]
      %v349 = vld [vmem:[%s306 + $0xe8] sm:$0xf]
      %v350 = vld [vmem:[%s306 + $0xf0] sm:$0xff]
      %v351 = vld [vmem:[%s306 + $0xf8] sm:$0xff]
      %v352 = vld [vmem:[%s306 + $0x100] sm:$0xf]
      %v353 = vld [vmem:[%s306 + $0x108] sm:$0xff]
      %v354 = vld [vmem:[%s306 + $0x110] sm:$0xff]
      %v355 = vld [vmem:[%s306 + $0x118] sm:$0xf]
      %vm386 = vcmask 1046528
      %v387 = vrot.slane %v320, 1
      %v388 = vrot.slane %v321, 1
      %v389 = vsel %vm386, %v387, %v388
      %v390 = vrot.slane %v322, 1
      %v391 = vsel %vm386, %v388, %v390
      %v392 = vrot.slane %v323, 1
      %v393 = vrot.slane %v324, 1
      %v394 = vsel %vm386, %v392, %v393
      %v395 = vrot.slane %v325, 1
      %v396 = vsel %vm386, %v393, %v395
      %v397 = vrot.slane %v326, 1
      %v398 = vrot.slane %v327, 1
      %v399 = vsel %vm386, %v397, %v398
      %v400 = vrot.slane %v328, 1
      %v401 = vsel %vm386, %v398, %v400
      %v402 = vrot.slane %v329, 1
      %v403 = vrot.slane %v330, 1
      %v404 = vsel %vm386, %v402, %v403
      %v405 = vrot.slane %v331, 1
      %v406 = vsel %vm386, %v403, %v405
      %v407 = vrot.slane %v332, 1
      %v408 = vrot.slane %v333, 1
      %v409 = vsel %vm386, %v407, %v408
      %v410 = vrot.slane %v334, 1
      %v411 = vsel %vm386, %v408, %v410
      %v412 = vrot.slane %v335, 1
      %v413 = vrot.slane %v336, 1
      %v414 = vsel %vm386, %v412, %v413
      %v415 = vrot.slane %v337, 1
      %v416 = vsel %vm386, %v413, %v415
      %v417 = vrot.slane %v338, 1
      %v418 = vrot.slane %v339, 1
      %v419 = vsel %vm386, %v417, %v418
      %v420 = vrot.slane %v340, 1
      %v421 = vsel %vm386, %v418, %v420
      %v422 = vrot.slane %v341, 1
      %v423 = vrot.slane %v342, 1
      %v424 = vsel %vm386, %v422, %v423
      %v425 = vrot.slane %v343, 1
      %v426 = vsel %vm386, %v423, %v425
      %v427 = vrot.slane %v344, 1
      %v428 = vrot.slane %v345, 1
      %v429 = vsel %vm386, %v427, %v428
      %v430 = vrot.slane %v346, 1
      %v431 = vsel %vm386, %v428, %v430
      %v432 = vrot.slane %v347, 1
      %v433 = vrot.slane %v348, 1
      %v434 = vsel %vm386, %v432, %v433
      %v435 = vrot.slane %v349, 1
      %v436 = vsel %vm386, %v433, %v435
      %437 = vrot.lane.b32.xlu0 %v389, 3
      %v438 = vpop.permute.xlu0 %437
      %439 = vrot.lane.b32.xlu0 %v391, 3
      %v440 = vpop.permute.xlu0 %439
      %441 = vrot.lane.b32.xlu0 %v390, 3
      %v442 = vpop.permute.xlu0 %441
      %443 = vrot.lane.b32.xlu0 %v394, 3
      %v444 = vpop.permute.xlu0 %443
      %445 = vrot.lane.b32.xlu0 %v396, 3
      %v446 = vpop.permute.xlu0 %445
      %447 = vrot.lane.b32.xlu0 %v395, 3
      %v448 = vpop.permute.xlu0 %447
      %449 = vrot.lane.b32.xlu0 %v399, 3
      %v450 = vpop.permute.xlu0 %449
      %451 = vrot.lane.b32.xlu0 %v401, 3
      %v452 = vpop.permute.xlu0 %451
      %453 = vrot.lane.b32.xlu0 %v400, 3
      %v454 = vpop.permute.xlu0 %453
      %455 = vrot.lane.b32.xlu0 %v404, 3
      %v456 = vpop.permute.xlu0 %455
      %457 = vrot.lane.b32.xlu0 %v406, 3
      %v458 = vpop.permute.xlu0 %457
      %459 = vrot.lane.b32.xlu0 %v405, 3
      %v460 = vpop.permute.xlu0 %459
      %461 = vrot.lane.b32.xlu0 %v409, 3
      %v462 = vpop.permute.xlu0 %461
      %463 = vrot.lane.b32.xlu0 %v411, 3
      %v464 = vpop.permute.xlu0 %463
      %465 = vrot.lane.b32.xlu0 %v410, 3
      %v466 = vpop.permute.xlu0 %465
      %467 = vrot.lane.b32.xlu0 %v414, 3
      %v468 = vpop.permute.xlu0 %467
      %469 = vrot.lane.b32.xlu0 %v416, 3
      %v470 = vpop.permute.xlu0 %469
      %471 = vrot.lane.b32.xlu0 %v415, 3
      %v472 = vpop.permute.xlu0 %471
      %473 = vrot.lane.b32.xlu0 %v419, 3
      %v474 = vpop.permute.xlu0 %473
      %475 = vrot.lane.b32.xlu0 %v421, 3
      %v476 = vpop.permute.xlu0 %475
      %477 = vrot.lane.b32.xlu0 %v420, 3
      %v478 = vpop.permute.xlu0 %477
      %479 = vrot.lane.b32.xlu0 %v424, 3
      %v480 = vpop.permute.xlu0 %479
      %481 = vrot.lane.b32.xlu0 %v426, 3
      %v482 = vpop.permute.xlu0 %481
      %483 = vrot.lane.b32.xlu0 %v425, 3
      %v484 = vpop.permute.xlu0 %483
      %485 = vrot.lane.b32.xlu0 %v429, 3
      %v486 = vpop.permute.xlu0 %485
      %487 = vrot.lane.b32.xlu0 %v431, 3
      %v488 = vpop.permute.xlu0 %487
      %489 = vrot.lane.b32.xlu0 %v430, 3
      %v490 = vpop.permute.xlu0 %489
      %491 = vrot.lane.b32.xlu0 %v434, 3
      %v492 = vpop.permute.xlu0 %491
      %493 = vrot.lane.b32.xlu0 %v436, 3
      %v494 = vpop.permute.xlu0 %493
      %495 = vrot.lane.b32.xlu0 %v435, 3
      %v496 = vpop.permute.xlu0 %495
      %vm527 = vcmask 1045504
      %v528 = vrot.slane %v320, 2
      %v529 = vrot.slane %v321, 2
      %v530 = vsel %vm527, %v528, %v529
      %v531 = vrot.slane %v322, 2
      %v532 = vsel %vm527, %v529, %v531
      %v533 = vrot.slane %v323, 2
      %v534 = vrot.slane %v324, 2
      %v535 = vsel %vm527, %v533, %v534
      %v536 = vrot.slane %v325, 2
      %v537 = vsel %vm527, %v534, %v536
      %v538 = vrot.slane %v326, 2
      %v539 = vrot.slane %v327, 2
      %v540 = vsel %vm527, %v538, %v539
      %v541 = vrot.slane %v328, 2
      %v542 = vsel %vm527, %v539, %v541
      %v543 = vrot.slane %v329, 2
      %v544 = vrot.slane %v330, 2
      %v545 = vsel %vm527, %v543, %v544
      %v546 = vrot.slane %v331, 2
      %v547 = vsel %vm527, %v544, %v546
      %v548 = vrot.slane %v332, 2
      %v549 = vrot.slane %v333, 2
      %v550 = vsel %vm527, %v548, %v549
      %v551 = vrot.slane %v334, 2
      %v552 = vsel %vm527, %v549, %v551
      %v553 = vrot.slane %v335, 2
      %v554 = vrot.slane %v336, 2
      %v555 = vsel %vm527, %v553, %v554
      %v556 = vrot.slane %v337, 2
      %v557 = vsel %vm527, %v554, %v556
      %v558 = vrot.slane %v338, 2
      %v559 = vrot.slane %v339, 2
      %v560 = vsel %vm527, %v558, %v559
      %v561 = vrot.slane %v340, 2
      %v562 = vsel %vm527, %v559, %v561
      %v563 = vrot.slane %v341, 2
      %v564 = vrot.slane %v342, 2
      %v565 = vsel %vm527, %v563, %v564
      %v566 = vrot.slane %v343, 2
      %v567 = vsel %vm527, %v564, %v566
      %v568 = vrot.slane %v344, 2
      %v569 = vrot.slane %v345, 2
      %v570 = vsel %vm527, %v568, %v569
      %v571 = vrot.slane %v346, 2
      %v572 = vsel %vm527, %v569, %v571
      %v573 = vrot.slane %v347, 2
      %v574 = vrot.slane %v348, 2
      %v575 = vsel %vm527, %v573, %v574
      %v576 = vrot.slane %v349, 2
      %v577 = vsel %vm527, %v574, %v576
      %578 = vrot.lane.b32.xlu0 %v530, 6
      %v579 = vpop.permute.xlu0 %578
      %580 = vrot.lane.b32.xlu0 %v532, 6
      %v581 = vpop.permute.xlu0 %580
      %582 = vrot.lane.b32.xlu0 %v531, 6
      %v583 = vpop.permute.xlu0 %582
      %584 = vrot.lane.b32.xlu0 %v535, 6
      %v585 = vpop.permute.xlu0 %584
      %586 = vrot.lane.b32.xlu0 %v537, 6
      %v587 = vpop.permute.xlu0 %586
      %588 = vrot.lane.b32.xlu0 %v536, 6
      %v589 = vpop.permute.xlu0 %588
      %590 = vrot.lane.b32.xlu0 %v540, 6
      %v591 = vpop.permute.xlu0 %590
      %592 = vrot.lane.b32.xlu0 %v542, 6
      %v593 = vpop.permute.xlu0 %592
      %594 = vrot.lane.b32.xlu0 %v541, 6
      %v595 = vpop.permute.xlu0 %594
      %596 = vrot.lane.b32.xlu0 %v545, 6
      %v597 = vpop.permute.xlu0 %596
      %598 = vrot.lane.b32.xlu0 %v547, 6
      %v599 = vpop.permute.xlu0 %598
      %600 = vrot.lane.b32.xlu0 %v546, 6
      %v601 = vpop.permute.xlu0 %600
      %602 = vrot.lane.b32.xlu0 %v550, 6
      %v603 = vpop.permute.xlu0 %602
      %604 = vrot.lane.b32.xlu0 %v552, 6
      %v605 = vpop.permute.xlu0 %604
      %606 = vrot.lane.b32.xlu0 %v551, 6
      %v607 = vpop.permute.xlu0 %606
      %608 = vrot.lane.b32.xlu0 %v555, 6
      %v609 = vpop.permute.xlu0 %608
      %610 = vrot.lane.b32.xlu0 %v557, 6
      %v611 = vpop.permute.xlu0 %610
      %612 = vrot.lane.b32.xlu0 %v556, 6
      %v613 = vpop.permute.xlu0 %612
      %614 = vrot.lane.b32.xlu0 %v560, 6
      %v615 = vpop.permute.xlu0 %614
      %616 = vrot.lane.b32.xlu0 %v562, 6
      %v617 = vpop.permute.xlu0 %616
      %618 = vrot.lane.b32.xlu0 %v561, 6
      %v619 = vpop.permute.xlu0 %618
      %620 = vrot.lane.b32.xlu0 %v565, 6
      %v621 = vpop.permute.xlu0 %620
      %622 = vrot.lane.b32.xlu0 %v567, 6
      %v623 = vpop.permute.xlu0 %622
      %624 = vrot.lane.b32.xlu0 %v566, 6
      %v625 = vpop.permute.xlu0 %624
      %626 = vrot.lane.b32.xlu0 %v570, 6
      %v627 = vpop.permute.xlu0 %626
      %628 = vrot.lane.b32.xlu0 %v572, 6
      %v629 = vpop.permute.xlu0 %628
      %630 = vrot.lane.b32.xlu0 %v571, 6
      %v631 = vpop.permute.xlu0 %630
      %632 = vrot.lane.b32.xlu0 %v575, 6
      %v633 = vpop.permute.xlu0 %632
      %634 = vrot.lane.b32.xlu0 %v577, 6
      %v635 = vpop.permute.xlu0 %634
      %636 = vrot.lane.b32.xlu0 %v576, 6
      %v637 = vpop.permute.xlu0 %636
      %671 = vrot.lane.b32.xlu0 %v323, 9
      %v672 = vpop.permute.xlu0 %671
      %673 = vrot.lane.b32.xlu0 %v324, 9
      %v674 = vpop.permute.xlu0 %673
      %675 = vrot.lane.b32.xlu0 %v325, 9
      %v676 = vpop.permute.xlu0 %675
      %677 = vrot.lane.b32.xlu0 %v326, 9
      %v678 = vpop.permute.xlu0 %677
      %679 = vrot.lane.b32.xlu0 %v327, 9
      %v680 = vpop.permute.xlu0 %679
      %681 = vrot.lane.b32.xlu0 %v328, 9
      %v682 = vpop.permute.xlu0 %681
      %683 = vrot.lane.b32.xlu0 %v329, 9
      %v684 = vpop.permute.xlu0 %683
      %685 = vrot.lane.b32.xlu0 %v330, 9
      %v686 = vpop.permute.xlu0 %685
      %687 = vrot.lane.b32.xlu0 %v331, 9
      %v688 = vpop.permute.xlu0 %687
      %689 = vrot.lane.b32.xlu0 %v332, 9
      %v690 = vpop.permute.xlu0 %689
      %691 = vrot.lane.b32.xlu0 %v333, 9
      %v692 = vpop.permute.xlu0 %691
      %693 = vrot.lane.b32.xlu0 %v334, 9
      %v694 = vpop.permute.xlu0 %693
      %695 = vrot.lane.b32.xlu0 %v335, 9
      %v696 = vpop.permute.xlu0 %695
      %697 = vrot.lane.b32.xlu0 %v336, 9
      %v698 = vpop.permute.xlu0 %697
      %699 = vrot.lane.b32.xlu0 %v337, 9
      %v700 = vpop.permute.xlu0 %699
      %701 = vrot.lane.b32.xlu0 %v338, 9
      %v702 = vpop.permute.xlu0 %701
      %703 = vrot.lane.b32.xlu0 %v339, 9
      %v704 = vpop.permute.xlu0 %703
      %705 = vrot.lane.b32.xlu0 %v340, 9
      %v706 = vpop.permute.xlu0 %705
      %707 = vrot.lane.b32.xlu0 %v341, 9
      %v708 = vpop.permute.xlu0 %707
      %709 = vrot.lane.b32.xlu0 %v342, 9
      %v710 = vpop.permute.xlu0 %709
      %711 = vrot.lane.b32.xlu0 %v343, 9
      %v712 = vpop.permute.xlu0 %711
      %713 = vrot.lane.b32.xlu0 %v344, 9
      %v714 = vpop.permute.xlu0 %713
      %715 = vrot.lane.b32.xlu0 %v345, 9
      %v716 = vpop.permute.xlu0 %715
      %717 = vrot.lane.b32.xlu0 %v346, 9
      %v718 = vpop.permute.xlu0 %717
      %719 = vrot.lane.b32.xlu0 %v347, 9
      %v720 = vpop.permute.xlu0 %719
      %721 = vrot.lane.b32.xlu0 %v348, 9
      %v722 = vpop.permute.xlu0 %721
      %723 = vrot.lane.b32.xlu0 %v349, 9
      %v724 = vpop.permute.xlu0 %723
      %725 = vrot.lane.b32.xlu0 %v350, 9
      %v726 = vpop.permute.xlu0 %725
      %727 = vrot.lane.b32.xlu0 %v351, 9
      %v728 = vpop.permute.xlu0 %727
      %729 = vrot.lane.b32.xlu0 %v352, 9
      %v730 = vpop.permute.xlu0 %729
      %v761 = vrot.slane %v350, 1
      %v762 = vrot.slane %v351, 1
      %v763 = vsel %vm386, %v761, %v762
      %v764 = vrot.slane %v352, 1
      %v765 = vsel %vm386, %v762, %v764
      %766 = vrot.lane.b32.xlu0 %v394, 12
      %v767 = vpop.permute.xlu0 %766
      %768 = vrot.lane.b32.xlu0 %v396, 12
      %v769 = vpop.permute.xlu0 %768
      %770 = vrot.lane.b32.xlu0 %v395, 12
      %v771 = vpop.permute.xlu0 %770
      %772 = vrot.lane.b32.xlu0 %v399, 12
      %v773 = vpop.permute.xlu0 %772
      %774 = vrot.lane.b32.xlu0 %v401, 12
      %v775 = vpop.permute.xlu0 %774
      %776 = vrot.lane.b32.xlu0 %v400, 12
      %v777 = vpop.permute.xlu0 %776
      %778 = vrot.lane.b32.xlu0 %v404, 12
      %v779 = vpop.permute.xlu0 %778
      %780 = vrot.lane.b32.xlu0 %v406, 12
      %v781 = vpop.permute.xlu0 %780
      %782 = vrot.lane.b32.xlu0 %v405, 12
      %v783 = vpop.permute.xlu0 %782
      %784 = vrot.lane.b32.xlu0 %v409, 12
      %v785 = vpop.permute.xlu0 %784
      %786 = vrot.lane.b32.xlu0 %v411, 12
      %v787 = vpop.permute.xlu0 %786
      %788 = vrot.lane.b32.xlu0 %v410, 12
      %v789 = vpop.permute.xlu0 %788
      %790 = vrot.lane.b32.xlu0 %v414, 12
      %v791 = vpop.permute.xlu0 %790
      %792 = vrot.lane.b32.xlu0 %v416, 12
      %v793 = vpop.permute.xlu0 %792
      %794 = vrot.lane.b32.xlu0 %v415, 12
      %v795 = vpop.permute.xlu0 %794
      %796 = vrot.lane.b32.xlu0 %v419, 12
      %v797 = vpop.permute.xlu0 %796
      %798 = vrot.lane.b32.xlu0 %v421, 12
      %v799 = vpop.permute.xlu0 %798
      %800 = vrot.lane.b32.xlu0 %v420, 12
      %v801 = vpop.permute.xlu0 %800
      %802 = vrot.lane.b32.xlu0 %v424, 12
      %v803 = vpop.permute.xlu0 %802
      %804 = vrot.lane.b32.xlu0 %v426, 12
      %v805 = vpop.permute.xlu0 %804
      %806 = vrot.lane.b32.xlu0 %v425, 12
      %v807 = vpop.permute.xlu0 %806
      %808 = vrot.lane.b32.xlu0 %v429, 12
      %v809 = vpop.permute.xlu0 %808
      %810 = vrot.lane.b32.xlu0 %v431, 12
      %v811 = vpop.permute.xlu0 %810
      %812 = vrot.lane.b32.xlu0 %v430, 12
      %v813 = vpop.permute.xlu0 %812
      %814 = vrot.lane.b32.xlu0 %v434, 12
      %v815 = vpop.permute.xlu0 %814
      %816 = vrot.lane.b32.xlu0 %v436, 12
      %v817 = vpop.permute.xlu0 %816
      %818 = vrot.lane.b32.xlu0 %v435, 12
      %v819 = vpop.permute.xlu0 %818
      %820 = vrot.lane.b32.xlu0 %v763, 12
      %v821 = vpop.permute.xlu0 %820
      %822 = vrot.lane.b32.xlu0 %v765, 12
      %v823 = vpop.permute.xlu0 %822
      %824 = vrot.lane.b32.xlu0 %v764, 12
      %v825 = vpop.permute.xlu0 %824
      %v856 = vrot.slane %v350, 2
      %v857 = vrot.slane %v351, 2
      %v858 = vsel %vm527, %v856, %v857
      %v859 = vrot.slane %v352, 2
      %v860 = vsel %vm527, %v857, %v859
      %861 = vrot.lane.b32.xlu0 %v535, 15
      %v862 = vpop.permute.xlu0 %861
      %863 = vrot.lane.b32.xlu0 %v537, 15
      %v864 = vpop.permute.xlu0 %863
      %865 = vrot.lane.b32.xlu0 %v536, 15
      %v866 = vpop.permute.xlu0 %865
      %867 = vrot.lane.b32.xlu0 %v540, 15
      %v868 = vpop.permute.xlu0 %867
      %869 = vrot.lane.b32.xlu0 %v542, 15
      %v870 = vpop.permute.xlu0 %869
      %871 = vrot.lane.b32.xlu0 %v541, 15
      %v872 = vpop.permute.xlu0 %871
      %873 = vrot.lane.b32.xlu0 %v545, 15
      %v874 = vpop.permute.xlu0 %873
      %875 = vrot.lane.b32.xlu0 %v547, 15
      %v876 = vpop.permute.xlu0 %875
      %877 = vrot.lane.b32.xlu0 %v546, 15
      %v878 = vpop.permute.xlu0 %877
      %879 = vrot.lane.b32.xlu0 %v550, 15
      %v880 = vpop.permute.xlu0 %879
      %881 = vrot.lane.b32.xlu0 %v552, 15
      %v882 = vpop.permute.xlu0 %881
      %883 = vrot.lane.b32.xlu0 %v551, 15
      %v884 = vpop.permute.xlu0 %883
      %885 = vrot.lane.b32.xlu0 %v555, 15
      %v886 = vpop.permute.xlu0 %885
      %887 = vrot.lane.b32.xlu0 %v557, 15
      %v888 = vpop.permute.xlu0 %887
      %889 = vrot.lane.b32.xlu0 %v556, 15
      %v890 = vpop.permute.xlu0 %889
      %891 = vrot.lane.b32.xlu0 %v560, 15
      %v892 = vpop.permute.xlu0 %891
      %893 = vrot.lane.b32.xlu0 %v562, 15
      %v894 = vpop.permute.xlu0 %893
      %895 = vrot.lane.b32.xlu0 %v561, 15
      %v896 = vpop.permute.xlu0 %895
      %897 = vrot.lane.b32.xlu0 %v565, 15
      %v898 = vpop.permute.xlu0 %897
      %899 = vrot.lane.b32.xlu0 %v567, 15
      %v900 = vpop.permute.xlu0 %899
      %901 = vrot.lane.b32.xlu0 %v566, 15
      %v902 = vpop.permute.xlu0 %901
      %903 = vrot.lane.b32.xlu0 %v570, 15
      %v904 = vpop.permute.xlu0 %903
      %905 = vrot.lane.b32.xlu0 %v572, 15
      %v906 = vpop.permute.xlu0 %905
      %907 = vrot.lane.b32.xlu0 %v571, 15
      %v908 = vpop.permute.xlu0 %907
      %909 = vrot.lane.b32.xlu0 %v575, 15
      %v910 = vpop.permute.xlu0 %909
      %911 = vrot.lane.b32.xlu0 %v577, 15
      %v912 = vpop.permute.xlu0 %911
      %913 = vrot.lane.b32.xlu0 %v576, 15
      %v914 = vpop.permute.xlu0 %913
      %915 = vrot.lane.b32.xlu0 %v858, 15
      %v916 = vpop.permute.xlu0 %915
      %917 = vrot.lane.b32.xlu0 %v860, 15
      %v918 = vpop.permute.xlu0 %917
      %919 = vrot.lane.b32.xlu0 %v859, 15
      %v920 = vpop.permute.xlu0 %919
      %954 = vrot.lane.b32.xlu0 %v326, 18
      %v955 = vpop.permute.xlu0 %954
      %956 = vrot.lane.b32.xlu0 %v327, 18
      %v957 = vpop.permute.xlu0 %956
      %958 = vrot.lane.b32.xlu0 %v328, 18
      %v959 = vpop.permute.xlu0 %958
      %960 = vrot.lane.b32.xlu0 %v329, 18
      %v961 = vpop.permute.xlu0 %960
      %962 = vrot.lane.b32.xlu0 %v330, 18
      %v963 = vpop.permute.xlu0 %962
      %964 = vrot.lane.b32.xlu0 %v331, 18
      %v965 = vpop.permute.xlu0 %964
      %966 = vrot.lane.b32.xlu0 %v332, 18
      %v967 = vpop.permute.xlu0 %966
      %968 = vrot.lane.b32.xlu0 %v333, 18
      %v969 = vpop.permute.xlu0 %968
      %970 = vrot.lane.b32.xlu0 %v334, 18
      %v971 = vpop.permute.xlu0 %970
      %972 = vrot.lane.b32.xlu0 %v335, 18
      %v973 = vpop.permute.xlu0 %972
      %974 = vrot.lane.b32.xlu0 %v336, 18
      %v975 = vpop.permute.xlu0 %974
      %976 = vrot.lane.b32.xlu0 %v337, 18
      %v977 = vpop.permute.xlu0 %976
      %978 = vrot.lane.b32.xlu0 %v338, 18
      %v979 = vpop.permute.xlu0 %978
      %980 = vrot.lane.b32.xlu0 %v339, 18
      %v981 = vpop.permute.xlu0 %980
      %982 = vrot.lane.b32.xlu0 %v340, 18
      %v983 = vpop.permute.xlu0 %982
      %984 = vrot.lane.b32.xlu0 %v341, 18
      %v985 = vpop.permute.xlu0 %984
      %986 = vrot.lane.b32.xlu0 %v342, 18
      %v987 = vpop.permute.xlu0 %986
      %988 = vrot.lane.b32.xlu0 %v343, 18
      %v989 = vpop.permute.xlu0 %988
      %990 = vrot.lane.b32.xlu0 %v344, 18
      %v991 = vpop.permute.xlu0 %990
      %992 = vrot.lane.b32.xlu0 %v345, 18
      %v993 = vpop.permute.xlu0 %992
      %994 = vrot.lane.b32.xlu0 %v346, 18
      %v995 = vpop.permute.xlu0 %994
      %996 = vrot.lane.b32.xlu0 %v347, 18
      %v997 = vpop.permute.xlu0 %996
      %998 = vrot.lane.b32.xlu0 %v348, 18
      %v999 = vpop.permute.xlu0 %998
      %1000 = vrot.lane.b32.xlu0 %v349, 18
      %v1001 = vpop.permute.xlu0 %1000
      %1002 = vrot.lane.b32.xlu0 %v350, 18
      %v1003 = vpop.permute.xlu0 %1002
      %1004 = vrot.lane.b32.xlu0 %v351, 18
      %v1005 = vpop.permute.xlu0 %1004
      %1006 = vrot.lane.b32.xlu0 %v352, 18
      %v1007 = vpop.permute.xlu0 %1006
      %1008 = vrot.lane.b32.xlu0 %v353, 18
      %v1009 = vpop.permute.xlu0 %1008
      %1010 = vrot.lane.b32.xlu0 %v354, 18
      %v1011 = vpop.permute.xlu0 %1010
      %1012 = vrot.lane.b32.xlu0 %v355, 18
      %v1013 = vpop.permute.xlu0 %1012
      %v1044 = vrot.slane %v353, 1
      %v1045 = vrot.slane %v354, 1
      %v1046 = vsel %vm386, %v1044, %v1045
      %v1047 = vrot.slane %v355, 1
      %v1048 = vsel %vm386, %v1045, %v1047
      %1049 = vrot.lane.b32.xlu0 %v399, 21
      %v1050 = vpop.permute.xlu0 %1049
      %1051 = vrot.lane.b32.xlu0 %v401, 21
      %v1052 = vpop.permute.xlu0 %1051
      %1053 = vrot.lane.b32.xlu0 %v400, 21
      %v1054 = vpop.permute.xlu0 %1053
      %1055 = vrot.lane.b32.xlu0 %v404, 21
      %v1056 = vpop.permute.xlu0 %1055
      %1057 = vrot.lane.b32.xlu0 %v406, 21
      %v1058 = vpop.permute.xlu0 %1057
      %1059 = vrot.lane.b32.xlu0 %v405, 21
      %v1060 = vpop.permute.xlu0 %1059
      %1061 = vrot.lane.b32.xlu0 %v409, 21
      %v1062 = vpop.permute.xlu0 %1061
      %1063 = vrot.lane.b32.xlu0 %v411, 21
      %v1064 = vpop.permute.xlu0 %1063
      %1065 = vrot.lane.b32.xlu0 %v410, 21
      %v1066 = vpop.permute.xlu0 %1065
      %1067 = vrot.lane.b32.xlu0 %v414, 21
      %v1068 = vpop.permute.xlu0 %1067
      %1069 = vrot.lane.b32.xlu0 %v416, 21
      %v1070 = vpop.permute.xlu0 %1069
      %1071 = vrot.lane.b32.xlu0 %v415, 21
      %v1072 = vpop.permute.xlu0 %1071
      %1073 = vrot.lane.b32.xlu0 %v419, 21
      %v1074 = vpop.permute.xlu0 %1073
      %1075 = vrot.lane.b32.xlu0 %v421, 21
      %v1076 = vpop.permute.xlu0 %1075
      %1077 = vrot.lane.b32.xlu0 %v420, 21
      %v1078 = vpop.permute.xlu0 %1077
      %1079 = vrot.lane.b32.xlu0 %v424, 21
      %v1080 = vpop.permute.xlu0 %1079
      %1081 = vrot.lane.b32.xlu0 %v426, 21
      %v1082 = vpop.permute.xlu0 %1081
      %1083 = vrot.lane.b32.xlu0 %v425, 21
      %v1084 = vpop.permute.xlu0 %1083
      %1085 = vrot.lane.b32.xlu0 %v429, 21
      %v1086 = vpop.permute.xlu0 %1085
      %1087 = vrot.lane.b32.xlu0 %v431, 21
      %v1088 = vpop.permute.xlu0 %1087
      %1089 = vrot.lane.b32.xlu0 %v430, 21
      %v1090 = vpop.permute.xlu0 %1089
      %1091 = vrot.lane.b32.xlu0 %v434, 21
      %v1092 = vpop.permute.xlu0 %1091
      %1093 = vrot.lane.b32.xlu0 %v436, 21
      %v1094 = vpop.permute.xlu0 %1093
      %1095 = vrot.lane.b32.xlu0 %v435, 21
      %v1096 = vpop.permute.xlu0 %1095
      %1097 = vrot.lane.b32.xlu0 %v763, 21
      %v1098 = vpop.permute.xlu0 %1097
      %1099 = vrot.lane.b32.xlu0 %v765, 21
      %v1100 = vpop.permute.xlu0 %1099
      %1101 = vrot.lane.b32.xlu0 %v764, 21
      %v1102 = vpop.permute.xlu0 %1101
      %1103 = vrot.lane.b32.xlu0 %v1046, 21
      %v1104 = vpop.permute.xlu0 %1103
      %1105 = vrot.lane.b32.xlu0 %v1048, 21
      %v1106 = vpop.permute.xlu0 %1105
      %1107 = vrot.lane.b32.xlu0 %v1047, 21
      %v1108 = vpop.permute.xlu0 %1107
      %v1139 = vrot.slane %v353, 2
      %v1140 = vrot.slane %v354, 2
      %v1141 = vsel %vm527, %v1139, %v1140
      %v1142 = vrot.slane %v355, 2
      %v1143 = vsel %vm527, %v1140, %v1142
      %1144 = vrot.lane.b32.xlu0 %v540, 24
      %v1145 = vpop.permute.xlu0 %1144
      %1146 = vrot.lane.b32.xlu0 %v542, 24
      %v1147 = vpop.permute.xlu0 %1146
      %1148 = vrot.lane.b32.xlu0 %v541, 24
      %v1149 = vpop.permute.xlu0 %1148
      %1150 = vrot.lane.b32.xlu0 %v545, 24
      %v1151 = vpop.permute.xlu0 %1150
      %1152 = vrot.lane.b32.xlu0 %v547, 24
      %v1153 = vpop.permute.xlu0 %1152
      %1154 = vrot.lane.b32.xlu0 %v546, 24
      %v1155 = vpop.permute.xlu0 %1154
      %1156 = vrot.lane.b32.xlu0 %v550, 24
      %v1157 = vpop.permute.xlu0 %1156
      %1158 = vrot.lane.b32.xlu0 %v552, 24
      %v1159 = vpop.permute.xlu0 %1158
      %1160 = vrot.lane.b32.xlu0 %v551, 24
      %v1161 = vpop.permute.xlu0 %1160
      %1162 = vrot.lane.b32.xlu0 %v555, 24
      %v1163 = vpop.permute.xlu0 %1162
      %1164 = vrot.lane.b32.xlu0 %v557, 24
      %v1165 = vpop.permute.xlu0 %1164
      %1166 = vrot.lane.b32.xlu0 %v556, 24
      %v1167 = vpop.permute.xlu0 %1166
      %1168 = vrot.lane.b32.xlu0 %v560, 24
      %v1169 = vpop.permute.xlu0 %1168
      %1170 = vrot.lane.b32.xlu0 %v562, 24
      %v1171 = vpop.permute.xlu0 %1170
      %1172 = vrot.lane.b32.xlu0 %v561, 24
      %v1173 = vpop.permute.xlu0 %1172
      %1174 = vrot.lane.b32.xlu0 %v565, 24
      %v1175 = vpop.permute.xlu0 %1174
      %1176 = vrot.lane.b32.xlu0 %v567, 24
      %v1177 = vpop.permute.xlu0 %1176
      %1178 = vrot.lane.b32.xlu0 %v566, 24
      %v1179 = vpop.permute.xlu0 %1178
      %1180 = vrot.lane.b32.xlu0 %v570, 24
      %v1181 = vpop.permute.xlu0 %1180
      %1182 = vrot.lane.b32.xlu0 %v572, 24
      %v1183 = vpop.permute.xlu0 %1182
      %1184 = vrot.lane.b32.xlu0 %v571, 24
      %v1185 = vpop.permute.xlu0 %1184
      %1186 = vrot.lane.b32.xlu0 %v575, 24
      %v1187 = vpop.permute.xlu0 %1186
      %1188 = vrot.lane.b32.xlu0 %v577, 24
      %v1189 = vpop.permute.xlu0 %1188
      %1190 = vrot.lane.b32.xlu0 %v576, 24
      %v1191 = vpop.permute.xlu0 %1190
      %1192 = vrot.lane.b32.xlu0 %v858, 24
      %v1193 = vpop.permute.xlu0 %1192
      %1194 = vrot.lane.b32.xlu0 %v860, 24
      %v1195 = vpop.permute.xlu0 %1194
      %1196 = vrot.lane.b32.xlu0 %v859, 24
      %v1197 = vpop.permute.xlu0 %1196
      %1198 = vrot.lane.b32.xlu0 %v1141, 24
      %v1199 = vpop.permute.xlu0 %1198
      %1200 = vrot.lane.b32.xlu0 %v1143, 24
      %v1201 = vpop.permute.xlu0 %1200
      %1202 = vrot.lane.b32.xlu0 %v1142, 24
      %v1203 = vpop.permute.xlu0 %1202
      %vm1234 = vcmask 23552
      %v1235 = vsel %vm1234, %v320, %v438
      %v1236 = vsel %vm1234, %v321, %v440
      %v1237 = vsel %vm1234, %v322, %v442
      %v1238 = vsel %vm1234, %v323, %v444
      %v1239 = vsel %vm1234, %v324, %v446
      %v1240 = vsel %vm1234, %v325, %v448
      %v1241 = vsel %vm1234, %v326, %v450
      %v1242 = vsel %vm1234, %v327, %v452
      %v1243 = vsel %vm1234, %v328, %v454
      %v1244 = vsel %vm1234, %v329, %v456
      %v1245 = vsel %vm1234, %v330, %v458
      %v1246 = vsel %vm1234, %v331, %v460
      %v1247 = vsel %vm1234, %v332, %v462
      %v1248 = vsel %vm1234, %v333, %v464
      %v1249 = vsel %vm1234, %v334, %v466
      %v1250 = vsel %vm1234, %v335, %v468
      %v1251 = vsel %vm1234, %v336, %v470
      %v1252 = vsel %vm1234, %v337, %v472
      %v1253 = vsel %vm1234, %v338, %v474
      %v1254 = vsel %vm1234, %v339, %v476
      %v1255 = vsel %vm1234, %v340, %v478
      %v1256 = vsel %vm1234, %v341, %v480
      %v1257 = vsel %vm1234, %v342, %v482
      %v1258 = vsel %vm1234, %v343, %v484
      %v1259 = vsel %vm1234, %v344, %v486
      %v1260 = vsel %vm1234, %v345, %v488
      %v1261 = vsel %vm1234, %v346, %v490
      %v1262 = vsel %vm1234, %v347, %v492
      %v1263 = vsel %vm1234, %v348, %v494
      %v1264 = vsel %vm1234, %v349, %v496
      %vm1265 = vcmask 48128
      %v1266 = vsel %vm1265, %v1235, %v579
      %v1267 = vsel %vm1265, %v1236, %v581
      %v1268 = vsel %vm1265, %v1237, %v583
      %v1269 = vsel %vm1265, %v1238, %v585
      %v1270 = vsel %vm1265, %v1239, %v587
      %v1271 = vsel %vm1265, %v1240, %v589
      %v1272 = vsel %vm1265, %v1241, %v591
      %v1273 = vsel %vm1265, %v1242, %v593
      %v1274 = vsel %vm1265, %v1243, %v595
      %v1275 = vsel %vm1265, %v1244, %v597
      %v1276 = vsel %vm1265, %v1245, %v599
      %v1277 = vsel %vm1265, %v1246, %v601
      %v1278 = vsel %vm1265, %v1247, %v603
      %v1279 = vsel %vm1265, %v1248, %v605
      %v1280 = vsel %vm1265, %v1249, %v607
      %v1281 = vsel %vm1265, %v1250, %v609
      %v1282 = vsel %vm1265, %v1251, %v611
      %v1283 = vsel %vm1265, %v1252, %v613
      %v1284 = vsel %vm1265, %v1253, %v615
      %v1285 = vsel %vm1265, %v1254, %v617
      %v1286 = vsel %vm1265, %v1255, %v619
      %v1287 = vsel %vm1265, %v1256, %v621
      %v1288 = vsel %vm1265, %v1257, %v623
      %v1289 = vsel %vm1265, %v1258, %v625
      %v1290 = vsel %vm1265, %v1259, %v627
      %v1291 = vsel %vm1265, %v1260, %v629
      %v1292 = vsel %vm1265, %v1261, %v631
      %v1293 = vsel %vm1265, %v1262, %v633
      %v1294 = vsel %vm1265, %v1263, %v635
      %v1295 = vsel %vm1265, %v1264, %v637
      %vm1296 = vcmask 72704
      %v1297 = vsel %vm1296, %v1266, %v672
      %v1298 = vsel %vm1296, %v1267, %v674
      %v1299 = vsel %vm1296, %v1268, %v676
      %v1300 = vsel %vm1296, %v1269, %v678
      %v1301 = vsel %vm1296, %v1270, %v680
      %v1302 = vsel %vm1296, %v1271, %v682
      %v1303 = vsel %vm1296, %v1272, %v684
      %v1304 = vsel %vm1296, %v1273, %v686
      %v1305 = vsel %vm1296, %v1274, %v688
      %v1306 = vsel %vm1296, %v1275, %v690
      %v1307 = vsel %vm1296, %v1276, %v692
      %v1308 = vsel %vm1296, %v1277, %v694
      %v1309 = vsel %vm1296, %v1278, %v696
      %v1310 = vsel %vm1296, %v1279, %v698
      %v1311 = vsel %vm1296, %v1280, %v700
      %v1312 = vsel %vm1296, %v1281, %v702
      %v1313 = vsel %vm1296, %v1282, %v704
      %v1314 = vsel %vm1296, %v1283, %v706
      %v1315 = vsel %vm1296, %v1284, %v708
      %v1316 = vsel %vm1296, %v1285, %v710
      %v1317 = vsel %vm1296, %v1286, %v712
      %v1318 = vsel %vm1296, %v1287, %v714
      %v1319 = vsel %vm1296, %v1288, %v716
      %v1320 = vsel %vm1296, %v1289, %v718
      %v1321 = vsel %vm1296, %v1290, %v720
      %v1322 = vsel %vm1296, %v1291, %v722
      %v1323 = vsel %vm1296, %v1292, %v724
      %v1324 = vsel %vm1296, %v1293, %v726
      %v1325 = vsel %vm1296, %v1294, %v728
      %v1326 = vsel %vm1296, %v1295, %v730
      %vm1327 = vcmask 97280
      %v1328 = vsel %vm1327, %v1297, %v767
      %v1329 = vsel %vm1327, %v1298, %v769
      %v1330 = vsel %vm1327, %v1299, %v771
      %v1331 = vsel %vm1327, %v1300, %v773
      %v1332 = vsel %vm1327, %v1301, %v775
      %v1333 = vsel %vm1327, %v1302, %v777
      %v1334 = vsel %vm1327, %v1303, %v779
      %v1335 = vsel %vm1327, %v1304, %v781
      %v1336 = vsel %vm1327, %v1305, %v783
      %v1337 = vsel %vm1327, %v1306, %v785
      %v1338 = vsel %vm1327, %v1307, %v787
      %v1339 = vsel %vm1327, %v1308, %v789
      %v1340 = vsel %vm1327, %v1309, %v791
      %v1341 = vsel %vm1327, %v1310, %v793
      %v1342 = vsel %vm1327, %v1311, %v795
      %v1343 = vsel %vm1327, %v1312, %v797
      %v1344 = vsel %vm1327, %v1313, %v799
      %v1345 = vsel %vm1327, %v1314, %v801
      %v1346 = vsel %vm1327, %v1315, %v803
      %v1347 = vsel %vm1327, %v1316, %v805
      %v1348 = vsel %vm1327, %v1317, %v807
      %v1349 = vsel %vm1327, %v1318, %v809
      %v1350 = vsel %vm1327, %v1319, %v811
      %v1351 = vsel %vm1327, %v1320, %v813
      %v1352 = vsel %vm1327, %v1321, %v815
      %v1353 = vsel %vm1327, %v1322, %v817
      %v1354 = vsel %vm1327, %v1323, %v819
      %v1355 = vsel %vm1327, %v1324, %v821
      %v1356 = vsel %vm1327, %v1325, %v823
      %v1357 = vsel %vm1327, %v1326, %v825
      %vm1358 = vcmask 121856
      %v1359 = vsel %vm1358, %v1328, %v862
      %v1360 = vsel %vm1358, %v1329, %v864
      %v1361 = vsel %vm1358, %v1330, %v866
      %v1362 = vsel %vm1358, %v1331, %v868
      %v1363 = vsel %vm1358, %v1332, %v870
      %v1364 = vsel %vm1358, %v1333, %v872
      %v1365 = vsel %vm1358, %v1334, %v874
      %v1366 = vsel %vm1358, %v1335, %v876
      %v1367 = vsel %vm1358, %v1336, %v878
      %v1368 = vsel %vm1358, %v1337, %v880
      %v1369 = vsel %vm1358, %v1338, %v882
      %v1370 = vsel %vm1358, %v1339, %v884
      %v1371 = vsel %vm1358, %v1340, %v886
      %v1372 = vsel %vm1358, %v1341, %v888
      %v1373 = vsel %vm1358, %v1342, %v890
      %v1374 = vsel %vm1358, %v1343, %v892
      %v1375 = vsel %vm1358, %v1344, %v894
      %v1376 = vsel %vm1358, %v1345, %v896
      %v1377 = vsel %vm1358, %v1346, %v898
      %v1378 = vsel %vm1358, %v1347, %v900
      %v1379 = vsel %vm1358, %v1348, %v902
      %v1380 = vsel %vm1358, %v1349, %v904
      %v1381 = vsel %vm1358, %v1350, %v906
      %v1382 = vsel %vm1358, %v1351, %v908
      %v1383 = vsel %vm1358, %v1352, %v910
      %v1384 = vsel %vm1358, %v1353, %v912
      %v1385 = vsel %vm1358, %v1354, %v914
      %v1386 = vsel %vm1358, %v1355, %v916
      %v1387 = vsel %vm1358, %v1356, %v918
      %v1388 = vsel %vm1358, %v1357, %v920
      %vm1389 = vcmask 146432
      %v1390 = vsel %vm1389, %v1359, %v955
      %v1391 = vsel %vm1389, %v1360, %v957
      %v1392 = vsel %vm1389, %v1361, %v959
      %v1393 = vsel %vm1389, %v1362, %v961
      %v1394 = vsel %vm1389, %v1363, %v963
      %v1395 = vsel %vm1389, %v1364, %v965
      %v1396 = vsel %vm1389, %v1365, %v967
      %v1397 = vsel %vm1389, %v1366, %v969
      %v1398 = vsel %vm1389, %v1367, %v971
      %v1399 = vsel %vm1389, %v1368, %v973
      %v1400 = vsel %vm1389, %v1369, %v975
      %v1401 = vsel %vm1389, %v1370, %v977
      %v1402 = vsel %vm1389, %v1371, %v979
      %v1403 = vsel %vm1389, %v1372, %v981
      %v1404 = vsel %vm1389, %v1373, %v983
      %v1405 = vsel %vm1389, %v1374, %v985
      %v1406 = vsel %vm1389, %v1375, %v987
      %v1407 = vsel %vm1389, %v1376, %v989
      %v1408 = vsel %vm1389, %v1377, %v991
      %v1409 = vsel %vm1389, %v1378, %v993
      %v1410 = vsel %vm1389, %v1379, %v995
      %v1411 = vsel %vm1389, %v1380, %v997
      %v1412 = vsel %vm1389, %v1381, %v999
      %v1413 = vsel %vm1389, %v1382, %v1001
      %v1414 = vsel %vm1389, %v1383, %v1003
      %v1415 = vsel %vm1389, %v1384, %v1005
      %v1416 = vsel %vm1389, %v1385, %v1007
      %v1417 = vsel %vm1389, %v1386, %v1009
      %v1418 = vsel %vm1389, %v1387, %v1011
      %v1419 = vsel %vm1389, %v1388, %v1013
      %vm1420 = vcmask 171008
      %v1421 = vsel %vm1420, %v1390, %v1050
      %v1422 = vsel %vm1420, %v1391, %v1052
      %v1423 = vsel %vm1420, %v1392, %v1054
      %v1424 = vsel %vm1420, %v1393, %v1056
      %v1425 = vsel %vm1420, %v1394, %v1058
      %v1426 = vsel %vm1420, %v1395, %v1060
      %v1427 = vsel %vm1420, %v1396, %v1062
      %v1428 = vsel %vm1420, %v1397, %v1064
      %v1429 = vsel %vm1420, %v1398, %v1066
      %v1430 = vsel %vm1420, %v1399, %v1068
      %v1431 = vsel %vm1420, %v1400, %v1070
      %v1432 = vsel %vm1420, %v1401, %v1072
      %v1433 = vsel %vm1420, %v1402, %v1074
      %v1434 = vsel %vm1420, %v1403, %v1076
      %v1435 = vsel %vm1420, %v1404, %v1078
      %v1436 = vsel %vm1420, %v1405, %v1080
      %v1437 = vsel %vm1420, %v1406, %v1082
      %v1438 = vsel %vm1420, %v1407, %v1084
      %v1439 = vsel %vm1420, %v1408, %v1086
      %v1440 = vsel %vm1420, %v1409, %v1088
      %v1441 = vsel %vm1420, %v1410, %v1090
      %v1442 = vsel %vm1420, %v1411, %v1092
      %v1443 = vsel %vm1420, %v1412, %v1094
      %v1444 = vsel %vm1420, %v1413, %v1096
      %v1445 = vsel %vm1420, %v1414, %v1098
      %v1446 = vsel %vm1420, %v1415, %v1100
      %v1447 = vsel %vm1420, %v1416, %v1102
      %v1448 = vsel %vm1420, %v1417, %v1104
      %v1449 = vsel %vm1420, %v1418, %v1106
      %v1450 = vsel %vm1420, %v1419, %v1108
      %vm1451 = vcmask 195584
      %v1452 = vsel %vm1451, %v1421, %v1145
      %v1453 = vsel %vm1451, %v1422, %v1147
      %v1454 = vsel %vm1451, %v1423, %v1149
      %v1455 = vsel %vm1451, %v1424, %v1151
      %v1456 = vsel %vm1451, %v1425, %v1153
      %v1457 = vsel %vm1451, %v1426, %v1155
      %v1458 = vsel %vm1451, %v1427, %v1157
      %v1459 = vsel %vm1451, %v1428, %v1159
      %v1460 = vsel %vm1451, %v1429, %v1161
      %v1461 = vsel %vm1451, %v1430, %v1163
      %v1462 = vsel %vm1451, %v1431, %v1165
      %v1463 = vsel %vm1451, %v1432, %v1167
      %v1464 = vsel %vm1451, %v1433, %v1169
      %v1465 = vsel %vm1451, %v1434, %v1171
      %v1466 = vsel %vm1451, %v1435, %v1173
      %v1467 = vsel %vm1451, %v1436, %v1175
      %v1468 = vsel %vm1451, %v1437, %v1177
      %v1469 = vsel %vm1451, %v1438, %v1179
      %v1470 = vsel %vm1451, %v1439, %v1181
      %v1471 = vsel %vm1451, %v1440, %v1183
      %v1472 = vsel %vm1451, %v1441, %v1185
      %v1473 = vsel %vm1451, %v1442, %v1187
      %v1474 = vsel %vm1451, %v1443, %v1189
      %v1475 = vsel %vm1451, %v1444, %v1191
      %v1476 = vsel %vm1451, %v1445, %v1193
      %v1477 = vsel %vm1451, %v1446, %v1195
      %v1478 = vsel %vm1451, %v1447, %v1197
      %v1479 = vsel %vm1451, %v1448, %v1199
      %v1480 = vsel %vm1451, %v1449, %v1201
      %v1481 = vsel %vm1451, %v1450, %v1203
      %v1512 = vcombine.high %v1452, %v1452
      %v1514 = vunpack.c.l.s4 1983009808
      %v1515 = vunpack.c.0.s8 %v1514
      %v1516 = vlaneseq
      %v1517 = vshrl.u32 %v1516, 7
      %v1518 = vsub.s32 %v1515, %v1517
      %v1519 = vrot.slane %v1452, %v1518
      %v1521 = vunpack.c.l.s4 1983009808
      %v1522 = vunpack.c.0.s8 %v1521
      %v1523 = vlaneseq
      %v1524 = vshrl.u32 %v1523, 7
      %v1525 = vsub.s32 %v1522, %v1524
      %v1526 = vrot.slane %v1512, %v1525
      %v1527 = vcombine.high %v1519, %v1519
      %v1528 = vcombine.high %v1526, %v1526
      %v1529 = vcombine.high %v1453, %v1453
      %v1531 = vunpack.c.l.s4 1983009808
      %v1532 = vunpack.c.0.s8 %v1531
      %v1533 = vlaneseq
      %v1534 = vshrl.u32 %v1533, 7
      %v1535 = vsub.s32 %v1532, %v1534
      %v1536 = vrot.slane %v1453, %v1535
      %v1538 = vunpack.c.l.s4 1983009808
      %v1539 = vunpack.c.0.s8 %v1538
      %v1540 = vlaneseq
      %v1541 = vshrl.u32 %v1540, 7
      %v1542 = vsub.s32 %v1539, %v1541
      %v1543 = vrot.slane %v1529, %v1542
      %v1544 = vcombine.high %v1536, %v1536
      %v1545 = vcombine.high %v1543, %v1543
      %v1547 = vunpack.c.l.s4 1983009808
      %v1548 = vunpack.c.0.s8 %v1547
      %v1549 = vlaneseq
      %v1550 = vshrl.u32 %v1549, 7
      %v1551 = vsub.s32 %v1548, %v1550
      %v1552 = vrot.slane %v1454, %v1551
      %v1553 = vcombine.high %v1455, %v1455
      %v1555 = vunpack.c.l.s4 1983009808
      %v1556 = vunpack.c.0.s8 %v1555
      %v1557 = vlaneseq
      %v1558 = vshrl.u32 %v1557, 7
      %v1559 = vsub.s32 %v1556, %v1558
      %v1560 = vrot.slane %v1455, %v1559
      %v1562 = vunpack.c.l.s4 1983009808
      %v1563 = vunpack.c.0.s8 %v1562
      %v1564 = vlaneseq
      %v1565 = vshrl.u32 %v1564, 7
      %v1566 = vsub.s32 %v1563, %v1565
      %v1567 = vrot.slane %v1553, %v1566
      %v1568 = vcombine.high %v1560, %v1560
      %v1569 = vcombine.high %v1567, %v1567
      %v1570 = vcombine.high %v1456, %v1456
      %v1572 = vunpack.c.l.s4 1983009808
      %v1573 = vunpack.c.0.s8 %v1572
      %v1574 = vlaneseq
      %v1575 = vshrl.u32 %v1574, 7
      %v1576 = vsub.s32 %v1573, %v1575
      %v1577 = vrot.slane %v1456, %v1576
      %v1579 = vunpack.c.l.s4 1983009808
      %v1580 = vunpack.c.0.s8 %v1579
      %v1581 = vlaneseq
      %v1582 = vshrl.u32 %v1581, 7
      %v1583 = vsub.s32 %v1580, %v1582
      %v1584 = vrot.slane %v1570, %v1583
      %v1585 = vcombine.high %v1577, %v1577
      %v1586 = vcombine.high %v1584, %v1584
      %v1588 = vunpack.c.l.s4 1983009808
      %v1589 = vunpack.c.0.s8 %v1588
      %v1590 = vlaneseq
      %v1591 = vshrl.u32 %v1590, 7
      %v1592 = vsub.s32 %v1589, %v1591
      %v1593 = vrot.slane %v1457, %v1592
      %v1594 = vcombine.high %v1458, %v1458
      %v1596 = vunpack.c.l.s4 1983009808
      %v1597 = vunpack.c.0.s8 %v1596
      %v1598 = vlaneseq
      %v1599 = vshrl.u32 %v1598, 7
      %v1600 = vsub.s32 %v1597, %v1599
      %v1601 = vrot.slane %v1458, %v1600
      %v1603 = vunpack.c.l.s4 1983009808
      %v1604 = vunpack.c.0.s8 %v1603
      %v1605 = vlaneseq
      %v1606 = vshrl.u32 %v1605, 7
      %v1607 = vsub.s32 %v1604, %v1606
      %v1608 = vrot.slane %v1594, %v1607
      %v1609 = vcombine.high %v1601, %v1601
      %v1610 = vcombine.high %v1608, %v1608
      %v1611 = vcombine.high %v1459, %v1459
      %v1613 = vunpack.c.l.s4 1983009808
      %v1614 = vunpack.c.0.s8 %v1613
      %v1615 = vlaneseq
      %v1616 = vshrl.u32 %v1615, 7
      %v1617 = vsub.s32 %v1614, %v1616
      %v1618 = vrot.slane %v1459, %v1617
      %v1620 = vunpack.c.l.s4 1983009808
      %v1621 = vunpack.c.0.s8 %v1620
      %v1622 = vlaneseq
      %v1623 = vshrl.u32 %v1622, 7
      %v1624 = vsub.s32 %v1621, %v1623
      %v1625 = vrot.slane %v1611, %v1624
      %v1626 = vcombine.high %v1618, %v1618
      %v1627 = vcombine.high %v1625, %v1625
      %v1629 = vunpack.c.l.s4 1983009808
      %v1630 = vunpack.c.0.s8 %v1629
      %v1631 = vlaneseq
      %v1632 = vshrl.u32 %v1631, 7
      %v1633 = vsub.s32 %v1630, %v1632
      %v1634 = vrot.slane %v1460, %v1633
      %v1635 = vcombine.high %v1461, %v1461
      %v1637 = vunpack.c.l.s4 1983009808
      %v1638 = vunpack.c.0.s8 %v1637
      %v1639 = vlaneseq
      %v1640 = vshrl.u32 %v1639, 7
      %v1641 = vsub.s32 %v1638, %v1640
      %v1642 = vrot.slane %v1461, %v1641
      %v1644 = vunpack.c.l.s4 1983009808
      %v1645 = vunpack.c.0.s8 %v1644
      %v1646 = vlaneseq
      %v1647 = vshrl.u32 %v1646, 7
      %v1648 = vsub.s32 %v1645, %v1647
      %v1649 = vrot.slane %v1635, %v1648
      %v1650 = vcombine.high %v1642, %v1642
      %v1651 = vcombine.high %v1649, %v1649
      %v1652 = vcombine.high %v1462, %v1462
      %v1654 = vunpack.c.l.s4 1983009808
      %v1655 = vunpack.c.0.s8 %v1654
      %v1656 = vlaneseq
      %v1657 = vshrl.u32 %v1656, 7
      %v1658 = vsub.s32 %v1655, %v1657
      %v1659 = vrot.slane %v1462, %v1658
      %v1661 = vunpack.c.l.s4 1983009808
      %v1662 = vunpack.c.0.s8 %v1661
      %v1663 = vlaneseq
      %v1664 = vshrl.u32 %v1663, 7
      %v1665 = vsub.s32 %v1662, %v1664
      %v1666 = vrot.slane %v1652, %v1665
      %v1667 = vcombine.high %v1659, %v1659
      %v1668 = vcombine.high %v1666, %v1666
      %v1670 = vunpack.c.l.s4 1983009808
      %v1671 = vunpack.c.0.s8 %v1670
      %v1672 = vlaneseq
      %v1673 = vshrl.u32 %v1672, 7
      %v1674 = vsub.s32 %v1671, %v1673
      %v1675 = vrot.slane %v1463, %v1674
      %v1676 = vcombine.high %v1464, %v1464
      %v1678 = vunpack.c.l.s4 1983009808
      %v1679 = vunpack.c.0.s8 %v1678
      %v1680 = vlaneseq
      %v1681 = vshrl.u32 %v1680, 7
      %v1682 = vsub.s32 %v1679, %v1681
      %v1683 = vrot.slane %v1464, %v1682
      %v1685 = vunpack.c.l.s4 1983009808
      %v1686 = vunpack.c.0.s8 %v1685
      %v1687 = vlaneseq
      %v1688 = vshrl.u32 %v1687, 7
      %v1689 = vsub.s32 %v1686, %v1688
      %v1690 = vrot.slane %v1676, %v1689
      %v1691 = vcombine.high %v1683, %v1683
      %v1692 = vcombine.high %v1690, %v1690
      %v1693 = vcombine.high %v1465, %v1465
      %v1695 = vunpack.c.l.s4 1983009808
      %v1696 = vunpack.c.0.s8 %v1695
      %v1697 = vlaneseq
      %v1698 = vshrl.u32 %v1697, 7
      %v1699 = vsub.s32 %v1696, %v1698
      %v1700 = vrot.slane %v1465, %v1699
      %v1702 = vunpack.c.l.s4 1983009808
      %v1703 = vunpack.c.0.s8 %v1702
      %v1704 = vlaneseq
      %v1705 = vshrl.u32 %v1704, 7
      %v1706 = vsub.s32 %v1703, %v1705
      %v1707 = vrot.slane %v1693, %v1706
      %v1708 = vcombine.high %v1700, %v1700
      %v1709 = vcombine.high %v1707, %v1707
      %v1711 = vunpack.c.l.s4 1983009808
      %v1712 = vunpack.c.0.s8 %v1711
      %v1713 = vlaneseq
      %v1714 = vshrl.u32 %v1713, 7
      %v1715 = vsub.s32 %v1712, %v1714
      %v1716 = vrot.slane %v1466, %v1715
      %v1717 = vcombine.high %v1467, %v1467
      %v1719 = vunpack.c.l.s4 1983009808
      %v1720 = vunpack.c.0.s8 %v1719
      %v1721 = vlaneseq
      %v1722 = vshrl.u32 %v1721, 7
      %v1723 = vsub.s32 %v1720, %v1722
      %v1724 = vrot.slane %v1467, %v1723
      %v1726 = vunpack.c.l.s4 1983009808
      %v1727 = vunpack.c.0.s8 %v1726
      %v1728 = vlaneseq
      %v1729 = vshrl.u32 %v1728, 7
      %v1730 = vsub.s32 %v1727, %v1729
      %v1731 = vrot.slane %v1717, %v1730
      %v1732 = vcombine.high %v1724, %v1724
      %v1733 = vcombine.high %v1731, %v1731
      %v1734 = vcombine.high %v1468, %v1468
      %v1736 = vunpack.c.l.s4 1983009808
      %v1737 = vunpack.c.0.s8 %v1736
      %v1738 = vlaneseq
      %v1739 = vshrl.u32 %v1738, 7
      %v1740 = vsub.s32 %v1737, %v1739
      %v1741 = vrot.slane %v1468, %v1740
      %v1743 = vunpack.c.l.s4 1983009808
      %v1744 = vunpack.c.0.s8 %v1743
      %v1745 = vlaneseq
      %v1746 = vshrl.u32 %v1745, 7
      %v1747 = vsub.s32 %v1744, %v1746
      %v1748 = vrot.slane %v1734, %v1747
      %v1749 = vcombine.high %v1741, %v1741
      %v1750 = vcombine.high %v1748, %v1748
      %v1752 = vunpack.c.l.s4 1983009808
      %v1753 = vunpack.c.0.s8 %v1752
      %v1754 = vlaneseq
      %v1755 = vshrl.u32 %v1754, 7
      %v1756 = vsub.s32 %v1753, %v1755
      %v1757 = vrot.slane %v1469, %v1756
      %v1758 = vcombine.high %v1470, %v1470
      %v1760 = vunpack.c.l.s4 1983009808
      %v1761 = vunpack.c.0.s8 %v1760
      %v1762 = vlaneseq
      %v1763 = vshrl.u32 %v1762, 7
      %v1764 = vsub.s32 %v1761, %v1763
      %v1765 = vrot.slane %v1470, %v1764
      %v1767 = vunpack.c.l.s4 1983009808
      %v1768 = vunpack.c.0.s8 %v1767
      %v1769 = vlaneseq
      %v1770 = vshrl.u32 %v1769, 7
      %v1771 = vsub.s32 %v1768, %v1770
      %v1772 = vrot.slane %v1758, %v1771
      %v1773 = vcombine.high %v1765, %v1765
      %v1774 = vcombine.high %v1772, %v1772
      %v1775 = vcombine.high %v1471, %v1471
      %v1777 = vunpack.c.l.s4 1983009808
      %v1778 = vunpack.c.0.s8 %v1777
      %v1779 = vlaneseq
      %v1780 = vshrl.u32 %v1779, 7
      %v1781 = vsub.s32 %v1778, %v1780
      %v1782 = vrot.slane %v1471, %v1781
      %v1784 = vunpack.c.l.s4 1983009808
      %v1785 = vunpack.c.0.s8 %v1784
      %v1786 = vlaneseq
      %v1787 = vshrl.u32 %v1786, 7
      %v1788 = vsub.s32 %v1785, %v1787
      %v1789 = vrot.slane %v1775, %v1788
      %v1790 = vcombine.high %v1782, %v1782
      %v1791 = vcombine.high %v1789, %v1789
      %v1793 = vunpack.c.l.s4 1983009808
      %v1794 = vunpack.c.0.s8 %v1793
      %v1795 = vlaneseq
      %v1796 = vshrl.u32 %v1795, 7
      %v1797 = vsub.s32 %v1794, %v1796
      %v1798 = vrot.slane %v1472, %v1797
      %v1799 = vcombine.high %v1473, %v1473
      %v1801 = vunpack.c.l.s4 1983009808
      %v1802 = vunpack.c.0.s8 %v1801
      %v1803 = vlaneseq
      %v1804 = vshrl.u32 %v1803, 7
      %v1805 = vsub.s32 %v1802, %v1804
      %v1806 = vrot.slane %v1473, %v1805
      %v1808 = vunpack.c.l.s4 1983009808
      %v1809 = vunpack.c.0.s8 %v1808
      %v1810 = vlaneseq
      %v1811 = vshrl.u32 %v1810, 7
      %v1812 = vsub.s32 %v1809, %v1811
      %v1813 = vrot.slane %v1799, %v1812
      %v1814 = vcombine.high %v1806, %v1806
      %v1815 = vcombine.high %v1813, %v1813
      %v1816 = vcombine.high %v1474, %v1474
      %v1818 = vunpack.c.l.s4 1983009808
      %v1819 = vunpack.c.0.s8 %v1818
      %v1820 = vlaneseq
      %v1821 = vshrl.u32 %v1820, 7
      %v1822 = vsub.s32 %v1819, %v1821
      %v1823 = vrot.slane %v1474, %v1822
      %v1825 = vunpack.c.l.s4 1983009808
      %v1826 = vunpack.c.0.s8 %v1825
      %v1827 = vlaneseq
      %v1828 = vshrl.u32 %v1827, 7
      %v1829 = vsub.s32 %v1826, %v1828
      %v1830 = vrot.slane %v1816, %v1829
      %v1831 = vcombine.high %v1823, %v1823
      %v1832 = vcombine.high %v1830, %v1830
      %v1834 = vunpack.c.l.s4 1983009808
      %v1835 = vunpack.c.0.s8 %v1834
      %v1836 = vlaneseq
      %v1837 = vshrl.u32 %v1836, 7
      %v1838 = vsub.s32 %v1835, %v1837
      %v1839 = vrot.slane %v1475, %v1838
      %v1840 = vcombine.high %v1476, %v1476
      %v1842 = vunpack.c.l.s4 1983009808
      %v1843 = vunpack.c.0.s8 %v1842
      %v1844 = vlaneseq
      %v1845 = vshrl.u32 %v1844, 7
      %v1846 = vsub.s32 %v1843, %v1845
      %v1847 = vrot.slane %v1476, %v1846
      %v1849 = vunpack.c.l.s4 1983009808
      %v1850 = vunpack.c.0.s8 %v1849
      %v1851 = vlaneseq
      %v1852 = vshrl.u32 %v1851, 7
      %v1853 = vsub.s32 %v1850, %v1852
      %v1854 = vrot.slane %v1840, %v1853
      %v1855 = vcombine.high %v1847, %v1847
      %v1856 = vcombine.high %v1854, %v1854
      %v1857 = vcombine.high %v1477, %v1477
      %v1859 = vunpack.c.l.s4 1983009808
      %v1860 = vunpack.c.0.s8 %v1859
      %v1861 = vlaneseq
      %v1862 = vshrl.u32 %v1861, 7
      %v1863 = vsub.s32 %v1860, %v1862
      %v1864 = vrot.slane %v1477, %v1863
      %v1866 = vunpack.c.l.s4 1983009808
      %v1867 = vunpack.c.0.s8 %v1866
      %v1868 = vlaneseq
      %v1869 = vshrl.u32 %v1868, 7
      %v1870 = vsub.s32 %v1867, %v1869
      %v1871 = vrot.slane %v1857, %v1870
      %v1872 = vcombine.high %v1864, %v1864
      %v1873 = vcombine.high %v1871, %v1871
      %v1875 = vunpack.c.l.s4 1983009808
      %v1876 = vunpack.c.0.s8 %v1875
      %v1877 = vlaneseq
      %v1878 = vshrl.u32 %v1877, 7
      %v1879 = vsub.s32 %v1876, %v1878
      %v1880 = vrot.slane %v1478, %v1879
      %v1881 = vcombine.high %v1479, %v1479
      %v1883 = vunpack.c.l.s4 1983009808
      %v1884 = vunpack.c.0.s8 %v1883
      %v1885 = vlaneseq
      %v1886 = vshrl.u32 %v1885, 7
      %v1887 = vsub.s32 %v1884, %v1886
      %v1888 = vrot.slane %v1479, %v1887
      %v1890 = vunpack.c.l.s4 1983009808
      %v1891 = vunpack.c.0.s8 %v1890
      %v1892 = vlaneseq
      %v1893 = vshrl.u32 %v1892, 7
      %v1894 = vsub.s32 %v1891, %v1893
      %v1895 = vrot.slane %v1881, %v1894
      %v1896 = vcombine.high %v1888, %v1888
      %v1897 = vcombine.high %v1895, %v1895
      %v1898 = vcombine.high %v1480, %v1480
      %v1900 = vunpack.c.l.s4 1983009808
      %v1901 = vunpack.c.0.s8 %v1900
      %v1902 = vlaneseq
      %v1903 = vshrl.u32 %v1902, 7
      %v1904 = vsub.s32 %v1901, %v1903
      %v1905 = vrot.slane %v1480, %v1904
      %v1907 = vunpack.c.l.s4 1983009808
      %v1908 = vunpack.c.0.s8 %v1907
      %v1909 = vlaneseq
      %v1910 = vshrl.u32 %v1909, 7
      %v1911 = vsub.s32 %v1908, %v1910
      %v1912 = vrot.slane %v1898, %v1911
      %v1913 = vcombine.high %v1905, %v1905
      %v1914 = vcombine.high %v1912, %v1912
      %v1916 = vunpack.c.l.s4 1983009808
      %v1917 = vunpack.c.0.s8 %v1916
      %v1918 = vlaneseq
      %v1919 = vshrl.u32 %v1918, 7
      %v1920 = vsub.s32 %v1917, %v1919
      %v1921 = vrot.slane %v1481, %v1920
      %v1922 = vld [vmem:[%s1] sm:$0xff]
      %v1923 = vld [vmem:[%s1 + $0x8] sm:$0xff]
      %v1924 = vld [vmem:[%s1 + $0x10] sm:$0xff]
      %v1925 = vld [vmem:[%s1 + $0x18] sm:$0x7]
      %v1926 = vld [vmem:[%s2] sm:$0x1]
      %v1928 = vlaneseq
      %v1929 = vshrl.u32 %v1928, 7
      %v1930 = vsub.s32 0, %v1929
      %v1931 = vrot.slane %v1926, %v1930
      %v1933 = vcombine.low %v1519, %v1527
      %v1934 = vcombine.low %v1526, %v1528
      %v1936 = vunpack.c.l.s4 1983009808
      %v1937 = vunpack.c.0.s8 %v1936
      %v1938 = vlaneseq
      %v1939 = vshrl.u32 %v1938, 7
      %v1940 = vsub.s32 %v1937, %v1939
      %v1941 = vrot.slane %v1933, %v1940
      %v1943 = vunpack.c.l.s4 1983009808
      %v1944 = vunpack.c.0.s8 %v1943
      %v1945 = vlaneseq
      %v1946 = vshrl.u32 %v1945, 7
      %v1947 = vsub.s32 %v1944, %v1946
      %v1948 = vrot.slane %v1934, %v1947
      %v1949 = vcombine.low %v1941, %v1948
      %v1950 = vcombine.low %v1536, %v1544
      %v1951 = vcombine.low %v1543, %v1545
      %v1953 = vunpack.c.l.s4 1983009808
      %v1954 = vunpack.c.0.s8 %v1953
      %v1955 = vlaneseq
      %v1956 = vshrl.u32 %v1955, 7
      %v1957 = vsub.s32 %v1954, %v1956
      %v1958 = vrot.slane %v1950, %v1957
      %v1960 = vunpack.c.l.s4 1983009808
      %v1961 = vunpack.c.0.s8 %v1960
      %v1962 = vlaneseq
      %v1963 = vshrl.u32 %v1962, 7
      %v1964 = vsub.s32 %v1961, %v1963
      %v1965 = vrot.slane %v1951, %v1964
      %v1966 = vcombine.low %v1958, %v1965
      %v1967 = vcombine.low %v1552, %v1560
      %v1968 = vcombine.low %v1568, %v1567
      %v1970 = vunpack.c.l.s4 1983009808
      %v1971 = vunpack.c.0.s8 %v1970
      %v1972 = vlaneseq
      %v1973 = vshrl.u32 %v1972, 7
      %v1974 = vsub.s32 %v1971, %v1973
      %v1975 = vrot.slane %v1967, %v1974
      %v1977 = vunpack.c.l.s4 1983009808
      %v1978 = vunpack.c.0.s8 %v1977
      %v1979 = vlaneseq
      %v1980 = vshrl.u32 %v1979, 7
      %v1981 = vsub.s32 %v1978, %v1980
      %v1982 = vrot.slane %v1968, %v1981
      %v1983 = vcombine.low %v1975, %v1982
      %v1984 = vcombine.low %v1569, %v1577
      %v1985 = vcombine.low %v1585, %v1584
      %v1987 = vunpack.c.l.s4 1983009808
      %v1988 = vunpack.c.0.s8 %v1987
      %v1989 = vlaneseq
      %v1990 = vshrl.u32 %v1989, 7
      %v1991 = vsub.s32 %v1988, %v1990
      %v1992 = vrot.slane %v1984, %v1991
      %v1994 = vunpack.c.l.s4 1983009808
      %v1995 = vunpack.c.0.s8 %v1994
      %v1996 = vlaneseq
      %v1997 = vshrl.u32 %v1996, 7
      %v1998 = vsub.s32 %v1995, %v1997
      %v1999 = vrot.slane %v1985, %v1998
      %v2000 = vcombine.low %v1992, %v1999
      %v2001 = vcombine.low %v1586, %v1593
      %v2002 = vcombine.low %v1601, %v1609
      %v2004 = vunpack.c.l.s4 1983009808
      %v2005 = vunpack.c.0.s8 %v2004
      %v2006 = vlaneseq
      %v2007 = vshrl.u32 %v2006, 7
      %v2008 = vsub.s32 %v2005, %v2007
      %v2009 = vrot.slane %v2001, %v2008
      %v2011 = vunpack.c.l.s4 1983009808
      %v2012 = vunpack.c.0.s8 %v2011
      %v2013 = vlaneseq
      %v2014 = vshrl.u32 %v2013, 7
      %v2015 = vsub.s32 %v2012, %v2014
      %v2016 = vrot.slane %v2002, %v2015
      %v2017 = vcombine.low %v2009, %v2016
      %v2018 = vcombine.low %v1608, %v1610
      %v2019 = vcombine.low %v1618, %v1626
      %v2021 = vunpack.c.l.s4 1983009808
      %v2022 = vunpack.c.0.s8 %v2021
      %v2023 = vlaneseq
      %v2024 = vshrl.u32 %v2023, 7
      %v2025 = vsub.s32 %v2022, %v2024
      %v2026 = vrot.slane %v2018, %v2025
      %v2028 = vunpack.c.l.s4 1983009808
      %v2029 = vunpack.c.0.s8 %v2028
      %v2030 = vlaneseq
      %v2031 = vshrl.u32 %v2030, 7
      %v2032 = vsub.s32 %v2029, %v2031
      %v2033 = vrot.slane %v2019, %v2032
      %v2034 = vcombine.low %v2026, %v2033
      %v2035 = vcombine.low %v1625, %v1627
      %v2036 = vcombine.low %v1634, %v1642
      %v2038 = vunpack.c.l.s4 1983009808
      %v2039 = vunpack.c.0.s8 %v2038
      %v2040 = vlaneseq
      %v2041 = vshrl.u32 %v2040, 7
      %v2042 = vsub.s32 %v2039, %v2041
      %v2043 = vrot.slane %v2035, %v2042
      %v2045 = vunpack.c.l.s4 1983009808
      %v2046 = vunpack.c.0.s8 %v2045
      %v2047 = vlaneseq
      %v2048 = vshrl.u32 %v2047, 7
      %v2049 = vsub.s32 %v2046, %v2048
      %v2050 = vrot.slane %v2036, %v2049
      %v2051 = vcombine.low %v2043, %v2050
      %v2052 = vcombine.low %v1650, %v1649
      %v2053 = vcombine.low %v1651, %v1659
      %v2055 = vunpack.c.l.s4 1983009808
      %v2056 = vunpack.c.0.s8 %v2055
      %v2057 = vlaneseq
      %v2058 = vshrl.u32 %v2057, 7
      %v2059 = vsub.s32 %v2056, %v2058
      %v2060 = vrot.slane %v2052, %v2059
      %v2062 = vunpack.c.l.s4 1983009808
      %v2063 = vunpack.c.0.s8 %v2062
      %v2064 = vlaneseq
      %v2065 = vshrl.u32 %v2064, 7
      %v2066 = vsub.s32 %v2063, %v2065
      %v2067 = vrot.slane %v2053, %v2066
      %v2068 = vcombine.low %v2060, %v2067
      %v2069 = vcombine.low %v1667, %v1666
      %v2070 = vcombine.low %v1668, %v1675
      %v2072 = vunpack.c.l.s4 1983009808
      %v2073 = vunpack.c.0.s8 %v2072
      %v2074 = vlaneseq
      %v2075 = vshrl.u32 %v2074, 7
      %v2076 = vsub.s32 %v2073, %v2075
      %v2077 = vrot.slane %v2069, %v2076
      %v2079 = vunpack.c.l.s4 1983009808
      %v2080 = vunpack.c.0.s8 %v2079
      %v2081 = vlaneseq
      %v2082 = vshrl.u32 %v2081, 7
      %v2083 = vsub.s32 %v2080, %v2082
      %v2084 = vrot.slane %v2070, %v2083
      %v2085 = vcombine.low %v2077, %v2084
      %v2086 = vcombine.low %v1683, %v1691
      %v2087 = vcombine.low %v1690, %v1692
      %v2089 = vunpack.c.l.s4 1983009808
      %v2090 = vunpack.c.0.s8 %v2089
      %v2091 = vlaneseq
      %v2092 = vshrl.u32 %v2091, 7
      %v2093 = vsub.s32 %v2090, %v2092
      %v2094 = vrot.slane %v2086, %v2093
      %v2096 = vunpack.c.l.s4 1983009808
      %v2097 = vunpack.c.0.s8 %v2096
      %v2098 = vlaneseq
      %v2099 = vshrl.u32 %v2098, 7
      %v2100 = vsub.s32 %v2097, %v2099
      %v2101 = vrot.slane %v2087, %v2100
      %v2102 = vcombine.low %v2094, %v2101
      %v2103 = vcombine.low %v1700, %v1708
      %v2104 = vcombine.low %v1707, %v1709
      %v2106 = vunpack.c.l.s4 1983009808
      %v2107 = vunpack.c.0.s8 %v2106
      %v2108 = vlaneseq
      %v2109 = vshrl.u32 %v2108, 7
      %v2110 = vsub.s32 %v2107, %v2109
      %v2111 = vrot.slane %v2103, %v2110
      %v2113 = vunpack.c.l.s4 1983009808
      %v2114 = vunpack.c.0.s8 %v2113
      %v2115 = vlaneseq
      %v2116 = vshrl.u32 %v2115, 7
      %v2117 = vsub.s32 %v2114, %v2116
      %v2118 = vrot.slane %v2104, %v2117
      %v2119 = vcombine.low %v2111, %v2118
      %v2120 = vcombine.low %v1716, %v1724
      %v2121 = vcombine.low %v1732, %v1731
      %v2123 = vunpack.c.l.s4 1983009808
      %v2124 = vunpack.c.0.s8 %v2123
      %v2125 = vlaneseq
      %v2126 = vshrl.u32 %v2125, 7
      %v2127 = vsub.s32 %v2124, %v2126
      %v2128 = vrot.slane %v2120, %v2127
      %v2130 = vunpack.c.l.s4 1983009808
      %v2131 = vunpack.c.0.s8 %v2130
      %v2132 = vlaneseq
      %v2133 = vshrl.u32 %v2132, 7
      %v2134 = vsub.s32 %v2131, %v2133
      %v2135 = vrot.slane %v2121, %v2134
      %v2136 = vcombine.low %v2128, %v2135
      %v2137 = vcombine.low %v1733, %v1741
      %v2138 = vcombine.low %v1749, %v1748
      %v2140 = vunpack.c.l.s4 1983009808
      %v2141 = vunpack.c.0.s8 %v2140
      %v2142 = vlaneseq
      %v2143 = vshrl.u32 %v2142, 7
      %v2144 = vsub.s32 %v2141, %v2143
      %v2145 = vrot.slane %v2137, %v2144
      %v2147 = vunpack.c.l.s4 1983009808
      %v2148 = vunpack.c.0.s8 %v2147
      %v2149 = vlaneseq
      %v2150 = vshrl.u32 %v2149, 7
      %v2151 = vsub.s32 %v2148, %v2150
      %v2152 = vrot.slane %v2138, %v2151
      %v2153 = vcombine.low %v2145, %v2152
      %v2154 = vcombine.low %v1750, %v1757
      %v2155 = vcombine.low %v1765, %v1773
      %v2157 = vunpack.c.l.s4 1983009808
      %v2158 = vunpack.c.0.s8 %v2157
      %v2159 = vlaneseq
      %v2160 = vshrl.u32 %v2159, 7
      %v2161 = vsub.s32 %v2158, %v2160
      %v2162 = vrot.slane %v2154, %v2161
      %v2164 = vunpack.c.l.s4 1983009808
      %v2165 = vunpack.c.0.s8 %v2164
      %v2166 = vlaneseq
      %v2167 = vshrl.u32 %v2166, 7
      %v2168 = vsub.s32 %v2165, %v2167
      %v2169 = vrot.slane %v2155, %v2168
      %v2170 = vcombine.low %v2162, %v2169
      %v2171 = vcombine.low %v1772, %v1774
      %v2172 = vcombine.low %v1782, %v1790
      %v2174 = vunpack.c.l.s4 1983009808
      %v2175 = vunpack.c.0.s8 %v2174
      %v2176 = vlaneseq
      %v2177 = vshrl.u32 %v2176, 7
      %v2178 = vsub.s32 %v2175, %v2177
      %v2179 = vrot.slane %v2171, %v2178
      %v2181 = vunpack.c.l.s4 1983009808
      %v2182 = vunpack.c.0.s8 %v2181
      %v2183 = vlaneseq
      %v2184 = vshrl.u32 %v2183, 7
      %v2185 = vsub.s32 %v2182, %v2184
      %v2186 = vrot.slane %v2172, %v2185
      %v2187 = vcombine.low %v2179, %v2186
      %v2188 = vcombine.low %v1789, %v1791
      %v2189 = vcombine.low %v1798, %v1806
      %v2191 = vunpack.c.l.s4 1983009808
      %v2192 = vunpack.c.0.s8 %v2191
      %v2193 = vlaneseq
      %v2194 = vshrl.u32 %v2193, 7
      %v2195 = vsub.s32 %v2192, %v2194
      %v2196 = vrot.slane %v2188, %v2195
      %v2198 = vunpack.c.l.s4 1983009808
      %v2199 = vunpack.c.0.s8 %v2198
      %v2200 = vlaneseq
      %v2201 = vshrl.u32 %v2200, 7
      %v2202 = vsub.s32 %v2199, %v2201
      %v2203 = vrot.slane %v2189, %v2202
      %v2204 = vcombine.low %v2196, %v2203
      %v2205 = vcombine.low %v1814, %v1813
      %v2206 = vcombine.low %v1815, %v1823
      %v2208 = vunpack.c.l.s4 1983009808
      %v2209 = vunpack.c.0.s8 %v2208
      %v2210 = vlaneseq
      %v2211 = vshrl.u32 %v2210, 7
      %v2212 = vsub.s32 %v2209, %v2211
      %v2213 = vrot.slane %v2205, %v2212
      %v2215 = vunpack.c.l.s4 1983009808
      %v2216 = vunpack.c.0.s8 %v2215
      %v2217 = vlaneseq
      %v2218 = vshrl.u32 %v2217, 7
      %v2219 = vsub.s32 %v2216, %v2218
      %v2220 = vrot.slane %v2206, %v2219
      %v2221 = vcombine.low %v2213, %v2220
      %v2222 = vcombine.low %v1831, %v1830
      %v2223 = vcombine.low %v1832, %v1839
      %v2225 = vunpack.c.l.s4 1983009808
      %v2226 = vunpack.c.0.s8 %v2225
      %v2227 = vlaneseq
      %v2228 = vshrl.u32 %v2227, 7
      %v2229 = vsub.s32 %v2226, %v2228
      %v2230 = vrot.slane %v2222, %v2229
      %v2232 = vunpack.c.l.s4 1983009808
      %v2233 = vunpack.c.0.s8 %v2232
      %v2234 = vlaneseq
      %v2235 = vshrl.u32 %v2234, 7
      %v2236 = vsub.s32 %v2233, %v2235
      %v2237 = vrot.slane %v2223, %v2236
      %v2238 = vcombine.low %v2230, %v2237
      %v2239 = vcombine.low %v1847, %v1855
      %v2240 = vcombine.low %v1854, %v1856
      %v2242 = vunpack.c.l.s4 1983009808
      %v2243 = vunpack.c.0.s8 %v2242
      %v2244 = vlaneseq
      %v2245 = vshrl.u32 %v2244, 7
      %v2246 = vsub.s32 %v2243, %v2245
      %v2247 = vrot.slane %v2239, %v2246
      %v2249 = vunpack.c.l.s4 1983009808
      %v2250 = vunpack.c.0.s8 %v2249
      %v2251 = vlaneseq
      %v2252 = vshrl.u32 %v2251, 7
      %v2253 = vsub.s32 %v2250, %v2252
      %v2254 = vrot.slane %v2240, %v2253
      %v2255 = vcombine.low %v2247, %v2254
      %v2256 = vcombine.low %v1864, %v1872
      %v2257 = vcombine.low %v1871, %v1873
      %v2259 = vunpack.c.l.s4 1983009808
      %v2260 = vunpack.c.0.s8 %v2259
      %v2261 = vlaneseq
      %v2262 = vshrl.u32 %v2261, 7
      %v2263 = vsub.s32 %v2260, %v2262
      %v2264 = vrot.slane %v2256, %v2263
      %v2266 = vunpack.c.l.s4 1983009808
      %v2267 = vunpack.c.0.s8 %v2266
      %v2268 = vlaneseq
      %v2269 = vshrl.u32 %v2268, 7
      %v2270 = vsub.s32 %v2267, %v2269
      %v2271 = vrot.slane %v2257, %v2270
      %v2272 = vcombine.low %v2264, %v2271
      %v2273 = vcombine.low %v1880, %v1888
      %v2274 = vcombine.low %v1896, %v1895
      %v2276 = vunpack.c.l.s4 1983009808
      %v2277 = vunpack.c.0.s8 %v2276
      %v2278 = vlaneseq
      %v2279 = vshrl.u32 %v2278, 7
      %v2280 = vsub.s32 %v2277, %v2279
      %v2281 = vrot.slane %v2273, %v2280
      %v2283 = vunpack.c.l.s4 1983009808
      %v2284 = vunpack.c.0.s8 %v2283
      %v2285 = vlaneseq
      %v2286 = vshrl.u32 %v2285, 7
      %v2287 = vsub.s32 %v2284, %v2286
      %v2288 = vrot.slane %v2274, %v2287
      %v2289 = vcombine.low %v2281, %v2288
      %v2290 = vcombine.low %v1897, %v1905
      %v2291 = vcombine.low %v1913, %v1912
      %v2293 = vunpack.c.l.s4 1983009808
      %v2294 = vunpack.c.0.s8 %v2293
      %v2295 = vlaneseq
      %v2296 = vshrl.u32 %v2295, 7
      %v2297 = vsub.s32 %v2294, %v2296
      %v2298 = vrot.slane %v2290, %v2297
      %v2300 = vunpack.c.l.s4 1983009808
      %v2301 = vunpack.c.0.s8 %v2300
      %v2302 = vlaneseq
      %v2303 = vshrl.u32 %v2302, 7
      %v2304 = vsub.s32 %v2301, %v2303
      %v2305 = vrot.slane %v2291, %v2304
      %v2306 = vcombine.low %v2298, %v2305
      %v2307 = vcombine.low %v1914, %v1921
      %v2309 = vunpack.c.l.s4 1983009808
      %v2310 = vunpack.c.0.s8 %v2309
      %v2311 = vlaneseq
      %v2312 = vshrl.u32 %v2311, 7
      %v2313 = vsub.s32 %v2310, %v2312
      %v2314 = vrot.slane %v2307, %v2313
      %vm2315 = vcmask 220160
      %v2316 = vsel %vm2315, %v1949, 0
      %v2318 = vsel %vm2315, %v1966, 0
      %v2320 = vsel %vm2315, %v1983, 0
      %v2322 = vsel %vm2315, %v2000, 0
      %v2324 = vsel %vm2315, %v2017, 0
      %v2326 = vsel %vm2315, %v2034, 0
      %v2328 = vsel %vm2315, %v2051, 0
      %v2330 = vsel %vm2315, %v2068, 0
      %v2332 = vsel %vm2315, %v2085, 0
      %v2334 = vsel %vm2315, %v2102, 0
      %v2336 = vsel %vm2315, %v2119, 0
      %v2338 = vsel %vm2315, %v2136, 0
      %v2340 = vsel %vm2315, %v2153, 0
      %v2342 = vsel %vm2315, %v2170, 0
      %v2344 = vsel %vm2315, %v2187, 0
      %v2346 = vsel %vm2315, %v2204, 0
      %v2348 = vsel %vm2315, %v2221, 0
      %v2350 = vsel %vm2315, %v2238, 0
      %v2352 = vsel %vm2315, %v2255, 0
      %v2354 = vsel %vm2315, %v2272, 0
      %v2356 = vsel %vm2315, %v2289, 0
      %v2358 = vsel %vm2315, %v2306, 0
      %v2360 = vsel %vm2315, %v2314, 0
      %vm2362 = vcmask 1042432
      %v2364 = vsel %vm2362, %v1925, 0
      %2366 = vmatprep.subr.mxu0 0.0
      %2367 = vmatpush1.msra.mxu0 %v1922
      %2368 = vmatprep.subr.mxu0 0.0
      %2369 = vmatpush1.msra.mxu0 %v1923
      %2370 = vmatprep.subr.mxu0 0.0
      %2371 = vmatpush1.msra.mxu0 %v1924
      %2372 = vmatprep.subr.mxu0 0.0
      %2373 = vmatpush1.msra.mxu0 %v2364
      %2374 = vmatprep.subr.mxu0 0.0
      %2375 = vmatpush1.msra.mxu0 0.0
      %2376 = vmatprep.subr.mxu0 0.0
      %2377 = vmatpush1.msra.mxu0 0.0
      %2378 = vmatprep.subr.mxu0 0.0
      %2379 = vmatpush1.msra.mxu0 0.0
      %2380 = vmatprep.subr.mxu0 0.0
      %2381 = vmatpush1.msra.mxu0 0.0
      %2382 = vmatprep.subr.mxu0 0.0
      %2383 = vmatpush1.msra.mxu0 0.0
      %2384 = vmatprep.subr.mxu0 0.0
      %2385 = vmatpush1.msra.mxu0 0.0
      %2386 = vmatprep.subr.mxu0 0.0
      %2387 = vmatpush1.msra.mxu0 0.0
      %2388 = vmatprep.subr.mxu0 0.0
      %2389 = vmatpush1.msra.mxu0 0.0
      %2390 = vmatprep.subr.mxu0 0.0
      %2391 = vmatpush1.msra.mxu0 0.0
      %2392 = vmatprep.subr.mxu0 0.0
      %2393 = vmatpush1.msra.mxu0 0.0
      %2394 = vmatprep.subr.mxu0 0.0
      %2395 = vmatpush1.msra.mxu0 0.0
      %2396 = vmatprep.subr.mxu0 0.0
      %2397 = vmatpush1.msra.mxu0 0.0
      %2398 = vmatprep.subr.mxu0 0.0
      %2399 = vmatpush1.msra.mxu0 0.0
      %2400 = vmatprep.subr.mxu0 0.0
      %2401 = vmatpush1.msra.mxu0 0.0
      %2402 = vmatprep.subr.mxu0 0.0
      %2403 = vmatpush1.msra.mxu0 0.0
      %2404 = vmatprep.subr.mxu0 0.0
      %2405 = vmatpush1.msra.mxu0 0.0
      %2406 = vmatprep.subr.mxu0 0.0
      %2407 = vmatpush1.msra.mxu0 0.0
      %2408 = vmatprep.subr.mxu0 0.0
      %2409 = vmatpush1.msra.mxu0 0.0
      %2410 = vmatprep.subr.mxu0 0.0
      %2411 = vmatpush1.msra.mxu0 0.0
      %2412 = vmatprep.subr.mxu0 0.0
      %2413 = vmatpush1.msra.mxu0 0.0
      %2414 = vmatprep.subr.mxu0 0.0
      %2415 = vmatpush1.msra.mxu0 0.0
      %2416 = vmatprep.subr.mxu0 0.0
      %2417 = vmatpush1.msra.mxu0 0.0
      %2418 = vmatprep.subr.mxu0 0.0
      %2419 = vmatpush1.msra.mxu0 0.0
      %2420 = vmatprep.subr.mxu0 0.0
      %2421 = vmatpush1.msra.mxu0 0.0
      %2422 = vmatprep.subr.mxu0 0.0
      %2423 = vmatpush1.msra.mxu0 0.0
      %2424 = vmatprep.subr.mxu0 0.0
      %2425 = vmatpush1.msra.mxu0 0.0
      %2426 = vmatprep.subr.mxu0 0.0
      %2427 = vmatpush1.msra.mxu0 0.0
      %2428 = vmatprep.subr.mxu0 0.0
      %2429 = vmatpush1.msra.mxu0 0.0
      %2430 = vmatprep.mubr.f32.mxu0 0.0
      %2431 = vmatmul.mubr.f32.gmra.mrb[0].mxu0 %v2316
      %v2432 = vpop.f32.mrb[0].mxu0
      %v2433 = vadd.f32 %v1931, %v2432
      %v2434 = vpop.f32.mrb[0].mxu0
      %2435 = vmatprep.mubr.f32.mxu0 0.0
      %2436 = vmatmul.mubr.f32.gmra.mrb[0].mxu0 %v2318
      %v2437 = vpop.f32.mrb[0].mxu0
      %v2438 = vadd.f32 %v1931, %v2437
      %v2439 = vpop.f32.mrb[0].mxu0
      %2440 = vmatprep.mubr.f32.mxu0 0.0
      %2441 = vmatmul.mubr.f32.gmra.mrb[0].mxu0 %v2320
      %v2442 = vpop.f32.mrb[0].mxu0
      %v2443 = vadd.f32 %v1931, %v2442
      %v2444 = vpop.f32.mrb[0].mxu0
      %2445 = vmatprep.mubr.f32.mxu0 0.0
      %2446 = vmatmul.mubr.f32.gmra.mrb[0].mxu0 %v2322
      %v2447 = vpop.f32.mrb[0].mxu0
      %v2448 = vadd.f32 %v1931, %v2447
      %v2449 = vpop.f32.mrb[0].mxu0
      %2450 = vmatprep.mubr.f32.mxu0 0.0
      %2451 = vmatmul.mubr.f32.gmra.mrb[0].mxu0 %v2324
      %v2452 = vpop.f32.mrb[0].mxu0
      %v2453 = vadd.f32 %v1931, %v2452
      %v2454 = vpop.f32.mrb[0].mxu0
      %2455 = vmatprep.mubr.f32.mxu0 0.0
      %2456 = vmatmul.mubr.f32.gmra.mrb[0].mxu0 %v2326
      %v2457 = vpop.f32.mrb[0].mxu0
      %v2458 = vadd.f32 %v1931, %v2457
      %v2459 = vpop.f32.mrb[0].mxu0
      %2460 = vmatprep.mubr.f32.mxu0 0.0
      %2461 = vmatmul.mubr.f32.gmra.mrb[0].mxu0 %v2328
      %v2462 = vpop.f32.mrb[0].mxu0
      %v2463 = vadd.f32 %v1931, %v2462
      %v2464 = vpop.f32.mrb[0].mxu0
      %2465 = vmatprep.mubr.f32.mxu0 0.0
      %2466 = vmatmul.mubr.f32.gmra.mrb[0].mxu0 %v2330
      %v2467 = vpop.f32.mrb[0].mxu0
      %v2468 = vadd.f32 %v1931, %v2467
      %v2469 = vpop.f32.mrb[0].mxu0
      %2470 = vmatprep.mubr.f32.mxu0 0.0
      %2471 = vmatmul.mubr.f32.gmra.mrb[0].mxu0 %v2332
      %v2472 = vpop.f32.mrb[0].mxu0
      %v2473 = vadd.f32 %v1931, %v2472
      %v2474 = vpop.f32.mrb[0].mxu0
      %2475 = vmatprep.mubr.f32.mxu0 0.0
      %2476 = vmatmul.mubr.f32.gmra.mrb[0].mxu0 %v2334
      %v2477 = vpop.f32.mrb[0].mxu0
      %v2478 = vadd.f32 %v1931, %v2477
      %v2479 = vpop.f32.mrb[0].mxu0
      %2480 = vmatprep.mubr.f32.mxu0 0.0
      %2481 = vmatmul.mubr.f32.gmra.mrb[0].mxu0 %v2336
      %v2482 = vpop.f32.mrb[0].mxu0
      %v2483 = vadd.f32 %v1931, %v2482
      %v2484 = vpop.f32.mrb[0].mxu0
      %2485 = vmatprep.mubr.f32.mxu0 0.0
      %2486 = vmatmul.mubr.f32.gmra.mrb[0].mxu0 %v2338
      %v2487 = vpop.f32.mrb[0].mxu0
      %v2488 = vadd.f32 %v1931, %v2487
      %v2489 = vpop.f32.mrb[0].mxu0
      %2490 = vmatprep.mubr.f32.mxu0 0.0
      %2491 = vmatmul.mubr.f32.gmra.mrb[0].mxu0 %v2340
      %v2492 = vpop.f32.mrb[0].mxu0
      %v2493 = vadd.f32 %v1931, %v2492
      %v2494 = vpop.f32.mrb[0].mxu0
      %2495 = vmatprep.mubr.f32.mxu0 0.0
      %2496 = vmatmul.mubr.f32.gmra.mrb[0].mxu0 %v2342
      %v2497 = vpop.f32.mrb[0].mxu0
      %v2498 = vadd.f32 %v1931, %v2497
      %v2499 = vpop.f32.mrb[0].mxu0
      %2500 = vmatprep.mubr.f32.mxu0 0.0
      %2501 = vmatmul.mubr.f32.gmra.mrb[0].mxu0 %v2344
      %v2502 = vpop.f32.mrb[0].mxu0
      %v2503 = vadd.f32 %v1931, %v2502
      %v2504 = vpop.f32.mrb[0].mxu0
      %2505 = vmatprep.mubr.f32.mxu0 0.0
      %2506 = vmatmul.mubr.f32.gmra.mrb[0].mxu0 %v2346
      %v2507 = vpop.f32.mrb[0].mxu0
      %v2508 = vadd.f32 %v1931, %v2507
      %v2509 = vpop.f32.mrb[0].mxu0
      %2510 = vmatprep.mubr.f32.mxu0 0.0
      %2511 = vmatmul.mubr.f32.gmra.mrb[0].mxu0 %v2348
      %v2512 = vpop.f32.mrb[0].mxu0
      %v2513 = vadd.f32 %v1931, %v2512
      %v2514 = vpop.f32.mrb[0].mxu0
      %2515 = vmatprep.mubr.f32.mxu0 0.0
      %2516 = vmatmul.mubr.f32.gmra.mrb[0].mxu0 %v2350
      %v2517 = vpop.f32.mrb[0].mxu0
      %v2518 = vadd.f32 %v1931, %v2517
      %v2519 = vpop.f32.mrb[0].mxu0
      %2520 = vmatprep.mubr.f32.mxu0 0.0
      %2521 = vmatmul.mubr.f32.gmra.mrb[0].mxu0 %v2352
      %v2522 = vpop.f32.mrb[0].mxu0
      %v2523 = vadd.f32 %v1931, %v2522
      %v2524 = vpop.f32.mrb[0].mxu0
      %2525 = vmatprep.mubr.f32.mxu0 0.0
      %2526 = vmatmul.mubr.f32.gmra.mrb[0].mxu0 %v2354
      %v2527 = vpop.f32.mrb[0].mxu0
      %v2528 = vadd.f32 %v1931, %v2527
      %v2529 = vpop.f32.mrb[0].mxu0
      %2530 = vmatprep.mubr.f32.mxu0 0.0
      %2531 = vmatmul.mubr.f32.gmra.mrb[0].mxu0 %v2356
      %v2532 = vpop.f32.mrb[0].mxu0
      %v2533 = vadd.f32 %v1931, %v2532
      %v2534 = vpop.f32.mrb[0].mxu0
      %2535 = vmatprep.mubr.f32.mxu0 0.0
      %2536 = vmatmul.mubr.f32.gmra.mrb[0].mxu0 %v2358
      %v2537 = vpop.f32.mrb[0].mxu0
      %v2538 = vadd.f32 %v1931, %v2537
      %v2539 = vpop.f32.mrb[0].mxu0
      %2540 = vmatprep.mubr.f32.mxu0 0.0
      %2541 = vmatmul.mubr.f32.gmra.mrb[0].mxu0 %v2360
      %v2542 = vpop.f32.mrb[0].mxu0
      %v2543 = vadd.f32 %v1931, %v2542
      %v2544 = vpop.f32.mrb[0].mxu0
      %2545 = vdwg.mxu0
      %v2546 = vmax.f32 %v2433, 0.0
      %v2547 = vmax.f32 %v2438, 0.0
      %v2548 = vmax.f32 %v2443, 0.0
      %v2549 = vmax.f32 %v2448, 0.0
      %v2550 = vmax.f32 %v2453, 0.0
      %v2551 = vmax.f32 %v2458, 0.0
      %v2552 = vmax.f32 %v2463, 0.0
      %v2553 = vmax.f32 %v2468, 0.0
      %v2554 = vmax.f32 %v2473, 0.0
      %v2555 = vmax.f32 %v2478, 0.0
      %v2556 = vmax.f32 %v2483, 0.0
      %v2557 = vmax.f32 %v2488, 0.0
      %v2558 = vmax.f32 %v2493, 0.0
      %v2559 = vmax.f32 %v2498, 0.0
      %v2560 = vmax.f32 %v2503, 0.0
      %v2561 = vmax.f32 %v2508, 0.0
      %v2562 = vmax.f32 %v2513, 0.0
      %v2563 = vmax.f32 %v2518, 0.0
      %v2564 = vmax.f32 %v2523, 0.0
      %v2565 = vmax.f32 %v2528, 0.0
      %v2566 = vmax.f32 %v2533, 0.0
      %v2567 = vmax.f32 %v2538, 0.0
      %v2568 = vmax.f32 %v2543, 0.0
      %v2592 = vcombine.high %v2546, %v2546
      %v2594 = vunpack.c.l.s4 1983009808
      %v2595 = vunpack.c.0.s8 %v2594
      %v2596 = vlaneseq
      %v2597 = vshrl.u32 %v2596, 7
      %v2598 = vsub.s32 %v2595, %v2597
      %v2599 = vrot.slane %v2546, %v2598
      %v2601 = vunpack.c.l.s4 1983009808
      %v2602 = vunpack.c.0.s8 %v2601
      %v2603 = vlaneseq
      %v2604 = vshrl.u32 %v2603, 7
      %v2605 = vsub.s32 %v2602, %v2604
      %v2606 = vrot.slane %v2592, %v2605
      %v2607 = vcombine.high %v2599, %v2599
      %v2608 = vcombine.high %v2606, %v2606
      %v2609 = vcombine.high %v2547, %v2547
      %v2611 = vunpack.c.l.s4 1983009808
      %v2612 = vunpack.c.0.s8 %v2611
      %v2613 = vlaneseq
      %v2614 = vshrl.u32 %v2613, 7
      %v2615 = vsub.s32 %v2612, %v2614
      %v2616 = vrot.slane %v2547, %v2615
      %v2618 = vunpack.c.l.s4 1983009808
      %v2619 = vunpack.c.0.s8 %v2618
      %v2620 = vlaneseq
      %v2621 = vshrl.u32 %v2620, 7
      %v2622 = vsub.s32 %v2619, %v2621
      %v2623 = vrot.slane %v2609, %v2622
      %v2624 = vcombine.high %v2616, %v2616
      %v2625 = vcombine.high %v2623, %v2623
      %v2626 = vcombine.high %v2548, %v2548
      %v2628 = vunpack.c.l.s4 1983009808
      %v2629 = vunpack.c.0.s8 %v2628
      %v2630 = vlaneseq
      %v2631 = vshrl.u32 %v2630, 7
      %v2632 = vsub.s32 %v2629, %v2631
      %v2633 = vrot.slane %v2548, %v2632
      %v2635 = vunpack.c.l.s4 1983009808
      %v2636 = vunpack.c.0.s8 %v2635
      %v2637 = vlaneseq
      %v2638 = vshrl.u32 %v2637, 7
      %v2639 = vsub.s32 %v2636, %v2638
      %v2640 = vrot.slane %v2626, %v2639
      %v2641 = vcombine.high %v2633, %v2633
      %v2642 = vcombine.high %v2640, %v2640
      %v2643 = vcombine.high %v2549, %v2549
      %v2645 = vunpack.c.l.s4 1983009808
      %v2646 = vunpack.c.0.s8 %v2645
      %v2647 = vlaneseq
      %v2648 = vshrl.u32 %v2647, 7
      %v2649 = vsub.s32 %v2646, %v2648
      %v2650 = vrot.slane %v2549, %v2649
      %v2652 = vunpack.c.l.s4 1983009808
      %v2653 = vunpack.c.0.s8 %v2652
      %v2654 = vlaneseq
      %v2655 = vshrl.u32 %v2654, 7
      %v2656 = vsub.s32 %v2653, %v2655
      %v2657 = vrot.slane %v2643, %v2656
      %v2658 = vcombine.high %v2650, %v2650
      %v2659 = vcombine.high %v2657, %v2657
      %v2660 = vcombine.high %v2550, %v2550
      %v2662 = vunpack.c.l.s4 1983009808
      %v2663 = vunpack.c.0.s8 %v2662
      %v2664 = vlaneseq
      %v2665 = vshrl.u32 %v2664, 7
      %v2666 = vsub.s32 %v2663, %v2665
      %v2667 = vrot.slane %v2550, %v2666
      %v2669 = vunpack.c.l.s4 1983009808
      %v2670 = vunpack.c.0.s8 %v2669
      %v2671 = vlaneseq
      %v2672 = vshrl.u32 %v2671, 7
      %v2673 = vsub.s32 %v2670, %v2672
      %v2674 = vrot.slane %v2660, %v2673
      %v2675 = vcombine.high %v2667, %v2667
      %v2676 = vcombine.high %v2674, %v2674
      %v2677 = vcombine.high %v2551, %v2551
      %v2679 = vunpack.c.l.s4 1983009808
      %v2680 = vunpack.c.0.s8 %v2679
      %v2681 = vlaneseq
      %v2682 = vshrl.u32 %v2681, 7
      %v2683 = vsub.s32 %v2680, %v2682
      %v2684 = vrot.slane %v2551, %v2683
      %v2686 = vunpack.c.l.s4 1983009808
      %v2687 = vunpack.c.0.s8 %v2686
      %v2688 = vlaneseq
      %v2689 = vshrl.u32 %v2688, 7
      %v2690 = vsub.s32 %v2687, %v2689
      %v2691 = vrot.slane %v2677, %v2690
      %v2692 = vcombine.high %v2684, %v2684
      %v2693 = vcombine.high %v2691, %v2691
      %v2694 = vcombine.high %v2552, %v2552
      %v2696 = vunpack.c.l.s4 1983009808
      %v2697 = vunpack.c.0.s8 %v2696
      %v2698 = vlaneseq
      %v2699 = vshrl.u32 %v2698, 7
      %v2700 = vsub.s32 %v2697, %v2699
      %v2701 = vrot.slane %v2552, %v2700
      %v2703 = vunpack.c.l.s4 1983009808
      %v2704 = vunpack.c.0.s8 %v2703
      %v2705 = vlaneseq
      %v2706 = vshrl.u32 %v2705, 7
      %v2707 = vsub.s32 %v2704, %v2706
      %v2708 = vrot.slane %v2694, %v2707
      %v2709 = vcombine.high %v2701, %v2701
      %v2710 = vcombine.high %v2708, %v2708
      %v2711 = vcombine.high %v2553, %v2553
      %v2713 = vunpack.c.l.s4 1983009808
      %v2714 = vunpack.c.0.s8 %v2713
      %v2715 = vlaneseq
      %v2716 = vshrl.u32 %v2715, 7
      %v2717 = vsub.s32 %v2714, %v2716
      %v2718 = vrot.slane %v2553, %v2717
      %v2720 = vunpack.c.l.s4 1983009808
      %v2721 = vunpack.c.0.s8 %v2720
      %v2722 = vlaneseq
      %v2723 = vshrl.u32 %v2722, 7
      %v2724 = vsub.s32 %v2721, %v2723
      %v2725 = vrot.slane %v2711, %v2724
      %v2726 = vcombine.high %v2718, %v2718
      %v2727 = vcombine.high %v2725, %v2725
      %v2728 = vcombine.high %v2554, %v2554
      %v2730 = vunpack.c.l.s4 1983009808
      %v2731 = vunpack.c.0.s8 %v2730
      %v2732 = vlaneseq
      %v2733 = vshrl.u32 %v2732, 7
      %v2734 = vsub.s32 %v2731, %v2733
      %v2735 = vrot.slane %v2554, %v2734
      %v2737 = vunpack.c.l.s4 1983009808
      %v2738 = vunpack.c.0.s8 %v2737
      %v2739 = vlaneseq
      %v2740 = vshrl.u32 %v2739, 7
      %v2741 = vsub.s32 %v2738, %v2740
      %v2742 = vrot.slane %v2728, %v2741
      %v2743 = vcombine.high %v2735, %v2735
      %v2744 = vcombine.high %v2742, %v2742
      %v2745 = vcombine.high %v2555, %v2555
      %v2747 = vunpack.c.l.s4 1983009808
      %v2748 = vunpack.c.0.s8 %v2747
      %v2749 = vlaneseq
      %v2750 = vshrl.u32 %v2749, 7
      %v2751 = vsub.s32 %v2748, %v2750
      %v2752 = vrot.slane %v2555, %v2751
      %v2754 = vunpack.c.l.s4 1983009808
      %v2755 = vunpack.c.0.s8 %v2754
      %v2756 = vlaneseq
      %v2757 = vshrl.u32 %v2756, 7
      %v2758 = vsub.s32 %v2755, %v2757
      %v2759 = vrot.slane %v2745, %v2758
      %v2760 = vcombine.high %v2752, %v2752
      %v2761 = vcombine.high %v2759, %v2759
      %v2762 = vcombine.high %v2556, %v2556
      %v2764 = vunpack.c.l.s4 1983009808
      %v2765 = vunpack.c.0.s8 %v2764
      %v2766 = vlaneseq
      %v2767 = vshrl.u32 %v2766, 7
      %v2768 = vsub.s32 %v2765, %v2767
      %v2769 = vrot.slane %v2556, %v2768
      %v2771 = vunpack.c.l.s4 1983009808
      %v2772 = vunpack.c.0.s8 %v2771
      %v2773 = vlaneseq
      %v2774 = vshrl.u32 %v2773, 7
      %v2775 = vsub.s32 %v2772, %v2774
      %v2776 = vrot.slane %v2762, %v2775
      %v2777 = vcombine.high %v2769, %v2769
      %v2778 = vcombine.high %v2776, %v2776
      %v2779 = vcombine.high %v2557, %v2557
      %v2781 = vunpack.c.l.s4 1983009808
      %v2782 = vunpack.c.0.s8 %v2781
      %v2783 = vlaneseq
      %v2784 = vshrl.u32 %v2783, 7
      %v2785 = vsub.s32 %v2782, %v2784
      %v2786 = vrot.slane %v2557, %v2785
      %v2788 = vunpack.c.l.s4 1983009808
      %v2789 = vunpack.c.0.s8 %v2788
      %v2790 = vlaneseq
      %v2791 = vshrl.u32 %v2790, 7
      %v2792 = vsub.s32 %v2789, %v2791
      %v2793 = vrot.slane %v2779, %v2792
      %v2794 = vcombine.high %v2786, %v2786
      %v2795 = vcombine.high %v2793, %v2793
      %v2796 = vcombine.high %v2558, %v2558
      %v2798 = vunpack.c.l.s4 1983009808
      %v2799 = vunpack.c.0.s8 %v2798
      %v2800 = vlaneseq
      %v2801 = vshrl.u32 %v2800, 7
      %v2802 = vsub.s32 %v2799, %v2801
      %v2803 = vrot.slane %v2558, %v2802
      %v2805 = vunpack.c.l.s4 1983009808
      %v2806 = vunpack.c.0.s8 %v2805
      %v2807 = vlaneseq
      %v2808 = vshrl.u32 %v2807, 7
      %v2809 = vsub.s32 %v2806, %v2808
      %v2810 = vrot.slane %v2796, %v2809
      %v2811 = vcombine.high %v2803, %v2803
      %v2812 = vcombine.high %v2810, %v2810
      %v2813 = vcombine.high %v2559, %v2559
      %v2815 = vunpack.c.l.s4 1983009808
      %v2816 = vunpack.c.0.s8 %v2815
      %v2817 = vlaneseq
      %v2818 = vshrl.u32 %v2817, 7
      %v2819 = vsub.s32 %v2816, %v2818
      %v2820 = vrot.slane %v2559, %v2819
      %v2822 = vunpack.c.l.s4 1983009808
      %v2823 = vunpack.c.0.s8 %v2822
      %v2824 = vlaneseq
      %v2825 = vshrl.u32 %v2824, 7
      %v2826 = vsub.s32 %v2823, %v2825
      %v2827 = vrot.slane %v2813, %v2826
      %v2828 = vcombine.high %v2820, %v2820
      %v2829 = vcombine.high %v2827, %v2827
      %v2830 = vcombine.high %v2560, %v2560
      %v2832 = vunpack.c.l.s4 1983009808
      %v2833 = vunpack.c.0.s8 %v2832
      %v2834 = vlaneseq
      %v2835 = vshrl.u32 %v2834, 7
      %v2836 = vsub.s32 %v2833, %v2835
      %v2837 = vrot.slane %v2560, %v2836
      %v2839 = vunpack.c.l.s4 1983009808
      %v2840 = vunpack.c.0.s8 %v2839
      %v2841 = vlaneseq
      %v2842 = vshrl.u32 %v2841, 7
      %v2843 = vsub.s32 %v2840, %v2842
      %v2844 = vrot.slane %v2830, %v2843
      %v2845 = vcombine.high %v2837, %v2837
      %v2846 = vcombine.high %v2844, %v2844
      %v2847 = vcombine.high %v2561, %v2561
      %v2849 = vunpack.c.l.s4 1983009808
      %v2850 = vunpack.c.0.s8 %v2849
      %v2851 = vlaneseq
      %v2852 = vshrl.u32 %v2851, 7
      %v2853 = vsub.s32 %v2850, %v2852
      %v2854 = vrot.slane %v2561, %v2853
      %v2856 = vunpack.c.l.s4 1983009808
      %v2857 = vunpack.c.0.s8 %v2856
      %v2858 = vlaneseq
      %v2859 = vshrl.u32 %v2858, 7
      %v2860 = vsub.s32 %v2857, %v2859
      %v2861 = vrot.slane %v2847, %v2860
      %v2862 = vcombine.high %v2854, %v2854
      %v2863 = vcombine.high %v2861, %v2861
      %v2864 = vcombine.high %v2562, %v2562
      %v2866 = vunpack.c.l.s4 1983009808
      %v2867 = vunpack.c.0.s8 %v2866
      %v2868 = vlaneseq
      %v2869 = vshrl.u32 %v2868, 7
      %v2870 = vsub.s32 %v2867, %v2869
      %v2871 = vrot.slane %v2562, %v2870
      %v2873 = vunpack.c.l.s4 1983009808
      %v2874 = vunpack.c.0.s8 %v2873
      %v2875 = vlaneseq
      %v2876 = vshrl.u32 %v2875, 7
      %v2877 = vsub.s32 %v2874, %v2876
      %v2878 = vrot.slane %v2864, %v2877
      %v2879 = vcombine.high %v2871, %v2871
      %v2880 = vcombine.high %v2878, %v2878
      %v2881 = vcombine.high %v2563, %v2563
      %v2883 = vunpack.c.l.s4 1983009808
      %v2884 = vunpack.c.0.s8 %v2883
      %v2885 = vlaneseq
      %v2886 = vshrl.u32 %v2885, 7
      %v2887 = vsub.s32 %v2884, %v2886
      %v2888 = vrot.slane %v2563, %v2887
      %v2890 = vunpack.c.l.s4 1983009808
      %v2891 = vunpack.c.0.s8 %v2890
      %v2892 = vlaneseq
      %v2893 = vshrl.u32 %v2892, 7
      %v2894 = vsub.s32 %v2891, %v2893
      %v2895 = vrot.slane %v2881, %v2894
      %v2896 = vcombine.high %v2888, %v2888
      %v2897 = vcombine.high %v2895, %v2895
      %v2898 = vcombine.high %v2564, %v2564
      %v2900 = vunpack.c.l.s4 1983009808
      %v2901 = vunpack.c.0.s8 %v2900
      %v2902 = vlaneseq
      %v2903 = vshrl.u32 %v2902, 7
      %v2904 = vsub.s32 %v2901, %v2903
      %v2905 = vrot.slane %v2564, %v2904
      %v2907 = vunpack.c.l.s4 1983009808
      %v2908 = vunpack.c.0.s8 %v2907
      %v2909 = vlaneseq
      %v2910 = vshrl.u32 %v2909, 7
      %v2911 = vsub.s32 %v2908, %v2910
      %v2912 = vrot.slane %v2898, %v2911
      %v2913 = vcombine.high %v2905, %v2905
      %v2914 = vcombine.high %v2912, %v2912
      %v2915 = vcombine.high %v2565, %v2565
      %v2917 = vunpack.c.l.s4 1983009808
      %v2918 = vunpack.c.0.s8 %v2917
      %v2919 = vlaneseq
      %v2920 = vshrl.u32 %v2919, 7
      %v2921 = vsub.s32 %v2918, %v2920
      %v2922 = vrot.slane %v2565, %v2921
      %v2924 = vunpack.c.l.s4 1983009808
      %v2925 = vunpack.c.0.s8 %v2924
      %v2926 = vlaneseq
      %v2927 = vshrl.u32 %v2926, 7
      %v2928 = vsub.s32 %v2925, %v2927
      %v2929 = vrot.slane %v2915, %v2928
      %v2930 = vcombine.high %v2922, %v2922
      %v2931 = vcombine.high %v2929, %v2929
      %v2932 = vcombine.high %v2566, %v2566
      %v2934 = vunpack.c.l.s4 1983009808
      %v2935 = vunpack.c.0.s8 %v2934
      %v2936 = vlaneseq
      %v2937 = vshrl.u32 %v2936, 7
      %v2938 = vsub.s32 %v2935, %v2937
      %v2939 = vrot.slane %v2566, %v2938
      %v2941 = vunpack.c.l.s4 1983009808
      %v2942 = vunpack.c.0.s8 %v2941
      %v2943 = vlaneseq
      %v2944 = vshrl.u32 %v2943, 7
      %v2945 = vsub.s32 %v2942, %v2944
      %v2946 = vrot.slane %v2932, %v2945
      %v2947 = vcombine.high %v2939, %v2939
      %v2948 = vcombine.high %v2946, %v2946
      %v2949 = vcombine.high %v2567, %v2567
      %v2951 = vunpack.c.l.s4 1983009808
      %v2952 = vunpack.c.0.s8 %v2951
      %v2953 = vlaneseq
      %v2954 = vshrl.u32 %v2953, 7
      %v2955 = vsub.s32 %v2952, %v2954
      %v2956 = vrot.slane %v2567, %v2955
      %v2958 = vunpack.c.l.s4 1983009808
      %v2959 = vunpack.c.0.s8 %v2958
      %v2960 = vlaneseq
      %v2961 = vshrl.u32 %v2960, 7
      %v2962 = vsub.s32 %v2959, %v2961
      %v2963 = vrot.slane %v2949, %v2962
      %v2964 = vcombine.high %v2956, %v2956
      %v2965 = vcombine.high %v2963, %v2963
      %v2967 = vunpack.c.l.s4 1983009808
      %v2968 = vunpack.c.0.s8 %v2967
      %v2969 = vlaneseq
      %v2970 = vshrl.u32 %v2969, 7
      %v2971 = vsub.s32 %v2968, %v2970
      %v2972 = vrot.slane %v2568, %v2971
      %v2973 = vcombine.high %v2972, %v2972
      %v2974 = vlaneseq
      %v2975 = vshrl.u32 %v2974, 7
      %v2976 = vadd.s32 %v2975, 8
      %v2977 = vadd.s32 %v2975, 16
      %vm2978 = vcmp.ge.s32.totalorder %v2975, 1
      %vm2979 = vcmp.ge.s32.totalorder %v2976, 1
      %vm2980 = vcmp.ge.s32.totalorder %v2977, 1
      %vm2981 = vcmp.le.s32.totalorder %v2975, 16
      %vm2982 = vcmp.le.s32.totalorder %v2976, 16
      %vm2983 = vcmp.le.s32.totalorder %v2977, 16
      %vm2984 = vmand %vm2978, %vm2981
      %vm2985 = vmand %vm2979, %vm2982
      %vm2986 = vmand %vm2980, %vm2983
      %p2987 = scmp.gt.s32.totalorder %s25, 0
      %s2988 = scalar_select %p2987, 1, 0
      %v2989 = vstv %s2988
      %vm2990 = vcmp.eq.s32.totalorder %v2989, 1
      %vm2991 = vmand %vm2984, %vm2990
      %vm2992 = vmand %vm2985, %vm2990
      %vm2993 = vmand %vm2986, %vm2990
      %vm2994 = vmand %vm2984, 1
      %vm2995 = vmand %vm2985, 1
      %vm2996 = vmand %vm2986, 1
      %p2997 = scmp.lt.s32.totalorder %s25, 1
      %s2998 = scalar_select %p2997, 1, 0
      %v2999 = vstv %s2998
      %vm3000 = vcmp.eq.s32.totalorder %v2999, 1
      %vm3001 = vmand %vm2991, 1
      %vm3002 = vmand %vm2992, 1
      %vm3003 = vmand %vm2993, 1
      %vm3004 = vmand %vm2994, %vm3000
      %vm3005 = vmand %vm2995, %vm3000
      %vm3006 = vmand %vm2996, %vm3000
      %v3007 = vsel %vm3001, 1, 0
      %v3008 = vsel %vm3002, 1, 0
      %v3009 = vsel %vm3003, 1, 0
      %v3010 = vsel %vm2994, 1, 0
      %v3011 = vsel %vm2995, 1, 0
      %v3012 = vsel %vm2996, 1, 0
      %v3013 = vsel %vm3004, 1, 0
      %v3014 = vsel %vm3005, 1, 0
      %v3015 = vsel %vm3006, 1, 0
      %vm3016 = vcmp.eq.s32.totalorder %v3007, 1
      %vm3017 = vcmp.eq.s32.totalorder %v3008, 1
      %vm3018 = vcmp.eq.s32.totalorder %v3009, 1
      %vm3019 = vcmp.eq.s32.totalorder %v3010, 1
      %vm3020 = vcmp.eq.s32.totalorder %v3011, 1
      %vm3021 = vcmp.eq.s32.totalorder %v3012, 1
      %vm3022 = vcmp.eq.s32.totalorder %v3013, 1
      %vm3023 = vcmp.eq.s32.totalorder %v3014, 1
      %vm3024 = vcmp.eq.s32.totalorder %v3015, 1
      %v3025 = vcombine.low %v2599, %v2607
      %v3026 = vcombine.low %v2606, %v2608
      %v3028 = vunpack.c.l.s4 1983009808
      %v3029 = vunpack.c.0.s8 %v3028
      %v3030 = vlaneseq
      %v3031 = vshrl.u32 %v3030, 7
      %v3032 = vsub.s32 %v3029, %v3031
      %v3033 = vrot.slane %v3025, %v3032
      %v3035 = vunpack.c.l.s4 1983009808
      %v3036 = vunpack.c.0.s8 %v3035
      %v3037 = vlaneseq
      %v3038 = vshrl.u32 %v3037, 7
      %v3039 = vsub.s32 %v3036, %v3038
      %v3040 = vrot.slane %v3026, %v3039
      %v3041 = vcombine.low %v3033, %v3040
      %v3042 = vcombine.low %v2616, %v2624
      %v3043 = vcombine.low %v2623, %v2625
      %v3045 = vunpack.c.l.s4 1983009808
      %v3046 = vunpack.c.0.s8 %v3045
      %v3047 = vlaneseq
      %v3048 = vshrl.u32 %v3047, 7
      %v3049 = vsub.s32 %v3046, %v3048
      %v3050 = vrot.slane %v3042, %v3049
      %v3052 = vunpack.c.l.s4 1983009808
      %v3053 = vunpack.c.0.s8 %v3052
      %v3054 = vlaneseq
      %v3055 = vshrl.u32 %v3054, 7
      %v3056 = vsub.s32 %v3053, %v3055
      %v3057 = vrot.slane %v3043, %v3056
      %v3058 = vcombine.low %v3050, %v3057
      %v3060 = vunpack.c.l.s4 1983009808
      %v3061 = vunpack.c.0.s8 %v3060
      %v3062 = vlaneseq
      %v3063 = vshrl.u32 %v3062, 7
      %v3064 = vsub.s32 %v3061, %v3063
      %v3065 = vrot.slane %v2633, %v3064
      %v3066 = vcombine.low %v2641, %v2640
      %v3067 = vcombine.low %v2642, %v2650
      %v3069 = vunpack.c.l.s4 1983009808
      %v3070 = vunpack.c.0.s8 %v3069
      %v3071 = vlaneseq
      %v3072 = vshrl.u32 %v3071, 7
      %v3073 = vsub.s32 %v3070, %v3072
      %v3074 = vrot.slane %v3066, %v3073
      %v3076 = vunpack.c.l.s4 1983009808
      %v3077 = vunpack.c.0.s8 %v3076
      %v3078 = vlaneseq
      %v3079 = vshrl.u32 %v3078, 7
      %v3080 = vsub.s32 %v3077, %v3079
      %v3081 = vrot.slane %v3067, %v3080
      %v3082 = vcombine.low %v3074, %v3081
      %v3083 = vcombine.low %v2658, %v2657
      %v3084 = vcombine.low %v2659, %v2667
      %v3086 = vunpack.c.l.s4 1983009808
      %v3087 = vunpack.c.0.s8 %v3086
      %v3088 = vlaneseq
      %v3089 = vshrl.u32 %v3088, 7
      %v3090 = vsub.s32 %v3087, %v3089
      %v3091 = vrot.slane %v3083, %v3090
      %v3093 = vunpack.c.l.s4 1983009808
      %v3094 = vunpack.c.0.s8 %v3093
      %v3095 = vlaneseq
      %v3096 = vshrl.u32 %v3095, 7
      %v3097 = vsub.s32 %v3094, %v3096
      %v3098 = vrot.slane %v3084, %v3097
      %v3099 = vcombine.low %v3091, %v3098
      %v3101 = vunpack.c.l.s4 1983009808
      %v3102 = vunpack.c.0.s8 %v3101
      %v3103 = vlaneseq
      %v3104 = vshrl.u32 %v3103, 7
      %v3105 = vsub.s32 %v3102, %v3104
      %v3106 = vrot.slane %v2675, %v3105
      %v3107 = vcombine.low %v2674, %v2676
      %v3108 = vcombine.low %v2684, %v2692
      %v3110 = vunpack.c.l.s4 1983009808
      %v3111 = vunpack.c.0.s8 %v3110
      %v3112 = vlaneseq
      %v3113 = vshrl.u32 %v3112, 7
      %v3114 = vsub.s32 %v3111, %v3113
      %v3115 = vrot.slane %v3107, %v3114
      %v3117 = vunpack.c.l.s4 1983009808
      %v3118 = vunpack.c.0.s8 %v3117
      %v3119 = vlaneseq
      %v3120 = vshrl.u32 %v3119, 7
      %v3121 = vsub.s32 %v3118, %v3120
      %v3122 = vrot.slane %v3108, %v3121
      %v3123 = vcombine.low %v3115, %v3122
      %v3124 = vcombine.low %v2691, %v2693
      %v3125 = vcombine.low %v2701, %v2709
      %v3127 = vunpack.c.l.s4 1983009808
      %v3128 = vunpack.c.0.s8 %v3127
      %v3129 = vlaneseq
      %v3130 = vshrl.u32 %v3129, 7
      %v3131 = vsub.s32 %v3128, %v3130
      %v3132 = vrot.slane %v3124, %v3131
      %v3134 = vunpack.c.l.s4 1983009808
      %v3135 = vunpack.c.0.s8 %v3134
      %v3136 = vlaneseq
      %v3137 = vshrl.u32 %v3136, 7
      %v3138 = vsub.s32 %v3135, %v3137
      %v3139 = vrot.slane %v3125, %v3138
      %v3140 = vcombine.low %v3132, %v3139
      %v3142 = vunpack.c.l.s4 1983009808
      %v3143 = vunpack.c.0.s8 %v3142
      %v3144 = vlaneseq
      %v3145 = vshrl.u32 %v3144, 7
      %v3146 = vsub.s32 %v3143, %v3145
      %v3147 = vrot.slane %v2708, %v3146
      %v3148 = vcombine.low %v2710, %v2718
      %v3149 = vcombine.low %v2726, %v2725
      %v3151 = vunpack.c.l.s4 1983009808
      %v3152 = vunpack.c.0.s8 %v3151
      %v3153 = vlaneseq
      %v3154 = vshrl.u32 %v3153, 7
      %v3155 = vsub.s32 %v3152, %v3154
      %v3156 = vrot.slane %v3148, %v3155
      %v3158 = vunpack.c.l.s4 1983009808
      %v3159 = vunpack.c.0.s8 %v3158
      %v3160 = vlaneseq
      %v3161 = vshrl.u32 %v3160, 7
      %v3162 = vsub.s32 %v3159, %v3161
      %v3163 = vrot.slane %v3149, %v3162
      %v3164 = vcombine.low %v3156, %v3163
      %v3165 = vcombine.low %v2727, %v2735
      %v3166 = vcombine.low %v2743, %v2742
      %v3168 = vunpack.c.l.s4 1983009808
      %v3169 = vunpack.c.0.s8 %v3168
      %v3170 = vlaneseq
      %v3171 = vshrl.u32 %v3170, 7
      %v3172 = vsub.s32 %v3169, %v3171
      %v3173 = vrot.slane %v3165, %v3172
      %v3175 = vunpack.c.l.s4 1983009808
      %v3176 = vunpack.c.0.s8 %v3175
      %v3177 = vlaneseq
      %v3178 = vshrl.u32 %v3177, 7
      %v3179 = vsub.s32 %v3176, %v3178
      %v3180 = vrot.slane %v3166, %v3179
      %v3181 = vcombine.low %v3173, %v3180
      %v3183 = vunpack.c.l.s4 1983009808
      %v3184 = vunpack.c.0.s8 %v3183
      %v3185 = vlaneseq
      %v3186 = vshrl.u32 %v3185, 7
      %v3187 = vsub.s32 %v3184, %v3186
      %v3188 = vrot.slane %v2744, %v3187
      %v3189 = vcombine.low %v2752, %v2760
      %v3190 = vcombine.low %v2759, %v2761
      %v3192 = vunpack.c.l.s4 1983009808
      %v3193 = vunpack.c.0.s8 %v3192
      %v3194 = vlaneseq
      %v3195 = vshrl.u32 %v3194, 7
      %v3196 = vsub.s32 %v3193, %v3195
      %v3197 = vrot.slane %v3189, %v3196
      %v3199 = vunpack.c.l.s4 1983009808
      %v3200 = vunpack.c.0.s8 %v3199
      %v3201 = vlaneseq
      %v3202 = vshrl.u32 %v3201, 7
      %v3203 = vsub.s32 %v3200, %v3202
      %v3204 = vrot.slane %v3190, %v3203
      %v3205 = vcombine.low %v3197, %v3204
      %v3206 = vcombine.low %v2769, %v2777
      %v3207 = vcombine.low %v2776, %v2778
      %v3209 = vunpack.c.l.s4 1983009808
      %v3210 = vunpack.c.0.s8 %v3209
      %v3211 = vlaneseq
      %v3212 = vshrl.u32 %v3211, 7
      %v3213 = vsub.s32 %v3210, %v3212
      %v3214 = vrot.slane %v3206, %v3213
      %v3216 = vunpack.c.l.s4 1983009808
      %v3217 = vunpack.c.0.s8 %v3216
      %v3218 = vlaneseq
      %v3219 = vshrl.u32 %v3218, 7
      %v3220 = vsub.s32 %v3217, %v3219
      %v3221 = vrot.slane %v3207, %v3220
      %v3222 = vcombine.low %v3214, %v3221
      %v3224 = vunpack.c.l.s4 1983009808
      %v3225 = vunpack.c.0.s8 %v3224
      %v3226 = vlaneseq
      %v3227 = vshrl.u32 %v3226, 7
      %v3228 = vsub.s32 %v3225, %v3227
      %v3229 = vrot.slane %v2786, %v3228
      %v3230 = vcombine.low %v2794, %v2793
      %v3231 = vcombine.low %v2795, %v2803
      %v3233 = vunpack.c.l.s4 1983009808
      %v3234 = vunpack.c.0.s8 %v3233
      %v3235 = vlaneseq
      %v3236 = vshrl.u32 %v3235, 7
      %v3237 = vsub.s32 %v3234, %v3236
      %v3238 = vrot.slane %v3230, %v3237
      %v3240 = vunpack.c.l.s4 1983009808
      %v3241 = vunpack.c.0.s8 %v3240
      %v3242 = vlaneseq
      %v3243 = vshrl.u32 %v3242, 7
      %v3244 = vsub.s32 %v3241, %v3243
      %v3245 = vrot.slane %v3231, %v3244
      %v3246 = vcombine.low %v3238, %v3245
      %v3247 = vcombine.low %v2811, %v2810
      %v3248 = vcombine.low %v2812, %v2820
      %v3250 = vunpack.c.l.s4 1983009808
      %v3251 = vunpack.c.0.s8 %v3250
      %v3252 = vlaneseq
      %v3253 = vshrl.u32 %v3252, 7
      %v3254 = vsub.s32 %v3251, %v3253
      %v3255 = vrot.slane %v3247, %v3254
      %v3257 = vunpack.c.l.s4 1983009808
      %v3258 = vunpack.c.0.s8 %v3257
      %v3259 = vlaneseq
      %v3260 = vshrl.u32 %v3259, 7
      %v3261 = vsub.s32 %v3258, %v3260
      %v3262 = vrot.slane %v3248, %v3261
      %v3263 = vcombine.low %v3255, %v3262
      %v3265 = vunpack.c.l.s4 1983009808
      %v3266 = vunpack.c.0.s8 %v3265
      %v3267 = vlaneseq
      %v3268 = vshrl.u32 %v3267, 7
      %v3269 = vsub.s32 %v3266, %v3268
      %v3270 = vrot.slane %v2828, %v3269
      %v3271 = vcombine.low %v2827, %v2829
      %v3272 = vcombine.low %v2837, %v2845
      %v3274 = vunpack.c.l.s4 1983009808
      %v3275 = vunpack.c.0.s8 %v3274
      %v3276 = vlaneseq
      %v3277 = vshrl.u32 %v3276, 7
      %v3278 = vsub.s32 %v3275, %v3277
      %v3279 = vrot.slane %v3271, %v3278
      %v3281 = vunpack.c.l.s4 1983009808
      %v3282 = vunpack.c.0.s8 %v3281
      %v3283 = vlaneseq
      %v3284 = vshrl.u32 %v3283, 7
      %v3285 = vsub.s32 %v3282, %v3284
      %v3286 = vrot.slane %v3272, %v3285
      %v3287 = vcombine.low %v3279, %v3286
      %v3288 = vcombine.low %v2844, %v2846
      %v3289 = vcombine.low %v2854, %v2862
      %v3291 = vunpack.c.l.s4 1983009808
      %v3292 = vunpack.c.0.s8 %v3291
      %v3293 = vlaneseq
      %v3294 = vshrl.u32 %v3293, 7
      %v3295 = vsub.s32 %v3292, %v3294
      %v3296 = vrot.slane %v3288, %v3295
      %v3298 = vunpack.c.l.s4 1983009808
      %v3299 = vunpack.c.0.s8 %v3298
      %v3300 = vlaneseq
      %v3301 = vshrl.u32 %v3300, 7
      %v3302 = vsub.s32 %v3299, %v3301
      %v3303 = vrot.slane %v3289, %v3302
      %v3304 = vcombine.low %v3296, %v3303
      %v3306 = vunpack.c.l.s4 1983009808
      %v3307 = vunpack.c.0.s8 %v3306
      %v3308 = vlaneseq
      %v3309 = vshrl.u32 %v3308, 7
      %v3310 = vsub.s32 %v3307, %v3309
      %v3311 = vrot.slane %v2861, %v3310
      %v3312 = vcombine.low %v2863, %v2871
      %v3313 = vcombine.low %v2879, %v2878
      %v3315 = vunpack.c.l.s4 1983009808
      %v3316 = vunpack.c.0.s8 %v3315
      %v3317 = vlaneseq
      %v3318 = vshrl.u32 %v3317, 7
      %v3319 = vsub.s32 %v3316, %v3318
      %v3320 = vrot.slane %v3312, %v3319
      %v3322 = vunpack.c.l.s4 1983009808
      %v3323 = vunpack.c.0.s8 %v3322
      %v3324 = vlaneseq
      %v3325 = vshrl.u32 %v3324, 7
      %v3326 = vsub.s32 %v3323, %v3325
      %v3327 = vrot.slane %v3313, %v3326
      %v3328 = vcombine.low %v3320, %v3327
      %v3329 = vcombine.low %v2880, %v2888
      %v3330 = vcombine.low %v2896, %v2895
      %v3332 = vunpack.c.l.s4 1983009808
      %v3333 = vunpack.c.0.s8 %v3332
      %v3334 = vlaneseq
      %v3335 = vshrl.u32 %v3334, 7
      %v3336 = vsub.s32 %v3333, %v3335
      %v3337 = vrot.slane %v3329, %v3336
      %v3339 = vunpack.c.l.s4 1983009808
      %v3340 = vunpack.c.0.s8 %v3339
      %v3341 = vlaneseq
      %v3342 = vshrl.u32 %v3341, 7
      %v3343 = vsub.s32 %v3340, %v3342
      %v3344 = vrot.slane %v3330, %v3343
      %v3345 = vcombine.low %v3337, %v3344
      %v3347 = vunpack.c.l.s4 1983009808
      %v3348 = vunpack.c.0.s8 %v3347
      %v3349 = vlaneseq
      %v3350 = vshrl.u32 %v3349, 7
      %v3351 = vsub.s32 %v3348, %v3350
      %v3352 = vrot.slane %v2897, %v3351
      %v3353 = vcombine.low %v2905, %v2913
      %v3354 = vcombine.low %v2912, %v2914
      %v3356 = vunpack.c.l.s4 1983009808
      %v3357 = vunpack.c.0.s8 %v3356
      %v3358 = vlaneseq
      %v3359 = vshrl.u32 %v3358, 7
      %v3360 = vsub.s32 %v3357, %v3359
      %v3361 = vrot.slane %v3353, %v3360
      %v3363 = vunpack.c.l.s4 1983009808
      %v3364 = vunpack.c.0.s8 %v3363
      %v3365 = vlaneseq
      %v3366 = vshrl.u32 %v3365, 7
      %v3367 = vsub.s32 %v3364, %v3366
      %v3368 = vrot.slane %v3354, %v3367
      %v3369 = vcombine.low %v3361, %v3368
      %v3370 = vcombine.low %v2922, %v2930
      %v3371 = vcombine.low %v2929, %v2931
      %v3373 = vunpack.c.l.s4 1983009808
      %v3374 = vunpack.c.0.s8 %v3373
      %v3375 = vlaneseq
      %v3376 = vshrl.u32 %v3375, 7
      %v3377 = vsub.s32 %v3374, %v3376
      %v3378 = vrot.slane %v3370, %v3377
      %v3380 = vunpack.c.l.s4 1983009808
      %v3381 = vunpack.c.0.s8 %v3380
      %v3382 = vlaneseq
      %v3383 = vshrl.u32 %v3382, 7
      %v3384 = vsub.s32 %v3381, %v3383
      %v3385 = vrot.slane %v3371, %v3384
      %v3386 = vcombine.low %v3378, %v3385
      %v3388 = vunpack.c.l.s4 1983009808
      %v3389 = vunpack.c.0.s8 %v3388
      %v3390 = vlaneseq
      %v3391 = vshrl.u32 %v3390, 7
      %v3392 = vsub.s32 %v3389, %v3391
      %v3393 = vrot.slane %v2939, %v3392
      %v3394 = vcombine.low %v2947, %v2946
      %v3395 = vcombine.low %v2948, %v2956
      %v3397 = vunpack.c.l.s4 1983009808
      %v3398 = vunpack.c.0.s8 %v3397
      %v3399 = vlaneseq
      %v3400 = vshrl.u32 %v3399, 7
      %v3401 = vsub.s32 %v3398, %v3400
      %v3402 = vrot.slane %v3394, %v3401
      %v3404 = vunpack.c.l.s4 1983009808
      %v3405 = vunpack.c.0.s8 %v3404
      %v3406 = vlaneseq
      %v3407 = vshrl.u32 %v3406, 7
      %v3408 = vsub.s32 %v3405, %v3407
      %v3409 = vrot.slane %v3395, %v3408
      %v3410 = vcombine.low %v3402, %v3409
      %v3411 = vcombine.low %v2964, %v2963
      %v3412 = vcombine.low %v2965, %v2972
      %v3414 = vunpack.c.l.s4 1983009808
      %v3415 = vunpack.c.0.s8 %v3414
      %v3416 = vlaneseq
      %v3417 = vshrl.u32 %v3416, 7
      %v3418 = vsub.s32 %v3415, %v3417
      %v3419 = vrot.slane %v3411, %v3418
      %v3421 = vunpack.c.l.s4 1983009808
      %v3422 = vunpack.c.0.s8 %v3421
      %v3423 = vlaneseq
      %v3424 = vshrl.u32 %v3423, 7
      %v3425 = vsub.s32 %v3422, %v3424
      %v3426 = vrot.slane %v3412, %v3425
      %v3427 = vcombine.low %v3419, %v3426
      %v3429 = vunpack.c.l.s4 1983009808
      %v3430 = vunpack.c.0.s8 %v3429
      %v3431 = vlaneseq
      %v3432 = vshrl.u32 %v3431, 7
      %v3433 = vsub.s32 %v3430, %v3432
      %v3434 = vrot.slane %v2973, %v3433
      %v3465 = vsel %vm3016, %v3041, 0.0
      %v3466 = vsel %vm3017, %v3058, 0.0
      %v3467 = vsel %vm3018, %v3065, 0.0
      %v3468 = vsel %vm3019, %v3082, 0.0
      %v3469 = vsel %vm3020, %v3099, 0.0
      %v3470 = vsel %vm3021, %v3106, 0.0
      %v3471 = vsel %vm3019, %v3123, 0.0
      %v3472 = vsel %vm3020, %v3140, 0.0
      %v3473 = vsel %vm3021, %v3147, 0.0
      %v3474 = vsel %vm3019, %v3164, 0.0
      %v3475 = vsel %vm3020, %v3181, 0.0
      %v3476 = vsel %vm3021, %v3188, 0.0
      %v3477 = vsel %vm3019, %v3205, 0.0
      %v3478 = vsel %vm3020, %v3222, 0.0
      %v3479 = vsel %vm3021, %v3229, 0.0
      %v3480 = vsel %vm3019, %v3246, 0.0
      %v3481 = vsel %vm3020, %v3263, 0.0
      %v3482 = vsel %vm3021, %v3270, 0.0
      %v3483 = vsel %vm3019, %v3287, 0.0
      %v3484 = vsel %vm3020, %v3304, 0.0
      %v3485 = vsel %vm3021, %v3311, 0.0
      %v3486 = vsel %vm3019, %v3328, 0.0
      %v3487 = vsel %vm3020, %v3345, 0.0
      %v3488 = vsel %vm3021, %v3352, 0.0
      %v3489 = vsel %vm3019, %v3369, 0.0
      %v3490 = vsel %vm3020, %v3386, 0.0
      %v3491 = vsel %vm3021, %v3393, 0.0
      %v3492 = vsel %vm3022, %v3410, 0.0
      %v3493 = vsel %vm3023, %v3427, 0.0
      %v3494 = vsel %vm3024, %v3434, 0.0
      %v3519 = vrot.slane %v3465, 1
      %v3520 = vrot.slane %v3466, 1
      %v3521 = vsel %vm386, %v3519, %v3520
      %v3522 = vrot.slane %v3467, 1
      %v3523 = vsel %vm386, %v3520, %v3522
      %v3524 = vrot.slane %v3468, 1
      %v3525 = vrot.slane %v3469, 1
      %v3526 = vsel %vm386, %v3524, %v3525
      %v3527 = vrot.slane %v3470, 1
      %v3528 = vsel %vm386, %v3525, %v3527
      %v3529 = vrot.slane %v3471, 1
      %v3530 = vrot.slane %v3472, 1
      %v3531 = vsel %vm386, %v3529, %v3530
      %v3532 = vrot.slane %v3473, 1
      %v3533 = vsel %vm386, %v3530, %v3532
      %v3534 = vrot.slane %v3474, 1
      %v3535 = vrot.slane %v3475, 1
      %v3536 = vsel %vm386, %v3534, %v3535
      %v3537 = vrot.slane %v3476, 1
      %v3538 = vsel %vm386, %v3535, %v3537
      %v3539 = vrot.slane %v3477, 1
      %v3540 = vrot.slane %v3478, 1
      %v3541 = vsel %vm386, %v3539, %v3540
      %v3542 = vrot.slane %v3479, 1
      %v3543 = vsel %vm386, %v3540, %v3542
      %v3544 = vrot.slane %v3480, 1
      %v3545 = vrot.slane %v3481, 1
      %v3546 = vsel %vm386, %v3544, %v3545
      %v3547 = vrot.slane %v3482, 1
      %v3548 = vsel %vm386, %v3545, %v3547
      %v3549 = vrot.slane %v3483, 1
      %v3550 = vrot.slane %v3484, 1
      %v3551 = vsel %vm386, %v3549, %v3550
      %v3552 = vrot.slane %v3485, 1
      %v3553 = vsel %vm386, %v3550, %v3552
      %v3554 = vrot.slane %v3486, 1
      %v3555 = vrot.slane %v3487, 1
      %v3556 = vsel %vm386, %v3554, %v3555
      %v3557 = vrot.slane %v3488, 1
      %v3558 = vsel %vm386, %v3555, %v3557
      %3559 = vrot.lane.b32.xlu0 %v3521, 64
      %v3560 = vpop.permute.xlu0 %3559
      %3561 = vrot.lane.b32.xlu0 %v3523, 64
      %v3562 = vpop.permute.xlu0 %3561
      %3563 = vrot.lane.b32.xlu0 %v3526, 64
      %v3564 = vpop.permute.xlu0 %3563
      %3565 = vrot.lane.b32.xlu0 %v3528, 64
      %v3566 = vpop.permute.xlu0 %3565
      %3567 = vrot.lane.b32.xlu0 %v3531, 64
      %v3568 = vpop.permute.xlu0 %3567
      %3569 = vrot.lane.b32.xlu0 %v3533, 64
      %v3570 = vpop.permute.xlu0 %3569
      %3571 = vrot.lane.b32.xlu0 %v3536, 64
      %v3572 = vpop.permute.xlu0 %3571
      %3573 = vrot.lane.b32.xlu0 %v3538, 64
      %v3574 = vpop.permute.xlu0 %3573
      %3575 = vrot.lane.b32.xlu0 %v3541, 64
      %v3576 = vpop.permute.xlu0 %3575
      %3577 = vrot.lane.b32.xlu0 %v3543, 64
      %v3578 = vpop.permute.xlu0 %3577
      %3579 = vrot.lane.b32.xlu0 %v3546, 64
      %v3580 = vpop.permute.xlu0 %3579
      %3581 = vrot.lane.b32.xlu0 %v3548, 64
      %v3582 = vpop.permute.xlu0 %3581
      %3583 = vrot.lane.b32.xlu0 %v3551, 64
      %v3584 = vpop.permute.xlu0 %3583
      %3585 = vrot.lane.b32.xlu0 %v3553, 64
      %v3586 = vpop.permute.xlu0 %3585
      %3587 = vrot.lane.b32.xlu0 %v3556, 64
      %v3588 = vpop.permute.xlu0 %3587
      %3589 = vrot.lane.b32.xlu0 %v3558, 64
      %v3590 = vpop.permute.xlu0 %3589
      %v3607 = vrot.slane %v3465, 2
      %v3608 = vrot.slane %v3466, 2
      %v3609 = vsel %vm527, %v3607, %v3608
      %v3610 = vrot.slane %v3467, 2
      %v3611 = vsel %vm527, %v3608, %v3610
      %v3612 = vrot.slane %v3468, 2
      %v3613 = vrot.slane %v3469, 2
      %v3614 = vsel %vm527, %v3612, %v3613
      %v3615 = vrot.slane %v3470, 2
      %v3616 = vsel %vm527, %v3613, %v3615
      %v3617 = vrot.slane %v3471, 2
      %v3618 = vrot.slane %v3472, 2
      %v3619 = vsel %vm527, %v3617, %v3618
      %v3620 = vrot.slane %v3473, 2
      %v3621 = vsel %vm527, %v3618, %v3620
      %v3622 = vrot.slane %v3474, 2
      %v3623 = vrot.slane %v3475, 2
      %v3624 = vsel %vm527, %v3622, %v3623
      %v3625 = vrot.slane %v3476, 2
      %v3626 = vsel %vm527, %v3623, %v3625
      %v3627 = vrot.slane %v3477, 2
      %v3628 = vrot.slane %v3478, 2
      %v3629 = vsel %vm527, %v3627, %v3628
      %v3630 = vrot.slane %v3479, 2
      %v3631 = vsel %vm527, %v3628, %v3630
      %v3632 = vrot.slane %v3480, 2
      %v3633 = vrot.slane %v3481, 2
      %v3634 = vsel %vm527, %v3632, %v3633
      %v3635 = vrot.slane %v3482, 2
      %v3636 = vsel %vm527, %v3633, %v3635
      %v3637 = vrot.slane %v3483, 2
      %v3638 = vrot.slane %v3484, 2
      %v3639 = vsel %vm527, %v3637, %v3638
      %v3640 = vrot.slane %v3485, 2
      %v3641 = vsel %vm527, %v3638, %v3640
      %v3642 = vrot.slane %v3486, 2
      %v3643 = vrot.slane %v3487, 2
      %v3644 = vsel %vm527, %v3642, %v3643
      %v3645 = vrot.slane %v3488, 2
      %v3646 = vsel %vm527, %v3643, %v3645
      %3665 = vrot.lane.b32.xlu0 %v3468, 64
      %v3666 = vpop.permute.xlu0 %3665
      %3667 = vrot.lane.b32.xlu0 %v3469, 64
      %v3668 = vpop.permute.xlu0 %3667
      %3669 = vrot.lane.b32.xlu0 %v3471, 64
      %v3670 = vpop.permute.xlu0 %3669
      %3671 = vrot.lane.b32.xlu0 %v3472, 64
      %v3672 = vpop.permute.xlu0 %3671
      %3673 = vrot.lane.b32.xlu0 %v3474, 64
      %v3674 = vpop.permute.xlu0 %3673
      %3675 = vrot.lane.b32.xlu0 %v3475, 64
      %v3676 = vpop.permute.xlu0 %3675
      %3677 = vrot.lane.b32.xlu0 %v3477, 64
      %v3678 = vpop.permute.xlu0 %3677
      %3679 = vrot.lane.b32.xlu0 %v3478, 64
      %v3680 = vpop.permute.xlu0 %3679
      %3681 = vrot.lane.b32.xlu0 %v3480, 64
      %v3682 = vpop.permute.xlu0 %3681
      %3683 = vrot.lane.b32.xlu0 %v3481, 64
      %v3684 = vpop.permute.xlu0 %3683
      %3685 = vrot.lane.b32.xlu0 %v3483, 64
      %v3686 = vpop.permute.xlu0 %3685
      %3687 = vrot.lane.b32.xlu0 %v3484, 64
      %v3688 = vpop.permute.xlu0 %3687
      %3689 = vrot.lane.b32.xlu0 %v3486, 64
      %v3690 = vpop.permute.xlu0 %3689
      %3691 = vrot.lane.b32.xlu0 %v3487, 64
      %v3692 = vpop.permute.xlu0 %3691
      %3693 = vrot.lane.b32.xlu0 %v3489, 64
      %v3694 = vpop.permute.xlu0 %3693
      %3695 = vrot.lane.b32.xlu0 %v3490, 64
      %v3696 = vpop.permute.xlu0 %3695
      %v3714 = vrot.slane %v3489, 1
      %v3715 = vrot.slane %v3490, 1
      %v3716 = vsel %vm386, %v3714, %v3715
      %v3717 = vrot.slane %v3491, 1
      %v3718 = vsel %vm386, %v3715, %v3717
      %v3735 = vrot.slane %v3489, 2
      %v3736 = vrot.slane %v3490, 2
      %v3737 = vsel %vm527, %v3735, %v3736
      %v3738 = vrot.slane %v3491, 2
      %v3739 = vsel %vm527, %v3736, %v3738
      %3740 = vrot.lane.b32.xlu0 %v3614, 64
      %v3741 = vpop.permute.xlu0 %3740
      %3742 = vrot.lane.b32.xlu0 %v3616, 64
      %v3743 = vpop.permute.xlu0 %3742
      %3744 = vrot.lane.b32.xlu0 %v3619, 64
      %v3745 = vpop.permute.xlu0 %3744
      %3746 = vrot.lane.b32.xlu0 %v3621, 64
      %v3747 = vpop.permute.xlu0 %3746
      %3748 = vrot.lane.b32.xlu0 %v3624, 64
      %v3749 = vpop.permute.xlu0 %3748
      %3750 = vrot.lane.b32.xlu0 %v3626, 64
      %v3751 = vpop.permute.xlu0 %3750
      %3752 = vrot.lane.b32.xlu0 %v3629, 64
      %v3753 = vpop.permute.xlu0 %3752
      %3754 = vrot.lane.b32.xlu0 %v3631, 64
      %v3755 = vpop.permute.xlu0 %3754
      %3756 = vrot.lane.b32.xlu0 %v3634, 64
      %v3757 = vpop.permute.xlu0 %3756
      %3758 = vrot.lane.b32.xlu0 %v3636, 64
      %v3759 = vpop.permute.xlu0 %3758
      %3760 = vrot.lane.b32.xlu0 %v3639, 64
      %v3761 = vpop.permute.xlu0 %3760
      %3762 = vrot.lane.b32.xlu0 %v3641, 64
      %v3763 = vpop.permute.xlu0 %3762
      %3764 = vrot.lane.b32.xlu0 %v3644, 64
      %v3765 = vpop.permute.xlu0 %3764
      %3766 = vrot.lane.b32.xlu0 %v3646, 64
      %v3767 = vpop.permute.xlu0 %3766
      %3768 = vrot.lane.b32.xlu0 %v3737, 64
      %v3769 = vpop.permute.xlu0 %3768
      %3770 = vrot.lane.b32.xlu0 %v3739, 64
      %v3771 = vpop.permute.xlu0 %3770
      %v3791 = vrot.slane %v3492, 1
      %v3792 = vrot.slane %v3493, 1
      %v3793 = vsel %vm386, %v3791, %v3792
      %v3794 = vrot.slane %v3494, 1
      %v3795 = vsel %vm386, %v3792, %v3794
      %3796 = vrot.lane.b32.xlu0 %v3716, 64
      %v3797 = vpop.permute.xlu0 %3796
      %3798 = vrot.lane.b32.xlu0 %v3718, 64
      %v3799 = vpop.permute.xlu0 %3798
      %3800 = vrot.lane.b32.xlu0 %v3793, 64
      %v3801 = vpop.permute.xlu0 %3800
      %3802 = vrot.lane.b32.xlu0 %v3795, 64
      %v3803 = vpop.permute.xlu0 %3802
      %v3808 = vrot.slane %v3492, 2
      %v3809 = vrot.slane %v3493, 2
      %v3810 = vsel %vm527, %v3808, %v3809
      %v3811 = vrot.slane %v3494, 2
      %v3812 = vsel %vm527, %v3809, %v3811
      %vm3813 = vcmask 523264
      %v3814 = vsel %vm3813, %v3465, %v3560
      %v3815 = vsel %vm3813, %v3466, %v3562
      %v3816 = vsel %vm3813, %v3468, %v3564
      %v3817 = vsel %vm3813, %v3469, %v3566
      %v3818 = vsel %vm3813, %v3471, %v3568
      %v3819 = vsel %vm3813, %v3472, %v3570
      %v3820 = vsel %vm3813, %v3474, %v3572
      %v3821 = vsel %vm3813, %v3475, %v3574
      %v3822 = vsel %vm3813, %v3477, %v3576
      %v3823 = vsel %vm3813, %v3478, %v3578
      %v3824 = vsel %vm3813, %v3480, %v3580
      %v3825 = vsel %vm3813, %v3481, %v3582
      %v3826 = vsel %vm3813, %v3483, %v3584
      %v3827 = vsel %vm3813, %v3484, %v3586
      %v3828 = vsel %vm3813, %v3486, %v3588
      %v3829 = vsel %vm3813, %v3487, %v3590
      %v3830 = vsel %vm3813, %v3609, %v3666
      %v3831 = vsel %vm3813, %v3611, %v3668
      %v3832 = vsel %vm3813, %v3614, %v3670
      %v3833 = vsel %vm3813, %v3616, %v3672
      %v3834 = vsel %vm3813, %v3619, %v3674
      %v3835 = vsel %vm3813, %v3621, %v3676
      %v3836 = vsel %vm3813, %v3624, %v3678
      %v3837 = vsel %vm3813, %v3626, %v3680
      %v3838 = vsel %vm3813, %v3629, %v3682
      %v3839 = vsel %vm3813, %v3631, %v3684
      %v3840 = vsel %vm3813, %v3634, %v3686
      %v3841 = vsel %vm3813, %v3636, %v3688
      %v3842 = vsel %vm3813, %v3639, %v3690
      %v3843 = vsel %vm3813, %v3641, %v3692
      %v3844 = vsel %vm3813, %v3644, %v3694
      %v3845 = vsel %vm3813, %v3646, %v3696
      %v3846 = vsel %vm3813, %v3526, %v3741
      %v3847 = vsel %vm3813, %v3528, %v3743
      %v3848 = vsel %vm3813, %v3531, %v3745
      %v3849 = vsel %vm3813, %v3533, %v3747
      %v3850 = vsel %vm3813, %v3536, %v3749
      %v3851 = vsel %vm3813, %v3538, %v3751
      %v3852 = vsel %vm3813, %v3541, %v3753
      %v3853 = vsel %vm3813, %v3543, %v3755
      %v3854 = vsel %vm3813, %v3546, %v3757
      %v3855 = vsel %vm3813, %v3548, %v3759
      %v3856 = vsel %vm3813, %v3551, %v3761
      %v3857 = vsel %vm3813, %v3553, %v3763
      %v3858 = vsel %vm3813, %v3556, %v3765
      %v3859 = vsel %vm3813, %v3558, %v3767
      %v3860 = vsel %vm3813, %v3716, %v3769
      %v3861 = vsel %vm3813, %v3718, %v3771
      %v3862 = vsel %vm3813, %v3489, %v3797
      %v3863 = vsel %vm3813, %v3490, %v3799
      %v3864 = vsel %vm3813, %v3492, %v3801
      %v3865 = vsel %vm3813, %v3493, %v3803
      %v3866 = vld [vmem:[%s3] sm:$0xff]
      %v3867 = vld [vmem:[%s3 + $0x8] sm:$0xff]
      %v3868 = vld [vmem:[%s3 + $0x10] sm:$0xff]
      %v3869 = vld [vmem:[%s3 + $0x18] sm:$0xff]
      %v3870 = vld [vmem:[%s3 + $0x20] sm:$0xff]
      %v3871 = vld [vmem:[%s3 + $0x28] sm:$0xff]
      %v3872 = vld [vmem:[%s3 + $0x30] sm:$0xff]
      %v3873 = vld [vmem:[%s3 + $0x38] sm:$0xff]
      %v3874 = vld [vmem:[%s3 + $0x40] sm:$0xff]
      %v3875 = vld [vmem:[%s3 + $0x48] sm:$0xff]
      %v3876 = vld [vmem:[%s3 + $0x50] sm:$0xff]
      %v3877 = vld [vmem:[%s3 + $0x58] sm:$0xff]
      %v3878 = vld [vmem:[%s3 + $0x60] sm:$0xff]
      %v3879 = vld [vmem:[%s3 + $0x68] sm:$0xff]
      %v3880 = vld [vmem:[%s3 + $0x70] sm:$0xff]
      %v3881 = vld [vmem:[%s3 + $0x78] sm:$0xff]
      %v3882 = vld [vmem:[%s3 + $0x80] sm:$0xff]
      %v3883 = vld [vmem:[%s3 + $0x88] sm:$0xff]
      %v3884 = vld [vmem:[%s3 + $0x90] sm:$0xff]
      %v3885 = vld [vmem:[%s3 + $0x98] sm:$0xff]
      %v3886 = vld [vmem:[%s3 + $0xa0] sm:$0xff]
      %v3887 = vld [vmem:[%s3 + $0xa8] sm:$0xff]
      %v3888 = vld [vmem:[%s3 + $0xb0] sm:$0xff]
      %v3889 = vld [vmem:[%s3 + $0xb8] sm:$0xff]
      %v3890 = vld [vmem:[%s3 + $0xc0] sm:$0xff]
      %v3891 = vld [vmem:[%s3 + $0xc8] sm:$0xff]
      %v3892 = vld [vmem:[%s3 + $0xd0] sm:$0xff]
      %v3893 = vld [vmem:[%s3 + $0xd8] sm:$0xff]
      %v3894 = vld [vmem:[%s3 + $0xe0] sm:$0xff]
      %v3895 = vld [vmem:[%s3 + $0xe8] sm:$0xff]
      %v3896 = vld [vmem:[%s3 + $0xf0] sm:$0xff]
      %v3897 = vld [vmem:[%s3 + $0xf8] sm:$0xff]
      %v3898 = vld [vmem:[%s3 + $0x100] sm:$0xff]
      %v3899 = vld [vmem:[%s3 + $0x108] sm:$0xff]
      %v3900 = vld [vmem:[%s3 + $0x110] sm:$0xff]
      %v3901 = vld [vmem:[%s3 + $0x118] sm:$0xff]
      %v3902 = vld [vmem:[%s3 + $0x120] sm:$0xff]
      %v3903 = vld [vmem:[%s3 + $0x128] sm:$0xff]
      %v3904 = vld [vmem:[%s3 + $0x130] sm:$0xff]
      %v3905 = vld [vmem:[%s3 + $0x138] sm:$0xff]
      %v3906 = vld [vmem:[%s3 + $0x140] sm:$0xff]
      %v3907 = vld [vmem:[%s3 + $0x148] sm:$0xff]
      %v3908 = vld [vmem:[%s3 + $0x150] sm:$0xff]
      %v3909 = vld [vmem:[%s3 + $0x158] sm:$0xff]
      %v3910 = vld [vmem:[%s3 + $0x160] sm:$0xff]
      %v3911 = vld [vmem:[%s3 + $0x168] sm:$0xff]
      %v3912 = vld [vmem:[%s3 + $0x170] sm:$0xff]
      %v3913 = vld [vmem:[%s3 + $0x178] sm:$0xff]
      %v3914 = vld [vmem:[%s3 + $0x180] sm:$0xff]
      %v3915 = vld [vmem:[%s3 + $0x188] sm:$0xff]
      %v3916 = vld [vmem:[%s3 + $0x190] sm:$0xff]
      %v3917 = vld [vmem:[%s3 + $0x198] sm:$0xff]
      %v3918 = vld [vmem:[%s3 + $0x1a0] sm:$0xff]
      %v3919 = vld [vmem:[%s3 + $0x1a8] sm:$0xff]
      %v3920 = vld [vmem:[%s3 + $0x1b0] sm:$0xff]
      %v3921 = vld [vmem:[%s3 + $0x1b8] sm:$0xff]
      %v3922 = vld [vmem:[%s3 + $0x1c0] sm:$0xff]
      %v3923 = vld [vmem:[%s3 + $0x1c8] sm:$0xff]
      %v3924 = vld [vmem:[%s3 + $0x1d0] sm:$0xff]
      %v3925 = vld [vmem:[%s3 + $0x1d8] sm:$0xff]
      %v3926 = vld [vmem:[%s3 + $0x1e0] sm:$0xff]
      %v3927 = vld [vmem:[%s3 + $0x1e8] sm:$0xff]
      %v3928 = vld [vmem:[%s3 + $0x1f0] sm:$0xff]
      %v3929 = vld [vmem:[%s3 + $0x1f8] sm:$0xff]
      %v3930 = vld [vmem:[%s3 + $0x200] sm:$0xff]
      %v3931 = vld [vmem:[%s3 + $0x208] sm:$0xff]
      %v3932 = vld [vmem:[%s3 + $0x210] sm:$0xff]
      %v3933 = vld [vmem:[%s3 + $0x218] sm:$0xff]
      %v3934 = vld [vmem:[%s3 + $0x220] sm:$0xff]
      %v3935 = vld [vmem:[%s3 + $0x228] sm:$0xff]
      %v3936 = vld [vmem:[%s3 + $0x230] sm:$0xff]
      %v3937 = vld [vmem:[%s3 + $0x238] sm:$0xff]
      %v3938 = vld [vmem:[%s4] sm:$0x1]
      %v3940 = vlaneseq
      %v3941 = vshrl.u32 %v3940, 7
      %v3942 = vsub.s32 0, %v3941
      %v3943 = vrot.slane %v3938, %v3942
      %v3945 = vsel %vm3813, %v3619, 0
      %v3947 = vsel %vm3813, %v3621, 0
      %v3949 = vsel %vm3813, %v3624, 0
      %v3951 = vsel %vm3813, %v3626, 0
      %v3953 = vsel %vm3813, %v3629, 0
      %v3955 = vsel %vm3813, %v3631, 0
      %v3957 = vsel %vm3813, %v3634, 0
      %v3959 = vsel %vm3813, %v3636, 0
      %v3961 = vsel %vm3813, %v3639, 0
      %v3963 = vsel %vm3813, %v3641, 0
      %v3965 = vsel %vm3813, %v3644, 0
      %v3967 = vsel %vm3813, %v3646, 0
      %v3969 = vsel %vm3813, %v3737, 0
      %v3971 = vsel %vm3813, %v3739, 0
      %v3973 = vsel %vm3813, %v3810, 0
      %v3975 = vsel %vm3813, %v3812, 0
      %3977 = vmatprep.subr.mxu0 0.0
      %3978 = vmatpush1.msra.mxu0 %v3866
      %3979 = vmatprep.subr.mxu0 0.0
      %3980 = vmatpush1.msra.mxu0 %v3867
      %3981 = vmatprep.subr.mxu0 0.0
      %3982 = vmatpush1.msra.mxu0 %v3868
      %3983 = vmatprep.subr.mxu0 0.0
      %3984 = vmatpush1.msra.mxu0 %v3869
      %3985 = vmatprep.subr.mxu0 0.0
      %3986 = vmatpush1.msra.mxu0 %v3870
      %3987 = vmatprep.subr.mxu0 0.0
      %3988 = vmatpush1.msra.mxu0 %v3871
      %3989 = vmatprep.subr.mxu0 0.0
      %3990 = vmatpush1.msra.mxu0 %v3872
      %3991 = vmatprep.subr.mxu0 0.0
      %3992 = vmatpush1.msra.mxu0 %v3873
      %3993 = vmatprep.subr.mxu0 0.0
      %3994 = vmatpush1.msra.mxu0 %v3874
      %3995 = vmatprep.subr.mxu0 0.0
      %3996 = vmatpush1.msra.mxu0 %v3875
      %3997 = vmatprep.subr.mxu0 0.0
      %3998 = vmatpush1.msra.mxu0 %v3876
      %3999 = vmatprep.subr.mxu0 0.0
      %4000 = vmatpush1.msra.mxu0 %v3877
      %4001 = vmatprep.subr.mxu0 0.0
      %4002 = vmatpush1.msra.mxu0 %v3878
      %4003 = vmatprep.subr.mxu0 0.0
      %4004 = vmatpush1.msra.mxu0 %v3879
      %4005 = vmatprep.subr.mxu0 0.0
      %4006 = vmatpush1.msra.mxu0 %v3880
      %4007 = vmatprep.subr.mxu0 0.0
      %4008 = vmatpush1.msra.mxu0 %v3881
      %4009 = vmatprep.subr.mxu0 0.0
      %4010 = vmatpush1.msra.mxu0 %v3882
      %4011 = vmatprep.subr.mxu0 0.0
      %4012 = vmatpush1.msra.mxu0 %v3883
      %4013 = vmatprep.subr.mxu0 0.0
      %4014 = vmatpush1.msra.mxu0 %v3884
      %4015 = vmatprep.subr.mxu0 0.0
      %4016 = vmatpush1.msra.mxu0 %v3885
      %4017 = vmatprep.subr.mxu0 0.0
      %4018 = vmatpush1.msra.mxu0 %v3886
      %4019 = vmatprep.subr.mxu0 0.0
      %4020 = vmatpush1.msra.mxu0 %v3887
      %4021 = vmatprep.subr.mxu0 0.0
      %4022 = vmatpush1.msra.mxu0 %v3888
      %4023 = vmatprep.subr.mxu0 0.0
      %4024 = vmatpush1.msra.mxu0 %v3889
      %4025 = vmatprep.subr.mxu0 0.0
      %4026 = vmatpush1.msra.mxu0 %v3890
      %4027 = vmatprep.subr.mxu0 0.0
      %4028 = vmatpush1.msra.mxu0 %v3891
      %4029 = vmatprep.subr.mxu0 0.0
      %4030 = vmatpush1.msra.mxu0 %v3892
      %4031 = vmatprep.subr.mxu0 0.0
      %4032 = vmatpush1.msra.mxu0 %v3893
      %4033 = vmatprep.subr.mxu0 0.0
      %4034 = vmatpush1.msra.mxu0 %v3894
      %4035 = vmatprep.subr.mxu0 0.0
      %4036 = vmatpush1.msra.mxu0 %v3895
      %4037 = vmatprep.subr.mxu0 0.0
      %4038 = vmatpush1.msra.mxu0 %v3896
      %4039 = vmatprep.subr.mxu0 0.0
      %4040 = vmatpush1.msra.mxu0 %v3897
      %4041 = vmatprep.mubr.f32.mxu0 %v3830
      %4042 = vmatmul.mubr.f32.gmra.mrb[0].mxu0 %v3814
      %v4043 = vpop.f32.mrb[0].mxu0
      %v4044 = vadd.f32 %v3943, %v4043
      %v4045 = vpop.f32.mrb[0].mxu0
      %4046 = vmatprep.mubr.f32.mxu0 %v3831
      %4047 = vmatmul.mubr.f32.gmra.mrb[0].mxu0 %v3815
      %v4048 = vpop.f32.mrb[0].mxu0
      %v4049 = vadd.f32 %v3943, %v4048
      %v4050 = vpop.f32.mrb[0].mxu0
      %4051 = vmatprep.mubr.f32.mxu0 %v3832
      %4052 = vmatmul.mubr.f32.gmra.mrb[0].mxu0 %v3816
      %v4053 = vpop.f32.mrb[0].mxu0
      %v4054 = vadd.f32 %v3943, %v4053
      %v4055 = vpop.f32.mrb[0].mxu0
      %4056 = vmatprep.mubr.f32.mxu0 %v3833
      %4057 = vmatmul.mubr.f32.gmra.mrb[0].mxu0 %v3817
      %v4058 = vpop.f32.mrb[0].mxu0
      %v4059 = vadd.f32 %v3943, %v4058
      %v4060 = vpop.f32.mrb[0].mxu0
      %4061 = vmatprep.mubr.f32.mxu0 %v3834
      %4062 = vmatmul.mubr.f32.gmra.mrb[0].mxu0 %v3818
      %v4063 = vpop.f32.mrb[0].mxu0
      %v4064 = vadd.f32 %v3943, %v4063
      %v4065 = vpop.f32.mrb[0].mxu0
      %4066 = vmatprep.mubr.f32.mxu0 %v3835
      %4067 = vmatmul.mubr.f32.gmra.mrb[0].mxu0 %v3819
      %v4068 = vpop.f32.mrb[0].mxu0
      %v4069 = vadd.f32 %v3943, %v4068
      %v4070 = vpop.f32.mrb[0].mxu0
      %4071 = vmatprep.mubr.f32.mxu0 %v3836
      %4072 = vmatmul.mubr.f32.gmra.mrb[0].mxu0 %v3820
      %v4073 = vpop.f32.mrb[0].mxu0
      %v4074 = vadd.f32 %v3943, %v4073
      %v4075 = vpop.f32.mrb[0].mxu0
      %4076 = vmatprep.mubr.f32.mxu0 %v3837
      %4077 = vmatmul.mubr.f32.gmra.mrb[0].mxu0 %v3821
      %v4078 = vpop.f32.mrb[0].mxu0
      %v4079 = vadd.f32 %v3943, %v4078
      %v4080 = vpop.f32.mrb[0].mxu0
      %4081 = vmatprep.mubr.f32.mxu0 %v3838
      %4082 = vmatmul.mubr.f32.gmra.mrb[0].mxu0 %v3822
      %v4083 = vpop.f32.mrb[0].mxu0
      %v4084 = vadd.f32 %v3943, %v4083
      %v4085 = vpop.f32.mrb[0].mxu0
      %4086 = vmatprep.mubr.f32.mxu0 %v3839
      %4087 = vmatmul.mubr.f32.gmra.mrb[0].mxu0 %v3823
      %v4088 = vpop.f32.mrb[0].mxu0
      %v4089 = vadd.f32 %v3943, %v4088
      %v4090 = vpop.f32.mrb[0].mxu0
      %4091 = vmatprep.mubr.f32.mxu0 %v3840
      %4092 = vmatmul.mubr.f32.gmra.mrb[0].mxu0 %v3824
      %v4093 = vpop.f32.mrb[0].mxu0
      %v4094 = vadd.f32 %v3943, %v4093
      %v4095 = vpop.f32.mrb[0].mxu0
      %4096 = vmatprep.mubr.f32.mxu0 %v3841
      %4097 = vmatmul.mubr.f32.gmra.mrb[0].mxu0 %v3825
      %v4098 = vpop.f32.mrb[0].mxu0
      %v4099 = vadd.f32 %v3943, %v4098
      %v4100 = vpop.f32.mrb[0].mxu0
      %4101 = vmatprep.mubr.f32.mxu0 %v3842
      %4102 = vmatmul.mubr.f32.gmra.mrb[0].mxu0 %v3826
      %v4103 = vpop.f32.mrb[0].mxu0
      %v4104 = vadd.f32 %v3943, %v4103
      %v4105 = vpop.f32.mrb[0].mxu0
      %4106 = vmatprep.mubr.f32.mxu0 %v3843
      %4107 = vmatmul.mubr.f32.gmra.mrb[0].mxu0 %v3827
      %v4108 = vpop.f32.mrb[0].mxu0
      %v4109 = vadd.f32 %v3943, %v4108
      %v4110 = vpop.f32.mrb[0].mxu0
      %4111 = vmatprep.mubr.f32.mxu0 %v3844
      %4112 = vmatmul.mubr.f32.gmra.mrb[0].mxu0 %v3828
      %v4113 = vpop.f32.mrb[0].mxu0
      %v4114 = vadd.f32 %v3943, %v4113
      %v4115 = vpop.f32.mrb[0].mxu0
      %4116 = vmatprep.mubr.f32.mxu0 %v3845
      %4117 = vmatmul.mubr.f32.gmra.mrb[0].mxu0 %v3829
      %v4118 = vpop.f32.mrb[0].mxu0
      %v4119 = vadd.f32 %v3943, %v4118
      %v4120 = vpop.f32.mrb[0].mxu0
      %4121 = vdwg.mxu0
      %4122 = vmatprep.subr.mxu0 0.0
      %4123 = vmatpush1.msra.mxu0 %v3898
      %4124 = vmatprep.subr.mxu0 0.0
      %4125 = vmatpush1.msra.mxu0 %v3899
      %4126 = vmatprep.subr.mxu0 0.0
      %4127 = vmatpush1.msra.mxu0 %v3900
      %4128 = vmatprep.subr.mxu0 0.0
      %4129 = vmatpush1.msra.mxu0 %v3901
      %4130 = vmatprep.subr.mxu0 0.0
      %4131 = vmatpush1.msra.mxu0 %v3902
      %4132 = vmatprep.subr.mxu0 0.0
      %4133 = vmatpush1.msra.mxu0 %v3903
      %4134 = vmatprep.subr.mxu0 0.0
      %4135 = vmatpush1.msra.mxu0 %v3904
      %4136 = vmatprep.subr.mxu0 0.0
      %4137 = vmatpush1.msra.mxu0 %v3905
      %4138 = vmatprep.subr.mxu0 0.0
      %4139 = vmatpush1.msra.mxu0 %v3906
      %4140 = vmatprep.subr.mxu0 0.0
      %4141 = vmatpush1.msra.mxu0 %v3907
      %4142 = vmatprep.subr.mxu0 0.0
      %4143 = vmatpush1.msra.mxu0 %v3908
      %4144 = vmatprep.subr.mxu0 0.0
      %4145 = vmatpush1.msra.mxu0 %v3909
      %4146 = vmatprep.subr.mxu0 0.0
      %4147 = vmatpush1.msra.mxu0 %v3910
      %4148 = vmatprep.subr.mxu0 0.0
      %4149 = vmatpush1.msra.mxu0 %v3911
      %4150 = vmatprep.subr.mxu0 0.0
      %4151 = vmatpush1.msra.mxu0 %v3912
      %4152 = vmatprep.subr.mxu0 0.0
      %4153 = vmatpush1.msra.mxu0 %v3913
      %4154 = vmatprep.subr.mxu0 0.0
      %4155 = vmatpush1.msra.mxu0 %v3914
      %4156 = vmatprep.subr.mxu0 0.0
      %4157 = vmatpush1.msra.mxu0 %v3915
      %4158 = vmatprep.subr.mxu0 0.0
      %4159 = vmatpush1.msra.mxu0 %v3916
      %4160 = vmatprep.subr.mxu0 0.0
      %4161 = vmatpush1.msra.mxu0 %v3917
      %4162 = vmatprep.subr.mxu0 0.0
      %4163 = vmatpush1.msra.mxu0 %v3918
      %4164 = vmatprep.subr.mxu0 0.0
      %4165 = vmatpush1.msra.mxu0 %v3919
      %4166 = vmatprep.subr.mxu0 0.0
      %4167 = vmatpush1.msra.mxu0 %v3920
      %4168 = vmatprep.subr.mxu0 0.0
      %4169 = vmatpush1.msra.mxu0 %v3921
      %4170 = vmatprep.subr.mxu0 0.0
      %4171 = vmatpush1.msra.mxu0 %v3922
      %4172 = vmatprep.subr.mxu0 0.0
      %4173 = vmatpush1.msra.mxu0 %v3923
      %4174 = vmatprep.subr.mxu0 0.0
      %4175 = vmatpush1.msra.mxu0 %v3924
      %4176 = vmatprep.subr.mxu0 0.0
      %4177 = vmatpush1.msra.mxu0 %v3925
      %4178 = vmatprep.subr.mxu0 0.0
      %4179 = vmatpush1.msra.mxu0 %v3926
      %4180 = vmatprep.subr.mxu0 0.0
      %4181 = vmatpush1.msra.mxu0 %v3927
      %4182 = vmatprep.subr.mxu0 0.0
      %4183 = vmatpush1.msra.mxu0 %v3928
      %4184 = vmatprep.subr.mxu0 0.0
      %4185 = vmatpush1.msra.mxu0 %v3929
      %4186 = vmatprep.mubr.f32.mxu0 %v3818
      %4187 = vmatmul.mubr.f32.gmra.mrb[0].mxu0 %v3846
      %v4188 = vpop.f32.mrb[0].mxu0
      %v4189 = vadd.f32 %v4044, %v4188
      %v4190 = vpop.f32.mrb[0].mxu0
      %4191 = vmatprep.mubr.f32.mxu0 %v3819
      %4192 = vmatmul.mubr.f32.gmra.mrb[0].mxu0 %v3847
      %v4193 = vpop.f32.mrb[0].mxu0
      %v4194 = vadd.f32 %v4049, %v4193
      %v4195 = vpop.f32.mrb[0].mxu0
      %4196 = vmatprep.mubr.f32.mxu0 %v3820
      %4197 = vmatmul.mubr.f32.gmra.mrb[0].mxu0 %v3848
      %v4198 = vpop.f32.mrb[0].mxu0
      %v4199 = vadd.f32 %v4054, %v4198
      %v4200 = vpop.f32.mrb[0].mxu0
      %4201 = vmatprep.mubr.f32.mxu0 %v3821
      %4202 = vmatmul.mubr.f32.gmra.mrb[0].mxu0 %v3849
      %v4203 = vpop.f32.mrb[0].mxu0
      %v4204 = vadd.f32 %v4059, %v4203
      %v4205 = vpop.f32.mrb[0].mxu0
      %4206 = vmatprep.mubr.f32.mxu0 %v3822
      %4207 = vmatmul.mubr.f32.gmra.mrb[0].mxu0 %v3850
      %v4208 = vpop.f32.mrb[0].mxu0
      %v4209 = vadd.f32 %v4064, %v4208
      %v4210 = vpop.f32.mrb[0].mxu0
      %4211 = vmatprep.mubr.f32.mxu0 %v3823
      %4212 = vmatmul.mubr.f32.gmra.mrb[0].mxu0 %v3851
      %v4213 = vpop.f32.mrb[0].mxu0
      %v4214 = vadd.f32 %v4069, %v4213
      %v4215 = vpop.f32.mrb[0].mxu0
      %4216 = vmatprep.mubr.f32.mxu0 %v3824
      %4217 = vmatmul.mubr.f32.gmra.mrb[0].mxu0 %v3852
      %v4218 = vpop.f32.mrb[0].mxu0
      %v4219 = vadd.f32 %v4074, %v4218
      %v4220 = vpop.f32.mrb[0].mxu0
      %4221 = vmatprep.mubr.f32.mxu0 %v3825
      %4222 = vmatmul.mubr.f32.gmra.mrb[0].mxu0 %v3853
      %v4223 = vpop.f32.mrb[0].mxu0
      %v4224 = vadd.f32 %v4079, %v4223
      %v4225 = vpop.f32.mrb[0].mxu0
      %4226 = vmatprep.mubr.f32.mxu0 %v3826
      %4227 = vmatmul.mubr.f32.gmra.mrb[0].mxu0 %v3854
      %v4228 = vpop.f32.mrb[0].mxu0
      %v4229 = vadd.f32 %v4084, %v4228
      %v4230 = vpop.f32.mrb[0].mxu0
      %4231 = vmatprep.mubr.f32.mxu0 %v3827
      %4232 = vmatmul.mubr.f32.gmra.mrb[0].mxu0 %v3855
      %v4233 = vpop.f32.mrb[0].mxu0
      %v4234 = vadd.f32 %v4089, %v4233
      %v4235 = vpop.f32.mrb[0].mxu0
      %4236 = vmatprep.mubr.f32.mxu0 %v3828
      %4237 = vmatmul.mubr.f32.gmra.mrb[0].mxu0 %v3856
      %v4238 = vpop.f32.mrb[0].mxu0
      %v4239 = vadd.f32 %v4094, %v4238
      %v4240 = vpop.f32.mrb[0].mxu0
      %4241 = vmatprep.mubr.f32.mxu0 %v3829
      %4242 = vmatmul.mubr.f32.gmra.mrb[0].mxu0 %v3857
      %v4243 = vpop.f32.mrb[0].mxu0
      %v4244 = vadd.f32 %v4099, %v4243
      %v4245 = vpop.f32.mrb[0].mxu0
      %4246 = vmatprep.mubr.f32.mxu0 %v3862
      %4247 = vmatmul.mubr.f32.gmra.mrb[0].mxu0 %v3858
      %v4248 = vpop.f32.mrb[0].mxu0
      %v4249 = vadd.f32 %v4104, %v4248
      %v4250 = vpop.f32.mrb[0].mxu0
      %4251 = vmatprep.mubr.f32.mxu0 %v3863
      %4252 = vmatmul.mubr.f32.gmra.mrb[0].mxu0 %v3859
      %v4253 = vpop.f32.mrb[0].mxu0
      %v4254 = vadd.f32 %v4109, %v4253
      %v4255 = vpop.f32.mrb[0].mxu0
      %4256 = vmatprep.mubr.f32.mxu0 %v3864
      %4257 = vmatmul.mubr.f32.gmra.mrb[0].mxu0 %v3860
      %v4258 = vpop.f32.mrb[0].mxu0
      %v4259 = vadd.f32 %v4114, %v4258
      %v4260 = vpop.f32.mrb[0].mxu0
      %4261 = vmatprep.mubr.f32.mxu0 %v3865
      %4262 = vmatmul.mubr.f32.gmra.mrb[0].mxu0 %v3861
      %v4263 = vpop.f32.mrb[0].mxu0
      %v4264 = vadd.f32 %v4119, %v4263
      %v4265 = vpop.f32.mrb[0].mxu0
      %4266 = vdwg.mxu0
      %4267 = vmatprep.subr.mxu0 0.0
      %4268 = vmatpush1.msra.mxu0 %v3930
      %4269 = vmatprep.subr.mxu0 0.0
      %4270 = vmatpush1.msra.mxu0 %v3931
      %4271 = vmatprep.subr.mxu0 0.0
      %4272 = vmatpush1.msra.mxu0 %v3932
      %4273 = vmatprep.subr.mxu0 0.0
      %4274 = vmatpush1.msra.mxu0 %v3933
      %4275 = vmatprep.subr.mxu0 0.0
      %4276 = vmatpush1.msra.mxu0 %v3934
      %4277 = vmatprep.subr.mxu0 0.0
      %4278 = vmatpush1.msra.mxu0 %v3935
      %4279 = vmatprep.subr.mxu0 0.0
      %4280 = vmatpush1.msra.mxu0 %v3936
      %4281 = vmatprep.subr.mxu0 0.0
      %4282 = vmatpush1.msra.mxu0 %v3937
      %4283 = vmatprep.subr.mxu0 0.0
      %4284 = vmatpush1.msra.mxu0 0.0
      %4285 = vmatprep.subr.mxu0 0.0
      %4286 = vmatpush1.msra.mxu0 0.0
      %4287 = vmatprep.subr.mxu0 0.0
      %4288 = vmatpush1.msra.mxu0 0.0
      %4289 = vmatprep.subr.mxu0 0.0
      %4290 = vmatpush1.msra.mxu0 0.0
      %4291 = vmatprep.subr.mxu0 0.0
      %4292 = vmatpush1.msra.mxu0 0.0
      %4293 = vmatprep.subr.mxu0 0.0
      %4294 = vmatpush1.msra.mxu0 0.0
      %4295 = vmatprep.subr.mxu0 0.0
      %4296 = vmatpush1.msra.mxu0 0.0
      %4297 = vmatprep.subr.mxu0 0.0
      %4298 = vmatpush1.msra.mxu0 0.0
      %4299 = vmatprep.subr.mxu0 0.0
      %4300 = vmatpush1.msra.mxu0 0.0
      %4301 = vmatprep.subr.mxu0 0.0
      %4302 = vmatpush1.msra.mxu0 0.0
      %4303 = vmatprep.subr.mxu0 0.0
      %4304 = vmatpush1.msra.mxu0 0.0
      %4305 = vmatprep.subr.mxu0 0.0
      %4306 = vmatpush1.msra.mxu0 0.0
      %4307 = vmatprep.subr.mxu0 0.0
      %4308 = vmatpush1.msra.mxu0 0.0
      %4309 = vmatprep.subr.mxu0 0.0
      %4310 = vmatpush1.msra.mxu0 0.0
      %4311 = vmatprep.subr.mxu0 0.0
      %4312 = vmatpush1.msra.mxu0 0.0
      %4313 = vmatprep.subr.mxu0 0.0
      %4314 = vmatpush1.msra.mxu0 0.0
      %4315 = vmatprep.subr.mxu0 0.0
      %4316 = vmatpush1.msra.mxu0 0.0
      %4317 = vmatprep.subr.mxu0 0.0
      %4318 = vmatpush1.msra.mxu0 0.0
      %4319 = vmatprep.subr.mxu0 0.0
      %4320 = vmatpush1.msra.mxu0 0.0
      %4321 = vmatprep.subr.mxu0 0.0
      %4322 = vmatpush1.msra.mxu0 0.0
      %4323 = vmatprep.subr.mxu0 0.0
      %4324 = vmatpush1.msra.mxu0 0.0
      %4325 = vmatprep.subr.mxu0 0.0
      %4326 = vmatpush1.msra.mxu0 0.0
      %4327 = vmatprep.subr.mxu0 0.0
      %4328 = vmatpush1.msra.mxu0 0.0
      %4329 = vmatprep.subr.mxu0 0.0
      %4330 = vmatpush1.msra.mxu0 0.0
      %4331 = vmatprep.mubr.f32.mxu0 0.0
      %4332 = vmatmul.mubr.f32.gmra.mrb[0].mxu0 %v3945
      %v4333 = vpop.f32.mrb[0].mxu0
      %v4334 = vadd.f32 %v4189, %v4333
      %v4335 = vpop.f32.mrb[0].mxu0
      %4336 = vmatprep.mubr.f32.mxu0 0.0
      %4337 = vmatmul.mubr.f32.gmra.mrb[0].mxu0 %v3947
      %v4338 = vpop.f32.mrb[0].mxu0
      %v4339 = vadd.f32 %v4194, %v4338
      %v4340 = vpop.f32.mrb[0].mxu0
      %4341 = vmatprep.mubr.f32.mxu0 0.0
      %4342 = vmatmul.mubr.f32.gmra.mrb[0].mxu0 %v3949
      %v4343 = vpop.f32.mrb[0].mxu0
      %v4344 = vadd.f32 %v4199, %v4343
      %v4345 = vpop.f32.mrb[0].mxu0
      %4346 = vmatprep.mubr.f32.mxu0 0.0
      %4347 = vmatmul.mubr.f32.gmra.mrb[0].mxu0 %v3951
      %v4348 = vpop.f32.mrb[0].mxu0
      %v4349 = vadd.f32 %v4204, %v4348
      %v4350 = vpop.f32.mrb[0].mxu0
      %4351 = vmatprep.mubr.f32.mxu0 0.0
      %4352 = vmatmul.mubr.f32.gmra.mrb[0].mxu0 %v3953
      %v4353 = vpop.f32.mrb[0].mxu0
      %v4354 = vadd.f32 %v4209, %v4353
      %v4355 = vpop.f32.mrb[0].mxu0
      %4356 = vmatprep.mubr.f32.mxu0 0.0
      %4357 = vmatmul.mubr.f32.gmra.mrb[0].mxu0 %v3955
      %v4358 = vpop.f32.mrb[0].mxu0
      %v4359 = vadd.f32 %v4214, %v4358
      %v4360 = vpop.f32.mrb[0].mxu0
      %4361 = vmatprep.mubr.f32.mxu0 0.0
      %4362 = vmatmul.mubr.f32.gmra.mrb[0].mxu0 %v3957
      %v4363 = vpop.f32.mrb[0].mxu0
      %v4364 = vadd.f32 %v4219, %v4363
      %v4365 = vpop.f32.mrb[0].mxu0
      %4366 = vmatprep.mubr.f32.mxu0 0.0
      %4367 = vmatmul.mubr.f32.gmra.mrb[0].mxu0 %v3959
      %v4368 = vpop.f32.mrb[0].mxu0
      %v4369 = vadd.f32 %v4224, %v4368
      %v4370 = vpop.f32.mrb[0].mxu0
      %4371 = vmatprep.mubr.f32.mxu0 0.0
      %4372 = vmatmul.mubr.f32.gmra.mrb[0].mxu0 %v3961
      %v4373 = vpop.f32.mrb[0].mxu0
      %v4374 = vadd.f32 %v4229, %v4373
      %v4375 = vpop.f32.mrb[0].mxu0
      %4376 = vmatprep.mubr.f32.mxu0 0.0
      %4377 = vmatmul.mubr.f32.gmra.mrb[0].mxu0 %v3963
      %v4378 = vpop.f32.mrb[0].mxu0
      %v4379 = vadd.f32 %v4234, %v4378
      %v4380 = vpop.f32.mrb[0].mxu0
      %4381 = vmatprep.mubr.f32.mxu0 0.0
      %4382 = vmatmul.mubr.f32.gmra.mrb[0].mxu0 %v3965
      %v4383 = vpop.f32.mrb[0].mxu0
      %v4384 = vadd.f32 %v4239, %v4383
      %v4385 = vpop.f32.mrb[0].mxu0
      %4386 = vmatprep.mubr.f32.mxu0 0.0
      %4387 = vmatmul.mubr.f32.gmra.mrb[0].mxu0 %v3967
      %v4388 = vpop.f32.mrb[0].mxu0
      %v4389 = vadd.f32 %v4244, %v4388
      %v4390 = vpop.f32.mrb[0].mxu0
      %4391 = vmatprep.mubr.f32.mxu0 0.0
      %4392 = vmatmul.mubr.f32.gmra.mrb[0].mxu0 %v3969
      %v4393 = vpop.f32.mrb[0].mxu0
      %v4394 = vadd.f32 %v4249, %v4393
      %v4395 = vpop.f32.mrb[0].mxu0
      %4396 = vmatprep.mubr.f32.mxu0 0.0
      %4397 = vmatmul.mubr.f32.gmra.mrb[0].mxu0 %v3971
      %v4398 = vpop.f32.mrb[0].mxu0
      %v4399 = vadd.f32 %v4254, %v4398
      %v4400 = vpop.f32.mrb[0].mxu0
      %4401 = vmatprep.mubr.f32.mxu0 0.0
      %4402 = vmatmul.mubr.f32.gmra.mrb[0].mxu0 %v3973
      %v4403 = vpop.f32.mrb[0].mxu0
      %v4404 = vadd.f32 %v4259, %v4403
      %v4405 = vpop.f32.mrb[0].mxu0
      %4406 = vmatprep.mubr.f32.mxu0 0.0
      %4407 = vmatmul.mubr.f32.gmra.mrb[0].mxu0 %v3975
      %v4408 = vpop.f32.mrb[0].mxu0
      %v4409 = vadd.f32 %v4264, %v4408
      %v4410 = vpop.f32.mrb[0].mxu0
      %4411 = vdwg.mxu0
      %v4412 = vmax.f32 %v4334, 0.0
      %v4413 = vmax.f32 %v4339, 0.0
      %v4414 = vmax.f32 %v4344, 0.0
      %v4415 = vmax.f32 %v4349, 0.0
      %v4416 = vmax.f32 %v4354, 0.0
      %v4417 = vmax.f32 %v4359, 0.0
      %v4418 = vmax.f32 %v4364, 0.0
      %v4419 = vmax.f32 %v4369, 0.0
      %v4420 = vmax.f32 %v4374, 0.0
      %v4421 = vmax.f32 %v4379, 0.0
      %v4422 = vmax.f32 %v4384, 0.0
      %v4423 = vmax.f32 %v4389, 0.0
      %v4424 = vmax.f32 %v4394, 0.0
      %v4425 = vmax.f32 %v4399, 0.0
      %v4426 = vmax.f32 %v4404, 0.0
      %v4427 = vmax.f32 %v4409, 0.0
      %v4428 = vld [vmem:[%s5] sm:$0xff]
      %v4429 = vld [vmem:[%s5 + $0x8] sm:$0xff]
      %v4430 = vld [vmem:[%s5 + $0x10] sm:$0xff]
      %v4431 = vld [vmem:[%s5 + $0x18] sm:$0xff]
      %v4432 = vld [vmem:[#allocation2] sm:$0x1]
      %v4434 = vlaneseq
      %v4435 = vshrl.u32 %v4434, 7
      %v4436 = vsub.s32 0, %v4435
      %v4437 = vrot.slane %v4432, %v4436
      %vm4439 = vcmask 261120
      %v4441 = vsel %vm4439, %v4412, 0
      %v4444 = vsel %vm4439, %v4413, 0
      %v4447 = vsel %vm4439, %v4414, 0
      %v4450 = vsel %vm4439, %v4415, 0
      %v4453 = vsel %vm4439, %v4416, 0
      %v4456 = vsel %vm4439, %v4417, 0
      %v4459 = vsel %vm4439, %v4418, 0
      %v4462 = vsel %vm4439, %v4419, 0
      %v4465 = vsel %vm4439, %v4420, 0
      %v4468 = vsel %vm4439, %v4421, 0
      %v4471 = vsel %vm4439, %v4422, 0
      %v4474 = vsel %vm4439, %v4423, 0
      %v4477 = vsel %vm4439, %v4424, 0
      %v4480 = vsel %vm4439, %v4425, 0
      %v4483 = vsel %vm4439, %v4426, 0
      %v4486 = vsel %vm4439, %v4427, 0
      %4488 = vmatprep.subr.mxu0 0.0
      %4489 = vmatpush1.msra.mxu0 %v4428
      %4490 = vmatprep.subr.mxu0 0.0
      %4491 = vmatpush1.msra.mxu0 %v4429
      %4492 = vmatprep.subr.mxu0 0.0
      %4493 = vmatpush1.msra.mxu0 %v4430
      %4494 = vmatprep.subr.mxu0 0.0
      %4495 = vmatpush1.msra.mxu0 %v4431
      %4496 = vmatprep.subr.mxu0 0.0
      %4497 = vmatpush1.msra.mxu0 0.0
      %4498 = vmatprep.subr.mxu0 0.0
      %4499 = vmatpush1.msra.mxu0 0.0
      %4500 = vmatprep.subr.mxu0 0.0
      %4501 = vmatpush1.msra.mxu0 0.0
      %4502 = vmatprep.subr.mxu0 0.0
      %4503 = vmatpush1.msra.mxu0 0.0
      %4504 = vmatprep.subr.mxu0 0.0
      %4505 = vmatpush1.msra.mxu0 0.0
      %4506 = vmatprep.subr.mxu0 0.0
      %4507 = vmatpush1.msra.mxu0 0.0
      %4508 = vmatprep.subr.mxu0 0.0
      %4509 = vmatpush1.msra.mxu0 0.0
      %4510 = vmatprep.subr.mxu0 0.0
      %4511 = vmatpush1.msra.mxu0 0.0
      %4512 = vmatprep.subr.mxu0 0.0
      %4513 = vmatpush1.msra.mxu0 0.0
      %4514 = vmatprep.subr.mxu0 0.0
      %4515 = vmatpush1.msra.mxu0 0.0
      %4516 = vmatprep.subr.mxu0 0.0
      %4517 = vmatpush1.msra.mxu0 0.0
      %4518 = vmatprep.subr.mxu0 0.0
      %4519 = vmatpush1.msra.mxu0 0.0
      %4520 = vmatprep.subr.mxu0 0.0
      %4521 = vmatpush1.msra.mxu0 0.0
      %4522 = vmatprep.subr.mxu0 0.0
      %4523 = vmatpush1.msra.mxu0 0.0
      %4524 = vmatprep.subr.mxu0 0.0
      %4525 = vmatpush1.msra.mxu0 0.0
      %4526 = vmatprep.subr.mxu0 0.0
      %4527 = vmatpush1.msra.mxu0 0.0
      %4528 = vmatprep.subr.mxu0 0.0
      %4529 = vmatpush1.msra.mxu0 0.0
      %4530 = vmatprep.subr.mxu0 0.0
      %4531 = vmatpush1.msra.mxu0 0.0
      %4532 = vmatprep.subr.mxu0 0.0
      %4533 = vmatpush1.msra.mxu0 0.0
      %4534 = vmatprep.subr.mxu0 0.0
      %4535 = vmatpush1.msra.mxu0 0.0
      %4536 = vmatprep.subr.mxu0 0.0
      %4537 = vmatpush1.msra.mxu0 0.0
      %4538 = vmatprep.subr.mxu0 0.0
      %4539 = vmatpush1.msra.mxu0 0.0
      %4540 = vmatprep.subr.mxu0 0.0
      %4541 = vmatpush1.msra.mxu0 0.0
      %4542 = vmatprep.subr.mxu0 0.0
      %4543 = vmatpush1.msra.mxu0 0.0
      %4544 = vmatprep.subr.mxu0 0.0
      %4545 = vmatpush1.msra.mxu0 0.0
      %4546 = vmatprep.subr.mxu0 0.0
      %4547 = vmatpush1.msra.mxu0 0.0
      %4548 = vmatprep.subr.mxu0 0.0
      %4549 = vmatpush1.msra.mxu0 0.0
      %4550 = vmatprep.subr.mxu0 0.0
      %4551 = vmatpush1.msra.mxu0 0.0
      %4552 = vmatprep.mubr.f32.mxu0 0.0
      %4553 = vmatmul.mubr.f32.gmra.mrb[0].mxu0 %v4441
      %v4554 = vpop.f32.mrb[0].mxu0
      %v4555 = vadd.f32 %v4437, %v4554
      %v4556 = vpop.f32.mrb[0].mxu0
      %4557 = vmatprep.mubr.f32.mxu0 0.0
      %4558 = vmatmul.mubr.f32.gmra.mrb[0].mxu0 %v4444
      %v4559 = vpop.f32.mrb[0].mxu0
      %v4560 = vadd.f32 %v4437, %v4559
      %v4561 = vpop.f32.mrb[0].mxu0
      %4562 = vmatprep.mubr.f32.mxu0 0.0
      %4563 = vmatmul.mubr.f32.gmra.mrb[0].mxu0 %v4447
      %v4564 = vpop.f32.mrb[0].mxu0
      %v4565 = vadd.f32 %v4437, %v4564
      %v4566 = vpop.f32.mrb[0].mxu0
      %4567 = vmatprep.mubr.f32.mxu0 0.0
      %4568 = vmatmul.mubr.f32.gmra.mrb[0].mxu0 %v4450
      %v4569 = vpop.f32.mrb[0].mxu0
      %v4570 = vadd.f32 %v4437, %v4569
      %v4571 = vpop.f32.mrb[0].mxu0
      %4572 = vmatprep.mubr.f32.mxu0 0.0
      %4573 = vmatmul.mubr.f32.gmra.mrb[0].mxu0 %v4453
      %v4574 = vpop.f32.mrb[0].mxu0
      %v4575 = vadd.f32 %v4437, %v4574
      %v4576 = vpop.f32.mrb[0].mxu0
      %4577 = vmatprep.mubr.f32.mxu0 0.0
      %4578 = vmatmul.mubr.f32.gmra.mrb[0].mxu0 %v4456
      %v4579 = vpop.f32.mrb[0].mxu0
      %v4580 = vadd.f32 %v4437, %v4579
      %v4581 = vpop.f32.mrb[0].mxu0
      %4582 = vmatprep.mubr.f32.mxu0 0.0
      %4583 = vmatmul.mubr.f32.gmra.mrb[0].mxu0 %v4459
      %v4584 = vpop.f32.mrb[0].mxu0
      %v4585 = vadd.f32 %v4437, %v4584
      %v4586 = vpop.f32.mrb[0].mxu0
      %4587 = vmatprep.mubr.f32.mxu0 0.0
      %4588 = vmatmul.mubr.f32.gmra.mrb[0].mxu0 %v4462
      %v4589 = vpop.f32.mrb[0].mxu0
      %v4590 = vadd.f32 %v4437, %v4589
      %v4591 = vpop.f32.mrb[0].mxu0
      %4592 = vmatprep.mubr.f32.mxu0 0.0
      %4593 = vmatmul.mubr.f32.gmra.mrb[0].mxu0 %v4465
      %v4594 = vpop.f32.mrb[0].mxu0
      %v4595 = vadd.f32 %v4437, %v4594
      %v4596 = vpop.f32.mrb[0].mxu0
      %4597 = vmatprep.mubr.f32.mxu0 0.0
      %4598 = vmatmul.mubr.f32.gmra.mrb[0].mxu0 %v4468
      %v4599 = vpop.f32.mrb[0].mxu0
      %v4600 = vadd.f32 %v4437, %v4599
      %v4601 = vpop.f32.mrb[0].mxu0
      %4602 = vmatprep.mubr.f32.mxu0 0.0
      %4603 = vmatmul.mubr.f32.gmra.mrb[0].mxu0 %v4471
      %v4604 = vpop.f32.mrb[0].mxu0
      %v4605 = vadd.f32 %v4437, %v4604
      %v4606 = vpop.f32.mrb[0].mxu0
      %4607 = vmatprep.mubr.f32.mxu0 0.0
      %4608 = vmatmul.mubr.f32.gmra.mrb[0].mxu0 %v4474
      %v4609 = vpop.f32.mrb[0].mxu0
      %v4610 = vadd.f32 %v4437, %v4609
      %v4611 = vpop.f32.mrb[0].mxu0
      %4612 = vmatprep.mubr.f32.mxu0 0.0
      %4613 = vmatmul.mubr.f32.gmra.mrb[0].mxu0 %v4477
      %v4614 = vpop.f32.mrb[0].mxu0
      %v4615 = vadd.f32 %v4437, %v4614
      %v4616 = vpop.f32.mrb[0].mxu0
      %4617 = vmatprep.mubr.f32.mxu0 0.0
      %4618 = vmatmul.mubr.f32.gmra.mrb[0].mxu0 %v4480
      %v4619 = vpop.f32.mrb[0].mxu0
      %v4620 = vadd.f32 %v4437, %v4619
      %v4621 = vpop.f32.mrb[0].mxu0
      %4622 = vmatprep.mubr.f32.mxu0 0.0
      %4623 = vmatmul.mubr.f32.gmra.mrb[0].mxu0 %v4483
      %v4624 = vpop.f32.mrb[0].mxu0
      %v4625 = vadd.f32 %v4437, %v4624
      %v4626 = vpop.f32.mrb[0].mxu0
      %4627 = vmatprep.mubr.f32.mxu0 0.0
      %4628 = vmatmul.mubr.f32.gmra.mrb[0].mxu0 %v4486
      %v4629 = vpop.f32.mrb[0].mxu0
      %v4630 = vadd.f32 %v4437, %v4629
      %v4631 = vpop.f32.mrb[0].mxu0
      %4632 = vdwg.mxu0
      %v4633 = vxor.u32 %v4555, 2147483648
      %v4634 = vxor.u32 %v4560, 2147483648
      %v4635 = vxor.u32 %v4565, 2147483648
      %v4636 = vxor.u32 %v4570, 2147483648
      %v4637 = vxor.u32 %v4575, 2147483648
      %v4638 = vxor.u32 %v4580, 2147483648
      %v4639 = vxor.u32 %v4585, 2147483648
      %v4640 = vxor.u32 %v4590, 2147483648
      %v4641 = vxor.u32 %v4595, 2147483648
      %v4642 = vxor.u32 %v4600, 2147483648
      %v4643 = vxor.u32 %v4605, 2147483648
      %v4644 = vxor.u32 %v4610, 2147483648
      %v4645 = vxor.u32 %v4615, 2147483648
      %v4646 = vxor.u32 %v4620, 2147483648
      %v4647 = vxor.u32 %v4625, 2147483648
      %v4648 = vxor.u32 %v4630, 2147483648
      %v4649 = vmul.f32 %v4633, 1.442695
      %v4650 = vpow.pop %v4649
      %v4651 = vmul.f32 %v4634, 1.442695
      %v4652 = vpow.pop %v4651
      %v4653 = vmul.f32 %v4635, 1.442695
      %v4654 = vpow.pop %v4653
      %v4655 = vmul.f32 %v4636, 1.442695
      %v4656 = vpow.pop %v4655
      %v4657 = vmul.f32 %v4637, 1.442695
      %v4658 = vpow.pop %v4657
      %v4659 = vmul.f32 %v4638, 1.442695
      %v4660 = vpow.pop %v4659
      %v4661 = vmul.f32 %v4639, 1.442695
      %v4662 = vpow.pop %v4661
      %v4663 = vmul.f32 %v4640, 1.442695
      %v4664 = vpow.pop %v4663
      %v4665 = vmul.f32 %v4641, 1.442695
      %v4666 = vpow.pop %v4665
      %v4667 = vmul.f32 %v4642, 1.442695
      %v4668 = vpow.pop %v4667
      %v4669 = vmul.f32 %v4643, 1.442695
      %v4670 = vpow.pop %v4669
      %v4671 = vmul.f32 %v4644, 1.442695
      %v4672 = vpow.pop %v4671
      %v4673 = vmul.f32 %v4645, 1.442695
      %v4674 = vpow.pop %v4673
      %v4675 = vmul.f32 %v4646, 1.442695
      %v4676 = vpow.pop %v4675
      %v4677 = vmul.f32 %v4647, 1.442695
      %v4678 = vpow.pop %v4677
      %v4679 = vmul.f32 %v4648, 1.442695
      %v4680 = vpow.pop %v4679
      %v4681 = vadd.f32 %v4650, 1.0
      %v4682 = vadd.f32 %v4652, 1.0
      %v4683 = vadd.f32 %v4654, 1.0
      %v4684 = vadd.f32 %v4656, 1.0
      %v4685 = vadd.f32 %v4658, 1.0
      %v4686 = vadd.f32 %v4660, 1.0
      %v4687 = vadd.f32 %v4662, 1.0
      %v4688 = vadd.f32 %v4664, 1.0
      %v4689 = vadd.f32 %v4666, 1.0
      %v4690 = vadd.f32 %v4668, 1.0
      %v4691 = vadd.f32 %v4670, 1.0
      %v4692 = vadd.f32 %v4672, 1.0
      %v4693 = vadd.f32 %v4674, 1.0
      %v4694 = vadd.f32 %v4676, 1.0
      %v4695 = vadd.f32 %v4678, 1.0
      %v4696 = vadd.f32 %v4680, 1.0
      %v4697 = vrcp.pop %v4681
      %v4698 = vmul.f32 1.0, %v4697
      %v4699 = vrcp.pop %v4682
      %v4700 = vmul.f32 1.0, %v4699
      %v4701 = vrcp.pop %v4683
      %v4702 = vmul.f32 1.0, %v4701
      %v4703 = vrcp.pop %v4684
      %v4704 = vmul.f32 1.0, %v4703
      %v4705 = vrcp.pop %v4685
      %v4706 = vmul.f32 1.0, %v4705
      %v4707 = vrcp.pop %v4686
      %v4708 = vmul.f32 1.0, %v4707
      %v4709 = vrcp.pop %v4687
      %v4710 = vmul.f32 1.0, %v4709
      %v4711 = vrcp.pop %v4688
      %v4712 = vmul.f32 1.0, %v4711
      %v4713 = vrcp.pop %v4689
      %v4714 = vmul.f32 1.0, %v4713
      %v4715 = vrcp.pop %v4690
      %v4716 = vmul.f32 1.0, %v4715
      %v4717 = vrcp.pop %v4691
      %v4718 = vmul.f32 1.0, %v4717
      %v4719 = vrcp.pop %v4692
      %v4720 = vmul.f32 1.0, %v4719
      %v4721 = vrcp.pop %v4693
      %v4722 = vmul.f32 1.0, %v4721
      %v4723 = vrcp.pop %v4694
      %v4724 = vmul.f32 1.0, %v4723
      %v4725 = vrcp.pop %v4695
      %v4726 = vmul.f32 1.0, %v4725
      %v4727 = vrcp.pop %v4696
      %v4728 = vmul.f32 1.0, %v4727
      %vm4729 = vcmask 7168
      %4730 = vst.msk [vmem:[%s318] sm:$0xff] %vm4729, %v4698
      %4731 = vst.msk [vmem:[%s318 + $0x8] sm:$0xff] %vm4729, %v4700
      %4732 = vst.msk [vmem:[%s318 + $0x10] sm:$0xff] %vm4729, %v4702
      %4733 = vst.msk [vmem:[%s318 + $0x18] sm:$0xff] %vm4729, %v4704
      %4734 = vst.msk [vmem:[%s318 + $0x20] sm:$0xff] %vm4729, %v4706
      %4735 = vst.msk [vmem:[%s318 + $0x28] sm:$0xff] %vm4729, %v4708
      %4736 = vst.msk [vmem:[%s318 + $0x30] sm:$0xff] %vm4729, %v4710
      %4737 = vst.msk [vmem:[%s318 + $0x38] sm:$0xff] %vm4729, %v4712
      %4738 = vst.msk [vmem:[%s318 + $0x40] sm:$0xff] %vm4729, %v4714
      %4739 = vst.msk [vmem:[%s318 + $0x48] sm:$0xff] %vm4729, %v4716
      %4740 = vst.msk [vmem:[%s318 + $0x50] sm:$0xff] %vm4729, %v4718
      %4741 = vst.msk [vmem:[%s318 + $0x58] sm:$0xff] %vm4729, %v4720
      %4742 = vst.msk [vmem:[%s318 + $0x60] sm:$0xff] %vm4729, %v4722
      %4743 = vst.msk [vmem:[%s318 + $0x68] sm:$0xff] %vm4729, %v4724
      %4744 = vst.msk [vmem:[%s318 + $0x70] sm:$0xff] %vm4729, %v4726
      %4745 = vst.msk [vmem:[%s318 + $0x78] sm:$0xff] %vm4729, %v4728
      %s4746 = smul.u32 8, %s25
      %p4747 = scmp.lt.s32.totalorder %s24, 1
      %s4748 = scalar_select %p4747, %s24, 1
      %p4749 = scmp.lt.s32.totalorder %s4746, 15
      %s4750 = scalar_select %p4749, %s4746, 15
      %s4751 = smul.addr %s4750, 2
      %s4752 = smul.addr %s4748, 32
      %s4753 = sadd.s32 %s4751, %s4752
      %s4754 = smul.addr %s4753, 8
      %s4755 = scalar_lea.vmem %s7, %s4754
      // Predicated region
      $region49: #{decoder_forward.1} parent=47 // pred_check
        %p4756 = pneg %p208
      $region50: #{decoder_forward.1} parent=47 // pred_check_branch
        %4758 = sbr.rel (%p4756) target = $region52
      $region51: #{decoder_forward.1} parent=47 // pred_region
        %s4759 = smul.u32 8, %s25
      $region52: #{decoder_forward.1} parent=47 // pred_fallthru
        _
    $region48: #{decoder_forward.1} parent=5 // pred_fallthru
      _
    %p4760 = scmp.le.s32.totalorder 2, %s15
    // Predicated region
    $region53: #{decoder_forward.1} parent=5 // pred_check
      %p4761 = pneg %p4760
    $region54: #{decoder_forward.1} parent=5 // pred_check_branch
      %4763 = sbr.rel (%p4761) target = $region56
    $region55: #{decoder_forward.1} parent=5 // pred_region
      %s4764 = ssub.s32 %s15, 2
      // Predicated region
      $region57: #{decoder_forward.1} parent=55 // pred_check
        %p4765 = pneg %p214
      $region58: #{decoder_forward.1} parent=55 // pred_check_branch
        %4767 = sbr.rel (%p4765) target = $region60
      $region59: #{decoder_forward.1} parent=55 // pred_region
        %s4768 = smul.u32 8, %s27
        %p4769 = scmp.lt.s32.totalorder %s26, 1
        %s4770 = scalar_select %p4769, %s26, 1
        %p4771 = scmp.lt.s32.totalorder %s4768, 15
        %s4772 = scalar_select %p4771, %s4768, 15
        %s4773 = smul.addr %s4772, 2
        %s4774 = smul.addr %s4770, 32
        %s4775 = sadd.s32 %s4773, %s4774
        %s4776 = smul.addr %s4775, 8
        %s4777 = scalar_lea.vmem %s7, %s4776
      $region60: #{decoder_forward.1} parent=55 // pred_fallthru
        _
    $region56: #{decoder_forward.1} parent=5 // pred_fallthru
      _
  $region6: #{decoder_forward.1} parent=0 // loop_footer
    %s19 = sadd.s32 1, %s15
  $region7: #{decoder_forward.1} parent=0 // loop_footer_branch
    %14 = sbr.rel target = $region3
  $region8: #{decoder_forward.1} parent=0 // loop_exit
    _

</llo_original>
